<compile_context>
chip_gen: v7x
topology: tpu7x:2x2x1
jax: 0.10.0
libtpu: 0.0.40
codegen_flags: <defaults>
</compile_context>

<pallas_src>
import jax
import jax.numpy as jnp
from jax.experimental import pallas as pl
from jax.experimental.pallas import tpu as pltpu


HIDDEN = 32          # hidden_size in the PyTorch script
NEG_SLOPE = 0.1      # nn.LeakyReLU(negative_slope=0.1)
N_MXU_LAYERS = 5     # fc1..fc5 run on the MXU; the 32->1 head is handled apart


def _leaky_relu(x, slope=NEG_SLOPE):
    return jnp.where(x > 0, x, slope * x)


def _round_up(x, m):
    return (x + m - 1) // m * m


def _tensorcores_per_device():
    """2 for chips with 2 TensorCores per device (v7x, megacore), else 1."""
    try:
        kind = jax.devices()[0].device_kind.lower()
    except Exception:
        return 1
    return 2 if any(t in kind for t in ("v7", "7x", "v4", "v5p")) else 1


# ---------------------------------------------------------------------------
# Kernel
# ---------------------------------------------------------------------------
def mlp_kernel(x_ref, w_ref, v_ref, o_ref):
    """Fused forward pass for one block of batch rows.

    x_ref : (block_b, in_dim)        f32
    w_ref : (K, 5*slot)              weight_dtype  -- fc1..fc5, one 128-lane
                                     slot per layer, zero padded on K and N
    v_ref : (2, 5*slot)              f32           -- row 0: biases (per slot)
                                                      row 1: [w_out | b_out]
    o_ref : (1, block_b)             f32           -- lane-dense output row
    """
    in_dim = x_ref.shape[1]
    slot = w_ref.shape[1] // N_MXU_LAYERS          # padded layer width (128)
    wdt = w_ref.dtype

    def dense(h, layer):
        k = in_dim if layer == 0 else slot
        w = w_ref[0:k, layer * slot:(layer + 1) * slot]      # (k, slot)
        b = v_ref[0:1, layer * slot:(layer + 1) * slot]      # (1, slot) f32
        # bf16 (or f32) MXU operands, f32 accumulation + f32 bias.
        return jnp.dot(h, w, preferred_element_type=jnp.float32) + b

    w_out_row = v_ref[1:2, 0:slot]                 # (1, slot) f32, zero > HIDDEN
    b_out = v_ref[1:2, slot:slot + 1]              # (1, 1)    f32

    def chain(x_blk):
        # Inter-layer activations carried in the weight dtype (one cast per
        # layer, after the f32 bias + LeakyReLU); residual adds promote to f32.
        h = x_blk.astype(wdt)
        h = _leaky_relu(dense(h, 0)).astype(wdt)            # fc1
        h = _leaky_relu(dense(h, 1) + h).astype(wdt)        # fc2 + residual
        h = _leaky_relu(dense(h, 2)).astype(wdt)            # fc3
        h = _leaky_relu(dense(h, 3) + h).astype(wdt)        # fc4 + residual
        h5 = _leaky_relu(dense(h, 4))                       # fc5 (keep f32)
        # Output head (32 -> 1) computed as w_out @ h5^T so the result comes
        # out lane-dense (batch on lanes): (1, slot) . (rows, slot)^T -> (1, rows).
        # Padded lanes of h5 / w_out_row are zero, so they contribute nothing.
        y = jax.lax.dot_general(
            w_out_row, h5,
            dimension_numbers=(((1,), (1,)), ((), ())),
            preferred_element_type=jnp.float32)
        return y + b_out                                    # (1, rows)

    bb = x_ref.shape[0]
    if bb >= 16 and bb % 16 == 0:
        # Two independent sub-tile chains in one basic block: the scheduler
        # can overlap one chain's MXU pushes with the other's VPU epilogue.
        half = bb // 2
        ya = chain(x_ref[0:half, :])
        yb = chain(x_ref[half:bb, :])
        o_ref[:, 0:half] = ya.astype(o_ref.dtype)
        o_ref[:, half:bb] = yb.astype(o_ref.dtype)
    else:
        o_ref[...] = chain(x_ref[...]).astype(o_ref.dtype)


# ---------------------------------------------------------------------------
# Host-side packing + wrapper
# ---------------------------------------------------------------------------
def pack_params(params, weight_dtype):
    """Pack per-layer (W:(in,out), b:(1,out)) into two DMA-friendly slabs."""
    mxu_layers = params[:-1]
    w_out, b_out = params[-1]                              # (HIDDEN, 1), (1, 1)

    slot = _round_up(max(int(w.shape[1]) for w, _ in mxu_layers), 128)   # 128
    in_dim = int(mxu_layers[0][0].shape[0])
    kmax = max(slot, _round_up(in_dim, 8))

    n = len(mxu_layers)
    w_slab = jnp.zeros((kmax, n * slot), jnp.float32)
    b_row = jnp.zeros((n * slot,), jnp.float32)
    for i, (w, b) in enumerate(mxu_layers):
        k, m = w.shape
        w_slab = w_slab.at[:k, i * slot:i * slot + m].set(w)
        b_row = b_row.at[i * slot:i * slot + m].set(b[0])

    head_row = jnp.zeros((n * slot,), jnp.float32)
    head_row = head_row.at[:w_out.shape[0]].set(w_out[:, 0])   # output weights
    head_row = head_row.at[slot].set(b_out[0, 0])               # output bias
    v_slab = jnp.stack([b_row, head_row], axis=0)               # (2, n*slot) f32

    return w_slab.astype(weight_dtype), v_slab


def mlp_forward(x, params, *, block_b=None, weight_dtype=jnp.bfloat16):
    """x: [B, input_size] f32; params: list of (W:(in,out), b:(1,out))."""
    B, in_dim = x.shape
    assert params[0][0].shape[0] == in_dim
    out_dim = params[-1][0].shape[1]
    assert out_dim == 1, "output head is specialized for output_size == 1"

    # One block per TensorCore; grow the tile (not the grid) for big batches.
    if block_b is None:
        block_b = pl.cdiv(B, _tensorcores_per_device())
    block_b = max(8, min(_round_up(block_b, 8), 2048))
    num_blocks = pl.cdiv(B, block_b)

    w_slab, v_slab = pack_params(params, weight_dtype)

    flops = sum(2 * B * int(w.shape[0]) * int(w.shape[1]) for w, _ in params)
    bytes_accessed = (x.size * x.dtype.itemsize
                      + w_slab.size * w_slab.dtype.itemsize
                      + v_slab.size * v_slab.dtype.itemsize
                      + num_blocks * block_b * 4)

    out_rows = pl.pallas_call(
        mlp_kernel,
        out_shape=jax.ShapeDtypeStruct((num_blocks, block_b), jnp.float32),
        grid_spec=pltpu.PrefetchScalarGridSpec(
            num_scalar_prefetch=0,
            grid=(num_blocks,),
            in_specs=[
                pl.BlockSpec((block_b, in_dim), lambda i: (i, 0)),   # x tile
                pl.BlockSpec(w_slab.shape, lambda i: (0, 0)),        # weight slab
                pl.BlockSpec(v_slab.shape, lambda i: (0, 0)),        # bias/head slab
            ],
            out_specs=pl.BlockSpec((1, block_b), lambda i: (i, 0)),  # lane-dense row
        ),
        compiler_params=pltpu.CompilerParams(
            dimension_semantics=("parallel",),        # megacore / v7x 2-TC split
            vmem_limit_bytes=32 * 1024 * 1024,        # live footprint is ~1-2 MiB
        ),
        cost_estimate=pl.CostEstimate(
            flops=flops, transcendentals=0, bytes_accessed=bytes_accessed),
    )(x, w_slab, v_slab)

    # (num_blocks, block_b) -> (B, 1); drops padded tail rows if B % block_b != 0.
    return out_rows.reshape(-1, 1)[:B]


# ---------------------------------------------------------------------------
# Params / reference
# ---------------------------------------------------------------------------
def init_params(key, input_size, hidden_size, output_size):
    """nn.Linear-style init (uniform +/- 1/sqrt(fan_in)); W stored (in, out)."""
    dims = [
        (input_size, hidden_size * 4),       # fc1
        (hidden_size * 4, hidden_size * 4),  # fc2
        (hidden_size * 4, hidden_size * 2),  # fc3
        (hidden_size * 2, hidden_size * 2),  # fc4
        (hidden_size * 2, hidden_size * 1),  # fc5
        (hidden_size, output_size),          # output
    ]
    params = []
    for (fan_in, fan_out) in dims:
        key, kw, kb = jax.random.split(key, 3)
        bound = 1.0 / jnp.sqrt(jnp.float32(fan_in))
        w = jax.random.uniform(kw, (fan_in, fan_out), jnp.float32, -bound, bound)
        b = jax.random.uniform(kb, (1, fan_out), jnp.float32, -bound, bound)
        params.append((w, b))
    return params


def mlp_reference(x, params):
    """Pure-JAX reference mirroring the PyTorch forward."""
    (w1, b1), (w2, b2), (w3, b3), (w4, b4), (w5, b5), (w6, b6) = params
    h = _leaky_relu(x @ w1 + b1)
    h = _leaky_relu((h @ w2 + b2) + h)
    h = _leaky_relu(h @ w3 + b3)
    h = _leaky_relu((h @ w4 + b4) + h)
    h = _leaky_relu(h @ w5 + b5)
    return h @ w6 + b6


if __name__ == "__main__":
    key = jax.random.PRNGKey(0)
    key, kx = jax.random.split(key)

    batch = 512        # one block on v5e/v6e, two parallel blocks on v7x
    input_size = 16    # stands in for X_train.shape[1]
    output_size = 1

    x = jax.random.normal(kx, (batch, input_size), jnp.float32)
    params = init_params(key, input_size, HIDDEN, output_size)

    ref = mlp_reference(x, params)

    # Exact f32 path: tight match vs the pure-JAX reference.
    out_f32 = jax.block_until_ready(mlp_forward(x, params, weight_dtype=jnp.float32))
    assert out_f32.shape == (batch, output_size)
    assert jnp.allclose(out_f32, ref, atol=1e-5, rtol=1e-5), "f32 mismatch vs reference"

    # Default bf16-MXU path (f32 accumulation + f32 elementwise / residual math,
    # f32 output head): loosened tolerance only.
    out_bf16 = jax.block_until_ready(mlp_forward(x, params))
    assert out_bf16.shape == (batch, output_size)
    assert jnp.allclose(out_bf16, ref, atol=5e-2, rtol=5e-2), "bf16 mismatch vs reference"

    print("KERNEL_OK")
</pallas_src>

<mosaic_0001>
module attributes {stable_mosaic.version = 11 : i64} {
  func.func @mlp_kernel(%arg0: i32, %arg1: memref<512x16xf32, #tpu.memory_space<vmem>>, %arg2: memref<128x640xf32, #tpu.memory_space<vmem>>, %arg3: memref<2x640xf32, #tpu.memory_space<vmem>>, %arg4: memref<1x512xf32, #tpu.memory_space<vmem>>) attributes {dimension_semantics = [#tpu.dimension_semantics<parallel>], iteration_bounds = array<i64: 1>, scalar_prefetch = 0 : i64, scratch_operands = 0 : i64, tpu.core_type = #tpu.core_type<tc>, window_params = [{transform_indices = @transform_0, window_bounds = array<i64: 512, 16>}, {pipeline_mode = #tpu.pipeline_mode<synchronous>, transform_indices = @transform_1, window_bounds = array<i64: 128, 640>}, {pipeline_mode = #tpu.pipeline_mode<synchronous>, transform_indices = @transform_2, window_bounds = array<i64: 2, 640>}, {transform_indices = @transform_3, window_bounds = array<i64: 1, 512>}]} {
    %c1 = arith.constant 1 : index
    %c0 = arith.constant 0 : index
    %0 = vector.load %arg3[%c1, %c0] : memref<2x640xf32, #tpu.memory_space<vmem>>, vector<1x128xf32>
    %c1_0 = arith.constant 1 : index
    %c128 = arith.constant 128 : index
    %1 = vector.load %arg3[%c1_0, %c128] : memref<2x640xf32, #tpu.memory_space<vmem>>, vector<1x1xf32>
    %c0_1 = arith.constant 0 : index
    %c0_2 = arith.constant 0 : index
    %2 = vector.load %arg1[%c0_1, %c0_2] : memref<512x16xf32, #tpu.memory_space<vmem>>, vector<256x16xf32>
    %c0_3 = arith.constant 0 : index
    %c0_4 = arith.constant 0 : index
    %3 = vector.load %arg2[%c0_3, %c0_4] : memref<128x640xf32, #tpu.memory_space<vmem>>, vector<16x128xf32>
    %c0_5 = arith.constant 0 : index
    %c0_6 = arith.constant 0 : index
    %4 = vector.load %arg3[%c0_5, %c0_6] : memref<2x640xf32, #tpu.memory_space<vmem>>, vector<1x128xf32>
    %cst = arith.constant dense<0.000000e+00> : vector<256x128xf32>
    %5 = tpu.matmul %2, %3, %cst {dimension_numbers = #tpu.dot_dimension_numbers<[1], [0], [0], [1], [0, 0, 1, 1], [], []>} : vector<256x16xf32>, vector<16x128xf32>, vector<256x128xf32> -> vector<256x128xf32>
    %6 = vector.broadcast %4 : vector<1x128xf32> to vector<256x128xf32>
    %7 = arith.addf %5, %6 : vector<256x128xf32>
    %cst_7 = arith.constant 0.000000e+00 : f32
    %8 = vector.broadcast %cst_7 : f32 to vector<256x128xf32>
    %9 = arith.cmpf ogt, %7, %8 : vector<256x128xf32>
    %cst_8 = arith.constant 1.000000e-01 : f32
    %10 = vector.broadcast %cst_8 : f32 to vector<256x128xf32>
    %11 = arith.mulf %10, %7 : vector<256x128xf32>
    %12 = arith.select %9, %7, %11 : vector<256x128xi1>, vector<256x128xf32>
    %c0_9 = arith.constant 0 : index
    %c128_10 = arith.constant 128 : index
    %13 = vector.load %arg2[%c0_9, %c128_10] : memref<128x640xf32, #tpu.memory_space<vmem>>, vector<128x128xf32>
    %c0_11 = arith.constant 0 : index
    %c128_12 = arith.constant 128 : index
    %14 = vector.load %arg3[%c0_11, %c128_12] : memref<2x640xf32, #tpu.memory_space<vmem>>, vector<1x128xf32>
    %cst_13 = arith.constant dense<0.000000e+00> : vector<256x128xf32>
    %15 = tpu.matmul %12, %13, %cst_13 {dimension_numbers = #tpu.dot_dimension_numbers<[1], [0], [0], [1], [0, 0, 1, 1], [], []>} : vector<256x128xf32>, vector<128x128xf32>, vector<256x128xf32> -> vector<256x128xf32>
    %16 = vector.broadcast %14 : vector<1x128xf32> to vector<256x128xf32>
    %17 = arith.addf %15, %16 : vector<256x128xf32>
    %18 = arith.addf %17, %12 : vector<256x128xf32>
    %cst_14 = arith.constant 0.000000e+00 : f32
    %19 = vector.broadcast %cst_14 : f32 to vector<256x128xf32>
    %20 = arith.cmpf ogt, %18, %19 : vector<256x128xf32>
    %cst_15 = arith.constant 1.000000e-01 : f32
    %21 = vector.broadcast %cst_15 : f32 to vector<256x128xf32>
    %22 = arith.mulf %21, %18 : vector<256x128xf32>
    %23 = arith.select %20, %18, %22 : vector<256x128xi1>, vector<256x128xf32>
    %c0_16 = arith.constant 0 : index
    %c256 = arith.constant 256 : index
    %24 = vector.load %arg2[%c0_16, %c256] : memref<128x640xf32, #tpu.memory_space<vmem>>, vector<128x128xf32>
    %c0_17 = arith.constant 0 : index
    %c256_18 = arith.constant 256 : index
    %25 = vector.load %arg3[%c0_17, %c256_18] : memref<2x640xf32, #tpu.memory_space<vmem>>, vector<1x128xf32>
    %cst_19 = arith.constant dense<0.000000e+00> : vector<256x128xf32>
    %26 = tpu.matmul %23, %24, %cst_19 {dimension_numbers = #tpu.dot_dimension_numbers<[1], [0], [0], [1], [0, 0, 1, 1], [], []>} : vector<256x128xf32>, vector<128x128xf32>, vector<256x128xf32> -> vector<256x128xf32>
    %27 = vector.broadcast %25 : vector<1x128xf32> to vector<256x128xf32>
    %28 = arith.addf %26, %27 : vector<256x128xf32>
    %cst_20 = arith.constant 0.000000e+00 : f32
    %29 = vector.broadcast %cst_20 : f32 to vector<256x128xf32>
    %30 = arith.cmpf ogt, %28, %29 : vector<256x128xf32>
    %cst_21 = arith.constant 1.000000e-01 : f32
    %31 = vector.broadcast %cst_21 : f32 to vector<256x128xf32>
    %32 = arith.mulf %31, %28 : vector<256x128xf32>
    %33 = arith.select %30, %28, %32 : vector<256x128xi1>, vector<256x128xf32>
    %c0_22 = arith.constant 0 : index
    %c384 = arith.constant 384 : index
    %34 = vector.load %arg2[%c0_22, %c384] : memref<128x640xf32, #tpu.memory_space<vmem>>, vector<128x128xf32>
    %c0_23 = arith.constant 0 : index
    %c384_24 = arith.constant 384 : index
    %35 = vector.load %arg3[%c0_23, %c384_24] : memref<2x640xf32, #tpu.memory_space<vmem>>, vector<1x128xf32>
    %cst_25 = arith.constant dense<0.000000e+00> : vector<256x128xf32>
    %36 = tpu.matmul %33, %34, %cst_25 {dimension_numbers = #tpu.dot_dimension_numbers<[1], [0], [0], [1], [0, 0, 1, 1], [], []>} : vector<256x128xf32>, vector<128x128xf32>, vector<256x128xf32> -> vector<256x128xf32>
    %37 = vector.broadcast %35 : vector<1x128xf32> to vector<256x128xf32>
    %38 = arith.addf %36, %37 : vector<256x128xf32>
    %39 = arith.addf %38, %33 : vector<256x128xf32>
    %cst_26 = arith.constant 0.000000e+00 : f32
    %40 = vector.broadcast %cst_26 : f32 to vector<256x128xf32>
    %41 = arith.cmpf ogt, %39, %40 : vector<256x128xf32>
    %cst_27 = arith.constant 1.000000e-01 : f32
    %42 = vector.broadcast %cst_27 : f32 to vector<256x128xf32>
    %43 = arith.mulf %42, %39 : vector<256x128xf32>
    %44 = arith.select %41, %39, %43 : vector<256x128xi1>, vector<256x128xf32>
    %c0_28 = arith.constant 0 : index
    %c512 = arith.constant 512 : index
    %45 = vector.load %arg2[%c0_28, %c512] : memref<128x640xf32, #tpu.memory_space<vmem>>, vector<128x128xf32>
    %c0_29 = arith.constant 0 : index
    %c512_30 = arith.constant 512 : index
    %46 = vector.load %arg3[%c0_29, %c512_30] : memref<2x640xf32, #tpu.memory_space<vmem>>, vector<1x128xf32>
    %cst_31 = arith.constant dense<0.000000e+00> : vector<256x128xf32>
    %47 = tpu.matmul %44, %45, %cst_31 {dimension_numbers = #tpu.dot_dimension_numbers<[1], [0], [0], [1], [0, 0, 1, 1], [], []>} : vector<256x128xf32>, vector<128x128xf32>, vector<256x128xf32> -> vector<256x128xf32>
    %48 = vector.broadcast %46 : vector<1x128xf32> to vector<256x128xf32>
    %49 = arith.addf %47, %48 : vector<256x128xf32>
    %cst_32 = arith.constant 0.000000e+00 : f32
    %50 = vector.broadcast %cst_32 : f32 to vector<256x128xf32>
    %51 = arith.cmpf ogt, %49, %50 : vector<256x128xf32>
    %cst_33 = arith.constant 1.000000e-01 : f32
    %52 = vector.broadcast %cst_33 : f32 to vector<256x128xf32>
    %53 = arith.mulf %52, %49 : vector<256x128xf32>
    %54 = arith.select %51, %49, %53 : vector<256x128xi1>, vector<256x128xf32>
    %cst_34 = arith.constant dense<0.000000e+00> : vector<1x256xf32>
    %55 = tpu.matmul %0, %54, %cst_34 {dimension_numbers = #tpu.dot_dimension_numbers<[1], [1], [0], [0], [0, 0, 1, 0], [], []>} : vector<1x128xf32>, vector<256x128xf32>, vector<1x256xf32> -> vector<1x256xf32>
    %56 = vector.broadcast %1 : vector<1x1xf32> to vector<1x256xf32>
    %57 = arith.addf %55, %56 : vector<1x256xf32>
    %c256_35 = arith.constant 256 : index
    %c0_36 = arith.constant 0 : index
    %58 = vector.load %arg1[%c256_35, %c0_36] : memref<512x16xf32, #tpu.memory_space<vmem>>, vector<256x16xf32>
    %c0_37 = arith.constant 0 : index
    %c0_38 = arith.constant 0 : index
    %59 = vector.load %arg2[%c0_37, %c0_38] : memref<128x640xf32, #tpu.memory_space<vmem>>, vector<16x128xf32>
    %c0_39 = arith.constant 0 : index
    %c0_40 = arith.constant 0 : index
    %60 = vector.load %arg3[%c0_39, %c0_40] : memref<2x640xf32, #tpu.memory_space<vmem>>, vector<1x128xf32>
    %cst_41 = arith.constant dense<0.000000e+00> : vector<256x128xf32>
    %61 = tpu.matmul %58, %59, %cst_41 {dimension_numbers = #tpu.dot_dimension_numbers<[1], [0], [0], [1], [0, 0, 1, 1], [], []>} : vector<256x16xf32>, vector<16x128xf32>, vector<256x128xf32> -> vector<256x128xf32>
    %62 = vector.broadcast %60 : vector<1x128xf32> to vector<256x128xf32>
    %63 = arith.addf %61, %62 : vector<256x128xf32>
    %cst_42 = arith.constant 0.000000e+00 : f32
    %64 = vector.broadcast %cst_42 : f32 to vector<256x128xf32>
    %65 = arith.cmpf ogt, %63, %64 : vector<256x128xf32>
    %cst_43 = arith.constant 1.000000e-01 : f32
    %66 = vector.broadcast %cst_43 : f32 to vector<256x128xf32>
    %67 = arith.mulf %66, %63 : vector<256x128xf32>
    %68 = arith.select %65, %63, %67 : vector<256x128xi1>, vector<256x128xf32>
    %c0_44 = arith.constant 0 : index
    %c128_45 = arith.constant 128 : index
    %69 = vector.load %arg2[%c0_44, %c128_45] : memref<128x640xf32, #tpu.memory_space<vmem>>, vector<128x128xf32>
    %c0_46 = arith.constant 0 : index
    %c128_47 = arith.constant 128 : index
    %70 = vector.load %arg3[%c0_46, %c128_47] : memref<2x640xf32, #tpu.memory_space<vmem>>, vector<1x128xf32>
    %cst_48 = arith.constant dense<0.000000e+00> : vector<256x128xf32>
    %71 = tpu.matmul %68, %69, %cst_48 {dimension_numbers = #tpu.dot_dimension_numbers<[1], [0], [0], [1], [0, 0, 1, 1], [], []>} : vector<256x128xf32>, vector<128x128xf32>, vector<256x128xf32> -> vector<256x128xf32>
    %72 = vector.broadcast %70 : vector<1x128xf32> to vector<256x128xf32>
    %73 = arith.addf %71, %72 : vector<256x128xf32>
    %74 = arith.addf %73, %68 : vector<256x128xf32>
    %cst_49 = arith.constant 0.000000e+00 : f32
    %75 = vector.broadcast %cst_49 : f32 to vector<256x128xf32>
    %76 = arith.cmpf ogt, %74, %75 : vector<256x128xf32>
    %cst_50 = arith.constant 1.000000e-01 : f32
    %77 = vector.broadcast %cst_50 : f32 to vector<256x128xf32>
    %78 = arith.mulf %77, %74 : vector<256x128xf32>
    %79 = arith.select %76, %74, %78 : vector<256x128xi1>, vector<256x128xf32>
    %c0_51 = arith.constant 0 : index
    %c256_52 = arith.constant 256 : index
    %80 = vector.load %arg2[%c0_51, %c256_52] : memref<128x640xf32, #tpu.memory_space<vmem>>, vector<128x128xf32>
    %c0_53 = arith.constant 0 : index
    %c256_54 = arith.constant 256 : index
    %81 = vector.load %arg3[%c0_53, %c256_54] : memref<2x640xf32, #tpu.memory_space<vmem>>, vector<1x128xf32>
    %cst_55 = arith.constant dense<0.000000e+00> : vector<256x128xf32>
    %82 = tpu.matmul %79, %80, %cst_55 {dimension_numbers = #tpu.dot_dimension_numbers<[1], [0], [0], [1], [0, 0, 1, 1], [], []>} : vector<256x128xf32>, vector<128x128xf32>, vector<256x128xf32> -> vector<256x128xf32>
    %83 = vector.broadcast %81 : vector<1x128xf32> to vector<256x128xf32>
    %84 = arith.addf %82, %83 : vector<256x128xf32>
    %cst_56 = arith.constant 0.000000e+00 : f32
    %85 = vector.broadcast %cst_56 : f32 to vector<256x128xf32>
    %86 = arith.cmpf ogt, %84, %85 : vector<256x128xf32>
    %cst_57 = arith.constant 1.000000e-01 : f32
    %87 = vector.broadcast %cst_57 : f32 to vector<256x128xf32>
    %88 = arith.mulf %87, %84 : vector<256x128xf32>
    %89 = arith.select %86, %84, %88 : vector<256x128xi1>, vector<256x128xf32>
    %c0_58 = arith.constant 0 : index
    %c384_59 = arith.constant 384 : index
    %90 = vector.load %arg2[%c0_58, %c384_59] : memref<128x640xf32, #tpu.memory_space<vmem>>, vector<128x128xf32>
    %c0_60 = arith.constant 0 : index
    %c384_61 = arith.constant 384 : index
    %91 = vector.load %arg3[%c0_60, %c384_61] : memref<2x640xf32, #tpu.memory_space<vmem>>, vector<1x128xf32>
    %cst_62 = arith.constant dense<0.000000e+00> : vector<256x128xf32>
    %92 = tpu.matmul %89, %90, %cst_62 {dimension_numbers = #tpu.dot_dimension_numbers<[1], [0], [0], [1], [0, 0, 1, 1], [], []>} : vector<256x128xf32>, vector<128x128xf32>, vector<256x128xf32> -> vector<256x128xf32>
    %93 = vector.broadcast %91 : vector<1x128xf32> to vector<256x128xf32>
    %94 = arith.addf %92, %93 : vector<256x128xf32>
    %95 = arith.addf %94, %89 : vector<256x128xf32>
    %cst_63 = arith.constant 0.000000e+00 : f32
    %96 = vector.broadcast %cst_63 : f32 to vector<256x128xf32>
    %97 = arith.cmpf ogt, %95, %96 : vector<256x128xf32>
    %cst_64 = arith.constant 1.000000e-01 : f32
    %98 = vector.broadcast %cst_64 : f32 to vector<256x128xf32>
    %99 = arith.mulf %98, %95 : vector<256x128xf32>
    %100 = arith.select %97, %95, %99 : vector<256x128xi1>, vector<256x128xf32>
    %c0_65 = arith.constant 0 : index
    %c512_66 = arith.constant 512 : index
    %101 = vector.load %arg2[%c0_65, %c512_66] : memref<128x640xf32, #tpu.memory_space<vmem>>, vector<128x128xf32>
    %c0_67 = arith.constant 0 : index
    %c512_68 = arith.constant 512 : index
    %102 = vector.load %arg3[%c0_67, %c512_68] : memref<2x640xf32, #tpu.memory_space<vmem>>, vector<1x128xf32>
    %cst_69 = arith.constant dense<0.000000e+00> : vector<256x128xf32>
    %103 = tpu.matmul %100, %101, %cst_69 {dimension_numbers = #tpu.dot_dimension_numbers<[1], [0], [0], [1], [0, 0, 1, 1], [], []>} : vector<256x128xf32>, vector<128x128xf32>, vector<256x128xf32> -> vector<256x128xf32>
    %104 = vector.broadcast %102 : vector<1x128xf32> to vector<256x128xf32>
    %105 = arith.addf %103, %104 : vector<256x128xf32>
    %cst_70 = arith.constant 0.000000e+00 : f32
    %106 = vector.broadcast %cst_70 : f32 to vector<256x128xf32>
    %107 = arith.cmpf ogt, %105, %106 : vector<256x128xf32>
    %cst_71 = arith.constant 1.000000e-01 : f32
    %108 = vector.broadcast %cst_71 : f32 to vector<256x128xf32>
    %109 = arith.mulf %108, %105 : vector<256x128xf32>
    %110 = arith.select %107, %105, %109 : vector<256x128xi1>, vector<256x128xf32>
    %cst_72 = arith.constant dense<0.000000e+00> : vector<1x256xf32>
    %111 = tpu.matmul %0, %110, %cst_72 {dimension_numbers = #tpu.dot_dimension_numbers<[1], [1], [0], [0], [0, 0, 1, 0], [], []>} : vector<1x128xf32>, vector<256x128xf32>, vector<1x256xf32> -> vector<1x256xf32>
    %112 = vector.broadcast %1 : vector<1x1xf32> to vector<1x256xf32>
    %113 = arith.addf %111, %112 : vector<1x256xf32>
    %c0_73 = arith.constant 0 : index
    %c0_74 = arith.constant 0 : index
    %114 = vector.load %arg4[%c0_73, %c0_74] : memref<1x512xf32, #tpu.memory_space<vmem>>, vector<1x256xf32>
    tpu.vector_store %arg4[%c0_73, %c0_74], %57 {strides = array<i32>} : memref<1x512xf32, #tpu.memory_space<vmem>>, vector<1x256xf32>,
    %c0_75 = arith.constant 0 : index
    %c256_76 = arith.constant 256 : index
    %115 = vector.load %arg4[%c0_75, %c256_76] : memref<1x512xf32, #tpu.memory_space<vmem>>, vector<1x256xf32>
    tpu.vector_store %arg4[%c0_75, %c256_76], %113 {strides = array<i32>} : memref<1x512xf32, #tpu.memory_space<vmem>>, vector<1x256xf32>,
    return
  }
  func.func @transform_0(%arg0: i32) -> (i32, i32) {
    %c0_i32 = arith.constant 0 : i32
    %c0_i32_0 = arith.constant 0 : i32
    return %arg0, %c0_i32 : i32, i32
  }
  func.func @transform_1(%arg0: i32) -> (i32, i32) {
    %c0_i32 = arith.constant 0 : i32
    %c0_i32_0 = arith.constant 0 : i32
    %c0_i32_1 = arith.constant 0 : i32
    return %c0_i32, %c0_i32_0 : i32, i32
  }
  func.func @transform_2(%arg0: i32) -> (i32, i32) {
    %c0_i32 = arith.constant 0 : i32
    %c0_i32_0 = arith.constant 0 : i32
    %c0_i32_1 = arith.constant 0 : i32
    return %c0_i32, %c0_i32_0 : i32, i32
  }
  func.func @transform_3(%arg0: i32) -> (i32, i32) {
    %c0_i32 = arith.constant 0 : i32
    %c0_i32_0 = arith.constant 0 : i32
    return %arg0, %c0_i32 : i32, i32
  }
}

</mosaic_0001>

<llo_original>
// kernel: tpu_custom_call.1
$region0: #{tpu_custom_call.1}
  #allocation0 [shape = 'u32[]', space=smem, size = 0x4, offset = 0x4, fixed_abs, tag = 'smem constant byte address 0x4 - core index']
  #allocation1 [shape = 'u32[144,128]{1,0:T(1,128)}', space=vmem, size = 0x12000, scoped, tag = 'internal scratch']
  %s0 = inlined_call_operand.vmem [shape: f32[512,16], index: 0, kind: input, shape index: {}]
  %s1 = inlined_call_operand.hbm [shape: f32[128,640], index: 1, kind: input, shape index: {}]
  %s2 = inlined_call_operand.vmem [shape: f32[2,640], index: 2, kind: input, shape index: {}]
  %s3 = inlined_call_operand.hbm [shape: f32[1,512], index: 3, kind: output, shape index: {}]
  %s4 = sld [smem:[#allocation0]]
  $region26: #{tpu_custom_call.1} parent=0
    _
  %s6 = ssub.s32 1, %s4
  %s7 = scalar_select 0, %s6, %s4
  $region1: #{tpu_custom_call.1} parent=0
    #allocation2 [shape = 'u8[327680]{0}', space=vmem, size = 0x50000, scoped, tag = 'input window, operand 1, single buffered']
    #allocation3 [shape = 's32[1]{0}', space=sflag, size = 0x4, scoped, tag = 'scoped memory for tpu_custom_call.1']
    #allocation4 [shape = 's32[1]{0}', space=sflag, size = 0x4, scoped, tag = 'scoped memory for tpu_custom_call.1']
    #allocation5 [shape = 'u8[2048]{0}', space=vmem, size = 0x800, scoped, tag = 'output window, operand 0, single buffered']
    %8 = vsyncpa [#allocation3], 0
    %9 = vsyncpa [#allocation4], 0
    // Predicated region
    $region2: #{tpu_custom_call.1} parent=1 // pred_check
      _
    $region3: #{tpu_custom_call.1} parent=1 // pred_check_branch
      %11 = sbr.rel (0) target = $region5
    $region4: #{tpu_custom_call.1} parent=1 // pred_region
      _
    $region5: #{tpu_custom_call.1} parent=1 // pred_fallthru
      _
    // Predicated region
    $region6: #{tpu_custom_call.1} parent=1 // pred_check
      _
    $region7: #{tpu_custom_call.1} parent=1 // pred_check_branch
      %13 = sbr.rel (0) target = $region9
    $region8: #{tpu_custom_call.1} parent=1 // pred_region
      %s15 = ssub.s32 10240, 10240
      %16 = vsyncadd [#allocation3], %s15
      %s17 = sshll.u32 [#allocation2], 4
      %s18 = int_to_ptr.vmem [resolvable:$true] %s17
      %23 = dma.hbm_to_vmem [thread:$0]  %s1, 10240, %s18, [#allocation3], 640, 640, 40
    $region9: #{tpu_custom_call.1} parent=1 // pred_fallthru
      _
    // Predicated region
    $region10: #{tpu_custom_call.1} parent=1 // pred_check
      _
    $region11: #{tpu_custom_call.1} parent=1 // pred_check_branch
      %25 = sbr.rel (0) target = $region13
    $region12: #{tpu_custom_call.1} parent=1 // pred_region
      _
    $region13: #{tpu_custom_call.1} parent=1 // pred_fallthru
      _
    // Predicated region
    $region14: #{tpu_custom_call.1} parent=1 // pred_check
      _
    $region15: #{tpu_custom_call.1} parent=1 // pred_check_branch
      %27 = sbr.rel (0) target = $region17
    $region16: #{tpu_custom_call.1} parent=1 // pred_region
      %28 = dma.done [#allocation3], 10240
    $region17: #{tpu_custom_call.1} parent=1 // pred_fallthru
      _
    %v29 = vld [vmem:[%s2 + $0x1] sm:$0x1]
    %v30 = vld [vmem:[%s2 + $0x3] sm:$0x1]
    %v31 = vld [vmem:[%s0] sm:$0xff]
    %v32 = vld [vmem:[%s0 + $0x8] sm:$0xff]
    %v33 = vld [vmem:[%s0 + $0x10] sm:$0xff]
    %v34 = vld [vmem:[%s0 + $0x18] sm:$0xff]
    %v35 = vld [vmem:[%s0 + $0x20] sm:$0xff]
    %v36 = vld [vmem:[%s0 + $0x28] sm:$0xff]
    %v37 = vld [vmem:[%s0 + $0x30] sm:$0xff]
    %v38 = vld [vmem:[%s0 + $0x38] sm:$0xff]
    %v39 = vld [vmem:[%s0 + $0x40] sm:$0xff]
    %v40 = vld [vmem:[%s0 + $0x48] sm:$0xff]
    %v41 = vld [vmem:[%s0 + $0x50] sm:$0xff]
    %v42 = vld [vmem:[%s0 + $0x58] sm:$0xff]
    %v43 = vld [vmem:[%s0 + $0x60] sm:$0xff]
    %v44 = vld [vmem:[%s0 + $0x68] sm:$0xff]
    %v45 = vld [vmem:[%s0 + $0x70] sm:$0xff]
    %v46 = vld [vmem:[%s0 + $0x78] sm:$0xff]
    %v47 = vld [vmem:[%s0 + $0x80] sm:$0xff]
    %v48 = vld [vmem:[%s0 + $0x88] sm:$0xff]
    %v49 = vld [vmem:[%s0 + $0x90] sm:$0xff]
    %v50 = vld [vmem:[%s0 + $0x98] sm:$0xff]
    %v51 = vld [vmem:[%s0 + $0xa0] sm:$0xff]
    %v52 = vld [vmem:[%s0 + $0xa8] sm:$0xff]
    %v53 = vld [vmem:[%s0 + $0xb0] sm:$0xff]
    %v54 = vld [vmem:[%s0 + $0xb8] sm:$0xff]
    %v55 = vld [vmem:[%s0 + $0xc0] sm:$0xff]
    %v56 = vld [vmem:[%s0 + $0xc8] sm:$0xff]
    %v57 = vld [vmem:[%s0 + $0xd0] sm:$0xff]
    %v58 = vld [vmem:[%s0 + $0xd8] sm:$0xff]
    %v59 = vld [vmem:[%s0 + $0xe0] sm:$0xff]
    %v60 = vld [vmem:[%s0 + $0xe8] sm:$0xff]
    %v61 = vld [vmem:[%s0 + $0xf0] sm:$0xff]
    %v62 = vld [vmem:[%s0 + $0xf8] sm:$0xff]
    %v63 = vld [vmem:[#allocation2] sm:$0xff]
    %v64 = vld [vmem:[#allocation2 + $0x28] sm:$0xff]
    %v65 = vld [vmem:[%s2] sm:$0x1]
    %v66 = vlaneseq
    %v67 = vshrl.u32 %v66, 7
    %v68 = vsub.s32 0, %v67
    %v69 = vrot.slane %v65, %v68
    %vm70 = vcmask 130048
    %v72 = vsel %vm70, %v31, 0
    %v75 = vsel %vm70, %v32, 0
    %v78 = vsel %vm70, %v33, 0
    %v81 = vsel %vm70, %v34, 0
    %v84 = vsel %vm70, %v35, 0
    %v87 = vsel %vm70, %v36, 0
    %v90 = vsel %vm70, %v37, 0
    %v93 = vsel %vm70, %v38, 0
    %v96 = vsel %vm70, %v39, 0
    %v99 = vsel %vm70, %v40, 0
    %v102 = vsel %vm70, %v41, 0
    %v105 = vsel %vm70, %v42, 0
    %v108 = vsel %vm70, %v43, 0
    %v111 = vsel %vm70, %v44, 0
    %v114 = vsel %vm70, %v45, 0
    %v117 = vsel %vm70, %v46, 0
    %v120 = vsel %vm70, %v47, 0
    %v123 = vsel %vm70, %v48, 0
    %v126 = vsel %vm70, %v49, 0
    %v129 = vsel %vm70, %v50, 0
    %v132 = vsel %vm70, %v51, 0
    %v135 = vsel %vm70, %v52, 0
    %v138 = vsel %vm70, %v53, 0
    %v141 = vsel %vm70, %v54, 0
    %v144 = vsel %vm70, %v55, 0
    %v147 = vsel %vm70, %v56, 0
    %v150 = vsel %vm70, %v57, 0
    %v153 = vsel %vm70, %v58, 0
    %v156 = vsel %vm70, %v59, 0
    %v159 = vsel %vm70, %v60, 0
    %v162 = vsel %vm70, %v61, 0
    %v165 = vsel %vm70, %v62, 0
    %167 = vmatprep.subr.mxu0 0.0
    %168 = vmatpush1.msra.mxu0 %v63
    %169 = vmatprep.subr.mxu0 0.0
    %170 = vmatpush1.msra.mxu0 %v64
    %171 = vmatprep.subr.mxu0 0.0
    %172 = vmatpush1.msra.mxu0 0.0
    %173 = vmatprep.subr.mxu0 0.0
    %174 = vmatpush1.msra.mxu0 0.0
    %175 = vmatprep.subr.mxu0 0.0
    %176 = vmatpush1.msra.mxu0 0.0
    %177 = vmatprep.subr.mxu0 0.0
    %178 = vmatpush1.msra.mxu0 0.0
    %179 = vmatprep.subr.mxu0 0.0
    %180 = vmatpush1.msra.mxu0 0.0
    %181 = vmatprep.subr.mxu0 0.0
    %182 = vmatpush1.msra.mxu0 0.0
    %183 = vmatprep.subr.mxu0 0.0
    %184 = vmatpush1.msra.mxu0 0.0
    %185 = vmatprep.subr.mxu0 0.0
    %186 = vmatpush1.msra.mxu0 0.0
    %187 = vmatprep.subr.mxu0 0.0
    %188 = vmatpush1.msra.mxu0 0.0
    %189 = vmatprep.subr.mxu0 0.0
    %190 = vmatpush1.msra.mxu0 0.0
    %191 = vmatprep.subr.mxu0 0.0
    %192 = vmatpush1.msra.mxu0 0.0
    %193 = vmatprep.subr.mxu0 0.0
    %194 = vmatpush1.msra.mxu0 0.0
    %195 = vmatprep.subr.mxu0 0.0
    %196 = vmatpush1.msra.mxu0 0.0
    %197 = vmatprep.subr.mxu0 0.0
    %198 = vmatpush1.msra.mxu0 0.0
    %199 = vmatprep.subr.mxu0 0.0
    %200 = vmatpush1.msra.mxu0 0.0
    %201 = vmatprep.subr.mxu0 0.0
    %202 = vmatpush1.msra.mxu0 0.0
    %203 = vmatprep.subr.mxu0 0.0
    %204 = vmatpush1.msra.mxu0 0.0
    %205 = vmatprep.subr.mxu0 0.0
    %206 = vmatpush1.msra.mxu0 0.0
    %207 = vmatprep.subr.mxu0 0.0
    %208 = vmatpush1.msra.mxu0 0.0
    %209 = vmatprep.subr.mxu0 0.0
    %210 = vmatpush1.msra.mxu0 0.0
    %211 = vmatprep.subr.mxu0 0.0
    %212 = vmatpush1.msra.mxu0 0.0
    %213 = vmatprep.subr.mxu0 0.0
    %214 = vmatpush1.msra.mxu0 0.0
    %215 = vmatprep.subr.mxu0 0.0
    %216 = vmatpush1.msra.mxu0 0.0
    %217 = vmatprep.subr.mxu0 0.0
    %218 = vmatpush1.msra.mxu0 0.0
    %219 = vmatprep.subr.mxu0 0.0
    %220 = vmatpush1.msra.mxu0 0.0
    %221 = vmatprep.subr.mxu0 0.0
    %222 = vmatpush1.msra.mxu0 0.0
    %223 = vmatprep.subr.mxu0 0.0
    %224 = vmatpush1.msra.mxu0 0.0
    %225 = vmatprep.subr.mxu0 0.0
    %226 = vmatpush1.msra.mxu0 0.0
    %227 = vmatprep.subr.mxu0 0.0
    %228 = vmatpush1.msra.mxu0 0.0
    %229 = vmatprep.subr.mxu0 0.0
    %230 = vmatpush1.msra.mxu0 0.0
    %231 = vmatprep.mubr.f32.mxu0 0.0
    %232 = vmatmul.mubr.f32.gmra.mrb[0].mxu0 %v72
    %v233 = vpop.f32.mrb[0].mxu0
    %v234 = vadd.f32 %v69, %v233
    %v235 = vpop.f32.mrb[0].mxu0
    %236 = vmatprep.mubr.f32.mxu0 0.0
    %237 = vmatmul.mubr.f32.gmra.mrb[0].mxu0 %v75
    %v238 = vpop.f32.mrb[0].mxu0
    %v239 = vadd.f32 %v69, %v238
    %v240 = vpop.f32.mrb[0].mxu0
    %241 = vmatprep.mubr.f32.mxu0 0.0
    %242 = vmatmul.mubr.f32.gmra.mrb[0].mxu0 %v78
    %v243 = vpop.f32.mrb[0].mxu0
    %v244 = vadd.f32 %v69, %v243
    %v245 = vpop.f32.mrb[0].mxu0
    %246 = vmatprep.mubr.f32.mxu0 0.0
    %247 = vmatmul.mubr.f32.gmra.mrb[0].mxu0 %v81
    %v248 = vpop.f32.mrb[0].mxu0
    %v249 = vadd.f32 %v69, %v248
    %v250 = vpop.f32.mrb[0].mxu0
    %251 = vmatprep.mubr.f32.mxu0 0.0
    %252 = vmatmul.mubr.f32.gmra.mrb[0].mxu0 %v84
    %v253 = vpop.f32.mrb[0].mxu0
    %v254 = vadd.f32 %v69, %v253
    %v255 = vpop.f32.mrb[0].mxu0
    %256 = vmatprep.mubr.f32.mxu0 0.0
    %257 = vmatmul.mubr.f32.gmra.mrb[0].mxu0 %v87
    %v258 = vpop.f32.mrb[0].mxu0
    %v259 = vadd.f32 %v69, %v258
    %v260 = vpop.f32.mrb[0].mxu0
    %261 = vmatprep.mubr.f32.mxu0 0.0
    %262 = vmatmul.mubr.f32.gmra.mrb[0].mxu0 %v90
    %v263 = vpop.f32.mrb[0].mxu0
    %v264 = vadd.f32 %v69, %v263
    %v265 = vpop.f32.mrb[0].mxu0
    %266 = vmatprep.mubr.f32.mxu0 0.0
    %267 = vmatmul.mubr.f32.gmra.mrb[0].mxu0 %v93
    %v268 = vpop.f32.mrb[0].mxu0
    %v269 = vadd.f32 %v69, %v268
    %v270 = vpop.f32.mrb[0].mxu0
    %271 = vmatprep.mubr.f32.mxu0 0.0
    %272 = vmatmul.mubr.f32.gmra.mrb[0].mxu0 %v96
    %v273 = vpop.f32.mrb[0].mxu0
    %v274 = vadd.f32 %v69, %v273
    %v275 = vpop.f32.mrb[0].mxu0
    %276 = vmatprep.mubr.f32.mxu0 0.0
    %277 = vmatmul.mubr.f32.gmra.mrb[0].mxu0 %v99
    %v278 = vpop.f32.mrb[0].mxu0
    %v279 = vadd.f32 %v69, %v278
    %v280 = vpop.f32.mrb[0].mxu0
    %281 = vmatprep.mubr.f32.mxu0 0.0
    %282 = vmatmul.mubr.f32.gmra.mrb[0].mxu0 %v102
    %v283 = vpop.f32.mrb[0].mxu0
    %v284 = vadd.f32 %v69, %v283
    %v285 = vpop.f32.mrb[0].mxu0
    %286 = vmatprep.mubr.f32.mxu0 0.0
    %287 = vmatmul.mubr.f32.gmra.mrb[0].mxu0 %v105
    %v288 = vpop.f32.mrb[0].mxu0
    %v289 = vadd.f32 %v69, %v288
    %v290 = vpop.f32.mrb[0].mxu0
    %291 = vmatprep.mubr.f32.mxu0 0.0
    %292 = vmatmul.mubr.f32.gmra.mrb[0].mxu0 %v108
    %v293 = vpop.f32.mrb[0].mxu0
    %v294 = vadd.f32 %v69, %v293
    %v295 = vpop.f32.mrb[0].mxu0
    %296 = vmatprep.mubr.f32.mxu0 0.0
    %297 = vmatmul.mubr.f32.gmra.mrb[0].mxu0 %v111
    %v298 = vpop.f32.mrb[0].mxu0
    %v299 = vadd.f32 %v69, %v298
    %v300 = vpop.f32.mrb[0].mxu0
    %301 = vmatprep.mubr.f32.mxu0 0.0
    %302 = vmatmul.mubr.f32.gmra.mrb[0].mxu0 %v114
    %v303 = vpop.f32.mrb[0].mxu0
    %v304 = vadd.f32 %v69, %v303
    %v305 = vpop.f32.mrb[0].mxu0
    %306 = vmatprep.mubr.f32.mxu0 0.0
    %307 = vmatmul.mubr.f32.gmra.mrb[0].mxu0 %v117
    %v308 = vpop.f32.mrb[0].mxu0
    %v309 = vadd.f32 %v69, %v308
    %v310 = vpop.f32.mrb[0].mxu0
    %311 = vmatprep.mubr.f32.mxu0 0.0
    %312 = vmatmul.mubr.f32.gmra.mrb[0].mxu0 %v120
    %v313 = vpop.f32.mrb[0].mxu0
    %v314 = vadd.f32 %v69, %v313
    %v315 = vpop.f32.mrb[0].mxu0
    %316 = vmatprep.mubr.f32.mxu0 0.0
    %317 = vmatmul.mubr.f32.gmra.mrb[0].mxu0 %v123
    %v318 = vpop.f32.mrb[0].mxu0
    %v319 = vadd.f32 %v69, %v318
    %v320 = vpop.f32.mrb[0].mxu0
    %321 = vmatprep.mubr.f32.mxu0 0.0
    %322 = vmatmul.mubr.f32.gmra.mrb[0].mxu0 %v126
    %v323 = vpop.f32.mrb[0].mxu0
    %v324 = vadd.f32 %v69, %v323
    %v325 = vpop.f32.mrb[0].mxu0
    %326 = vmatprep.mubr.f32.mxu0 0.0
    %327 = vmatmul.mubr.f32.gmra.mrb[0].mxu0 %v129
    %v328 = vpop.f32.mrb[0].mxu0
    %v329 = vadd.f32 %v69, %v328
    %v330 = vpop.f32.mrb[0].mxu0
    %331 = vmatprep.mubr.f32.mxu0 0.0
    %332 = vmatmul.mubr.f32.gmra.mrb[0].mxu0 %v132
    %v333 = vpop.f32.mrb[0].mxu0
    %v334 = vadd.f32 %v69, %v333
    %v335 = vpop.f32.mrb[0].mxu0
    %336 = vmatprep.mubr.f32.mxu0 0.0
    %337 = vmatmul.mubr.f32.gmra.mrb[0].mxu0 %v135
    %v338 = vpop.f32.mrb[0].mxu0
    %v339 = vadd.f32 %v69, %v338
    %v340 = vpop.f32.mrb[0].mxu0
    %341 = vmatprep.mubr.f32.mxu0 0.0
    %342 = vmatmul.mubr.f32.gmra.mrb[0].mxu0 %v138
    %v343 = vpop.f32.mrb[0].mxu0
    %v344 = vadd.f32 %v69, %v343
    %v345 = vpop.f32.mrb[0].mxu0
    %346 = vmatprep.mubr.f32.mxu0 0.0
    %347 = vmatmul.mubr.f32.gmra.mrb[0].mxu0 %v141
    %v348 = vpop.f32.mrb[0].mxu0
    %v349 = vadd.f32 %v69, %v348
    %v350 = vpop.f32.mrb[0].mxu0
    %351 = vmatprep.mubr.f32.mxu0 0.0
    %352 = vmatmul.mubr.f32.gmra.mrb[0].mxu0 %v144
    %v353 = vpop.f32.mrb[0].mxu0
    %v354 = vadd.f32 %v69, %v353
    %v355 = vpop.f32.mrb[0].mxu0
    %356 = vmatprep.mubr.f32.mxu0 0.0
    %357 = vmatmul.mubr.f32.gmra.mrb[0].mxu0 %v147
    %v358 = vpop.f32.mrb[0].mxu0
    %v359 = vadd.f32 %v69, %v358
    %v360 = vpop.f32.mrb[0].mxu0
    %361 = vmatprep.mubr.f32.mxu0 0.0
    %362 = vmatmul.mubr.f32.gmra.mrb[0].mxu0 %v150
    %v363 = vpop.f32.mrb[0].mxu0
    %v364 = vadd.f32 %v69, %v363
    %v365 = vpop.f32.mrb[0].mxu0
    %366 = vmatprep.mubr.f32.mxu0 0.0
    %367 = vmatmul.mubr.f32.gmra.mrb[0].mxu0 %v153
    %v368 = vpop.f32.mrb[0].mxu0
    %v369 = vadd.f32 %v69, %v368
    %v370 = vpop.f32.mrb[0].mxu0
    %371 = vmatprep.mubr.f32.mxu0 0.0
    %372 = vmatmul.mubr.f32.gmra.mrb[0].mxu0 %v156
    %v373 = vpop.f32.mrb[0].mxu0
    %v374 = vadd.f32 %v69, %v373
    %v375 = vpop.f32.mrb[0].mxu0
    %376 = vmatprep.mubr.f32.mxu0 0.0
    %377 = vmatmul.mubr.f32.gmra.mrb[0].mxu0 %v159
    %v378 = vpop.f32.mrb[0].mxu0
    %v379 = vadd.f32 %v69, %v378
    %v380 = vpop.f32.mrb[0].mxu0
    %381 = vmatprep.mubr.f32.mxu0 0.0
    %382 = vmatmul.mubr.f32.gmra.mrb[0].mxu0 %v162
    %v383 = vpop.f32.mrb[0].mxu0
    %v384 = vadd.f32 %v69, %v383
    %v385 = vpop.f32.mrb[0].mxu0
    %386 = vmatprep.mubr.f32.mxu0 0.0
    %387 = vmatmul.mubr.f32.gmra.mrb[0].mxu0 %v165
    %v388 = vpop.f32.mrb[0].mxu0
    %v389 = vadd.f32 %v69, %v388
    %v390 = vpop.f32.mrb[0].mxu0
    %391 = vdwg.mxu0
    %vm392 = vcmp.gt.f32.partialorder %v234, 0.0
    %vm393 = vcmp.gt.f32.partialorder %v239, 0.0
    %vm394 = vcmp.gt.f32.partialorder %v244, 0.0
    %vm395 = vcmp.gt.f32.partialorder %v249, 0.0
    %vm396 = vcmp.gt.f32.partialorder %v254, 0.0
    %vm397 = vcmp.gt.f32.partialorder %v259, 0.0
    %vm398 = vcmp.gt.f32.partialorder %v264, 0.0
    %vm399 = vcmp.gt.f32.partialorder %v269, 0.0
    %vm400 = vcmp.gt.f32.partialorder %v274, 0.0
    %vm401 = vcmp.gt.f32.partialorder %v279, 0.0
    %vm402 = vcmp.gt.f32.partialorder %v284, 0.0
    %vm403 = vcmp.gt.f32.partialorder %v289, 0.0
    %vm404 = vcmp.gt.f32.partialorder %v294, 0.0
    %vm405 = vcmp.gt.f32.partialorder %v299, 0.0
    %vm406 = vcmp.gt.f32.partialorder %v304, 0.0
    %vm407 = vcmp.gt.f32.partialorder %v309, 0.0
    %vm408 = vcmp.gt.f32.partialorder %v314, 0.0
    %vm409 = vcmp.gt.f32.partialorder %v319, 0.0
    %vm410 = vcmp.gt.f32.partialorder %v324, 0.0
    %vm411 = vcmp.gt.f32.partialorder %v329, 0.0
    %vm412 = vcmp.gt.f32.partialorder %v334, 0.0
    %vm413 = vcmp.gt.f32.partialorder %v339, 0.0
    %vm414 = vcmp.gt.f32.partialorder %v344, 0.0
    %vm415 = vcmp.gt.f32.partialorder %v349, 0.0
    %vm416 = vcmp.gt.f32.partialorder %v354, 0.0
    %vm417 = vcmp.gt.f32.partialorder %v359, 0.0
    %vm418 = vcmp.gt.f32.partialorder %v364, 0.0
    %vm419 = vcmp.gt.f32.partialorder %v369, 0.0
    %vm420 = vcmp.gt.f32.partialorder %v374, 0.0
    %vm421 = vcmp.gt.f32.partialorder %v379, 0.0
    %vm422 = vcmp.gt.f32.partialorder %v384, 0.0
    %vm423 = vcmp.gt.f32.partialorder %v389, 0.0
    %v424 = vmul.f32 %v234, 0.1
    %v425 = vmul.f32 %v239, 0.1
    %v426 = vmul.f32 %v244, 0.1
    %v427 = vmul.f32 %v249, 0.1
    %v428 = vmul.f32 %v254, 0.1
    %v429 = vmul.f32 %v259, 0.1
    %v430 = vmul.f32 %v264, 0.1
    %v431 = vmul.f32 %v269, 0.1
    %v432 = vmul.f32 %v274, 0.1
    %v433 = vmul.f32 %v279, 0.1
    %v434 = vmul.f32 %v284, 0.1
    %v435 = vmul.f32 %v289, 0.1
    %v436 = vmul.f32 %v294, 0.1
    %v437 = vmul.f32 %v299, 0.1
    %v438 = vmul.f32 %v304, 0.1
    %v439 = vmul.f32 %v309, 0.1
    %v440 = vmul.f32 %v314, 0.1
    %v441 = vmul.f32 %v319, 0.1
    %v442 = vmul.f32 %v324, 0.1
    %v443 = vmul.f32 %v329, 0.1
    %v444 = vmul.f32 %v334, 0.1
    %v445 = vmul.f32 %v339, 0.1
    %v446 = vmul.f32 %v344, 0.1
    %v447 = vmul.f32 %v349, 0.1
    %v448 = vmul.f32 %v354, 0.1
    %v449 = vmul.f32 %v359, 0.1
    %v450 = vmul.f32 %v364, 0.1
    %v451 = vmul.f32 %v369, 0.1
    %v452 = vmul.f32 %v374, 0.1
    %v453 = vmul.f32 %v379, 0.1
    %v454 = vmul.f32 %v384, 0.1
    %v455 = vmul.f32 %v389, 0.1
    %v456 = vsel %vm392, %v234, %v424
    %v457 = vsel %vm393, %v239, %v425
    %v458 = vsel %vm394, %v244, %v426
    %v459 = vsel %vm395, %v249, %v427
    %v460 = vsel %vm396, %v254, %v428
    %v461 = vsel %vm397, %v259, %v429
    %v462 = vsel %vm398, %v264, %v430
    %v463 = vsel %vm399, %v269, %v431
    %v464 = vsel %vm400, %v274, %v432
    %v465 = vsel %vm401, %v279, %v433
    %v466 = vsel %vm402, %v284, %v434
    %v467 = vsel %vm403, %v289, %v435
    %v468 = vsel %vm404, %v294, %v436
    %v469 = vsel %vm405, %v299, %v437
    %v470 = vsel %vm406, %v304, %v438
    %v471 = vsel %vm407, %v309, %v439
    %v472 = vsel %vm408, %v314, %v440
    %v473 = vsel %vm409, %v319, %v441
    %v474 = vsel %vm410, %v324, %v442
    %v475 = vsel %vm411, %v329, %v443
    %v476 = vsel %vm412, %v334, %v444
    %v477 = vsel %vm413, %v339, %v445
    %v478 = vsel %vm414, %v344, %v446
    %v479 = vsel %vm415, %v349, %v447
    %v480 = vsel %vm416, %v354, %v448
    %v481 = vsel %vm417, %v359, %v449
    %v482 = vsel %vm418, %v364, %v450
    %v483 = vsel %vm419, %v369, %v451
    %v484 = vsel %vm420, %v374, %v452
    %v485 = vsel %vm421, %v379, %v453
    %v486 = vsel %vm422, %v384, %v454
    %v487 = vsel %vm423, %v389, %v455
    %v488 = vld [vmem:[#allocation2 + $0x8] sm:$0xff]
    %v489 = vld [vmem:[#allocation2 + $0x30] sm:$0xff]
    %v490 = vld [vmem:[#allocation2 + $0x58] sm:$0xff]
    %v491 = vld [vmem:[#allocation2 + $0x80] sm:$0xff]
    %v492 = vld [vmem:[#allocation2 + $0xa8] sm:$0xff]
    %v493 = vld [vmem:[#allocation2 + $0xd0] sm:$0xff]
    %v494 = vld [vmem:[#allocation2 + $0xf8] sm:$0xff]
    %v495 = vld [vmem:[#allocation2 + $0x120] sm:$0xff]
    %v496 = vld [vmem:[#allocation2 + $0x148] sm:$0xff]
    %v497 = vld [vmem:[#allocation2 + $0x170] sm:$0xff]
    %v498 = vld [vmem:[#allocation2 + $0x198] sm:$0xff]
    %v499 = vld [vmem:[#allocation2 + $0x1c0] sm:$0xff]
    %v500 = vld [vmem:[#allocation2 + $0x1e8] sm:$0xff]
    %v501 = vld [vmem:[#allocation2 + $0x210] sm:$0xff]
    %v502 = vld [vmem:[#allocation2 + $0x238] sm:$0xff]
    %v503 = vld [vmem:[#allocation2 + $0x260] sm:$0xff]
    %v504 = vld [vmem:[%s2 + $0x2] sm:$0x1]
    %v505 = vlaneseq
    %v506 = vshrl.u32 %v505, 7
    %v507 = vsub.s32 0, %v506
    %v508 = vrot.slane %v504, %v507
    %509 = vmatprep.subr.mxu0 0.0
    %510 = vmatpush1.msra.mxu0 %v488
    %511 = vmatprep.subr.mxu0 0.0
    %512 = vmatpush1.msra.mxu0 %v489
    %513 = vmatprep.subr.mxu0 0.0
    %514 = vmatpush1.msra.mxu0 %v490
    %515 = vmatprep.subr.mxu0 0.0
    %516 = vmatpush1.msra.mxu0 %v491
    %517 = vmatprep.subr.mxu0 0.0
    %518 = vmatpush1.msra.mxu0 %v492
    %519 = vmatprep.subr.mxu0 0.0
    %520 = vmatpush1.msra.mxu0 %v493
    %521 = vmatprep.subr.mxu0 0.0
    %522 = vmatpush1.msra.mxu0 %v494
    %523 = vmatprep.subr.mxu0 0.0
    %524 = vmatpush1.msra.mxu0 %v495
    %525 = vmatprep.subr.mxu0 0.0
    %526 = vmatpush1.msra.mxu0 %v496
    %527 = vmatprep.subr.mxu0 0.0
    %528 = vmatpush1.msra.mxu0 %v497
    %529 = vmatprep.subr.mxu0 0.0
    %530 = vmatpush1.msra.mxu0 %v498
    %531 = vmatprep.subr.mxu0 0.0
    %532 = vmatpush1.msra.mxu0 %v499
    %533 = vmatprep.subr.mxu0 0.0
    %534 = vmatpush1.msra.mxu0 %v500
    %535 = vmatprep.subr.mxu0 0.0
    %536 = vmatpush1.msra.mxu0 %v501
    %537 = vmatprep.subr.mxu0 0.0
    %538 = vmatpush1.msra.mxu0 %v502
    %539 = vmatprep.subr.mxu0 0.0
    %540 = vmatpush1.msra.mxu0 %v503
    %541 = vmatprep.subr.mxu0 0.0
    %542 = vmatpush1.msra.mxu0 0.0
    %543 = vmatprep.subr.mxu0 0.0
    %544 = vmatpush1.msra.mxu0 0.0
    %545 = vmatprep.subr.mxu0 0.0
    %546 = vmatpush1.msra.mxu0 0.0
    %547 = vmatprep.subr.mxu0 0.0
    %548 = vmatpush1.msra.mxu0 0.0
    %549 = vmatprep.subr.mxu0 0.0
    %550 = vmatpush1.msra.mxu0 0.0
    %551 = vmatprep.subr.mxu0 0.0
    %552 = vmatpush1.msra.mxu0 0.0
    %553 = vmatprep.subr.mxu0 0.0
    %554 = vmatpush1.msra.mxu0 0.0
    %555 = vmatprep.subr.mxu0 0.0
    %556 = vmatpush1.msra.mxu0 0.0
    %557 = vmatprep.subr.mxu0 0.0
    %558 = vmatpush1.msra.mxu0 0.0
    %559 = vmatprep.subr.mxu0 0.0
    %560 = vmatpush1.msra.mxu0 0.0
    %561 = vmatprep.subr.mxu0 0.0
    %562 = vmatpush1.msra.mxu0 0.0
    %563 = vmatprep.subr.mxu0 0.0
    %564 = vmatpush1.msra.mxu0 0.0
    %565 = vmatprep.subr.mxu0 0.0
    %566 = vmatpush1.msra.mxu0 0.0
    %567 = vmatprep.subr.mxu0 0.0
    %568 = vmatpush1.msra.mxu0 0.0
    %569 = vmatprep.subr.mxu0 0.0
    %570 = vmatpush1.msra.mxu0 0.0
    %571 = vmatprep.subr.mxu0 0.0
    %572 = vmatpush1.msra.mxu0 0.0
    %573 = vmatprep.mubr.f32.mxu0 0.0
    %574 = vmatmul.mubr.f32.gmra.mrb[0].mxu0 %v456
    %v575 = vpop.f32.mrb[0].mxu0
    %v576 = vadd.f32 %v508, %v575
    %v577 = vpop.f32.mrb[0].mxu0
    %578 = vmatprep.mubr.f32.mxu0 0.0
    %579 = vmatmul.mubr.f32.gmra.mrb[0].mxu0 %v457
    %v580 = vpop.f32.mrb[0].mxu0
    %v581 = vadd.f32 %v508, %v580
    %v582 = vpop.f32.mrb[0].mxu0
    %583 = vmatprep.mubr.f32.mxu0 0.0
    %584 = vmatmul.mubr.f32.gmra.mrb[0].mxu0 %v458
    %v585 = vpop.f32.mrb[0].mxu0
    %v586 = vadd.f32 %v508, %v585
    %v587 = vpop.f32.mrb[0].mxu0
    %588 = vmatprep.mubr.f32.mxu0 0.0
    %589 = vmatmul.mubr.f32.gmra.mrb[0].mxu0 %v459
    %v590 = vpop.f32.mrb[0].mxu0
    %v591 = vadd.f32 %v508, %v590
    %v592 = vpop.f32.mrb[0].mxu0
    %593 = vmatprep.mubr.f32.mxu0 0.0
    %594 = vmatmul.mubr.f32.gmra.mrb[0].mxu0 %v460
    %v595 = vpop.f32.mrb[0].mxu0
    %v596 = vadd.f32 %v508, %v595
    %v597 = vpop.f32.mrb[0].mxu0
    %598 = vmatprep.mubr.f32.mxu0 0.0
    %599 = vmatmul.mubr.f32.gmra.mrb[0].mxu0 %v461
    %v600 = vpop.f32.mrb[0].mxu0
    %v601 = vadd.f32 %v508, %v600
    %v602 = vpop.f32.mrb[0].mxu0
    %603 = vmatprep.mubr.f32.mxu0 0.0
    %604 = vmatmul.mubr.f32.gmra.mrb[0].mxu0 %v462
    %v605 = vpop.f32.mrb[0].mxu0
    %v606 = vadd.f32 %v508, %v605
    %v607 = vpop.f32.mrb[0].mxu0
    %608 = vmatprep.mubr.f32.mxu0 0.0
    %609 = vmatmul.mubr.f32.gmra.mrb[0].mxu0 %v463
    %v610 = vpop.f32.mrb[0].mxu0
    %v611 = vadd.f32 %v508, %v610
    %v612 = vpop.f32.mrb[0].mxu0
    %613 = vmatprep.mubr.f32.mxu0 0.0
    %614 = vmatmul.mubr.f32.gmra.mrb[0].mxu0 %v464
    %v615 = vpop.f32.mrb[0].mxu0
    %v616 = vadd.f32 %v508, %v615
    %v617 = vpop.f32.mrb[0].mxu0
    %618 = vmatprep.mubr.f32.mxu0 0.0
    %619 = vmatmul.mubr.f32.gmra.mrb[0].mxu0 %v465
    %v620 = vpop.f32.mrb[0].mxu0
    %v621 = vadd.f32 %v508, %v620
    %v622 = vpop.f32.mrb[0].mxu0
    %623 = vmatprep.mubr.f32.mxu0 0.0
    %624 = vmatmul.mubr.f32.gmra.mrb[0].mxu0 %v466
    %v625 = vpop.f32.mrb[0].mxu0
    %v626 = vadd.f32 %v508, %v625
    %v627 = vpop.f32.mrb[0].mxu0
    %628 = vmatprep.mubr.f32.mxu0 0.0
    %629 = vmatmul.mubr.f32.gmra.mrb[0].mxu0 %v467
    %v630 = vpop.f32.mrb[0].mxu0
    %v631 = vadd.f32 %v508, %v630
    %v632 = vpop.f32.mrb[0].mxu0
    %633 = vmatprep.mubr.f32.mxu0 0.0
    %634 = vmatmul.mubr.f32.gmra.mrb[0].mxu0 %v468
    %v635 = vpop.f32.mrb[0].mxu0
    %v636 = vadd.f32 %v508, %v635
    %v637 = vpop.f32.mrb[0].mxu0
    %638 = vmatprep.mubr.f32.mxu0 0.0
    %639 = vmatmul.mubr.f32.gmra.mrb[0].mxu0 %v469
    %v640 = vpop.f32.mrb[0].mxu0
    %v641 = vadd.f32 %v508, %v640
    %v642 = vpop.f32.mrb[0].mxu0
    %643 = vmatprep.mubr.f32.mxu0 0.0
    %644 = vmatmul.mubr.f32.gmra.mrb[0].mxu0 %v470
    %v645 = vpop.f32.mrb[0].mxu0
    %v646 = vadd.f32 %v508, %v645
    %v647 = vpop.f32.mrb[0].mxu0
    %648 = vmatprep.mubr.f32.mxu0 0.0
    %649 = vmatmul.mubr.f32.gmra.mrb[0].mxu0 %v471
    %v650 = vpop.f32.mrb[0].mxu0
    %v651 = vadd.f32 %v508, %v650
    %v652 = vpop.f32.mrb[0].mxu0
    %653 = vmatprep.mubr.f32.mxu0 0.0
    %654 = vmatmul.mubr.f32.gmra.mrb[0].mxu0 %v472
    %v655 = vpop.f32.mrb[0].mxu0
    %v656 = vadd.f32 %v508, %v655
    %v657 = vpop.f32.mrb[0].mxu0
    %658 = vmatprep.mubr.f32.mxu0 0.0
    %659 = vmatmul.mubr.f32.gmra.mrb[0].mxu0 %v473
    %v660 = vpop.f32.mrb[0].mxu0
    %v661 = vadd.f32 %v508, %v660
    %v662 = vpop.f32.mrb[0].mxu0
    %663 = vmatprep.mubr.f32.mxu0 0.0
    %664 = vmatmul.mubr.f32.gmra.mrb[0].mxu0 %v474
    %v665 = vpop.f32.mrb[0].mxu0
    %v666 = vadd.f32 %v508, %v665
    %v667 = vpop.f32.mrb[0].mxu0
    %668 = vmatprep.mubr.f32.mxu0 0.0
    %669 = vmatmul.mubr.f32.gmra.mrb[0].mxu0 %v475
    %v670 = vpop.f32.mrb[0].mxu0
    %v671 = vadd.f32 %v508, %v670
    %v672 = vpop.f32.mrb[0].mxu0
    %673 = vmatprep.mubr.f32.mxu0 0.0
    %674 = vmatmul.mubr.f32.gmra.mrb[0].mxu0 %v476
    %v675 = vpop.f32.mrb[0].mxu0
    %v676 = vadd.f32 %v508, %v675
    %v677 = vpop.f32.mrb[0].mxu0
    %678 = vmatprep.mubr.f32.mxu0 0.0
    %679 = vmatmul.mubr.f32.gmra.mrb[0].mxu0 %v477
    %v680 = vpop.f32.mrb[0].mxu0
    %v681 = vadd.f32 %v508, %v680
    %v682 = vpop.f32.mrb[0].mxu0
    %683 = vmatprep.mubr.f32.mxu0 0.0
    %684 = vmatmul.mubr.f32.gmra.mrb[0].mxu0 %v478
    %v685 = vpop.f32.mrb[0].mxu0
    %v686 = vadd.f32 %v508, %v685
    %v687 = vpop.f32.mrb[0].mxu0
    %688 = vmatprep.mubr.f32.mxu0 0.0
    %689 = vmatmul.mubr.f32.gmra.mrb[0].mxu0 %v479
    %v690 = vpop.f32.mrb[0].mxu0
    %v691 = vadd.f32 %v508, %v690
    %v692 = vpop.f32.mrb[0].mxu0
    %693 = vmatprep.mubr.f32.mxu0 0.0
    %694 = vmatmul.mubr.f32.gmra.mrb[0].mxu0 %v480
    %v695 = vpop.f32.mrb[0].mxu0
    %v696 = vadd.f32 %v508, %v695
    %v697 = vpop.f32.mrb[0].mxu0
    %698 = vmatprep.mubr.f32.mxu0 0.0
    %699 = vmatmul.mubr.f32.gmra.mrb[0].mxu0 %v481
    %v700 = vpop.f32.mrb[0].mxu0
    %v701 = vadd.f32 %v508, %v700
    %v702 = vpop.f32.mrb[0].mxu0
    %703 = vmatprep.mubr.f32.mxu0 0.0
    %704 = vmatmul.mubr.f32.gmra.mrb[0].mxu0 %v482
    %v705 = vpop.f32.mrb[0].mxu0
    %v706 = vadd.f32 %v508, %v705
    %v707 = vpop.f32.mrb[0].mxu0
    %708 = vmatprep.mubr.f32.mxu0 0.0
    %709 = vmatmul.mubr.f32.gmra.mrb[0].mxu0 %v483
    %v710 = vpop.f32.mrb[0].mxu0
    %v711 = vadd.f32 %v508, %v710
    %v712 = vpop.f32.mrb[0].mxu0
    %713 = vmatprep.mubr.f32.mxu0 0.0
    %714 = vmatmul.mubr.f32.gmra.mrb[0].mxu0 %v484
    %v715 = vpop.f32.mrb[0].mxu0
    %v716 = vadd.f32 %v508, %v715
    %v717 = vpop.f32.mrb[0].mxu0
    %718 = vmatprep.mubr.f32.mxu0 0.0
    %719 = vmatmul.mubr.f32.gmra.mrb[0].mxu0 %v485
    %v720 = vpop.f32.mrb[0].mxu0
    %v721 = vadd.f32 %v508, %v720
    %v722 = vpop.f32.mrb[0].mxu0
    %723 = vmatprep.mubr.f32.mxu0 0.0
    %724 = vmatmul.mubr.f32.gmra.mrb[0].mxu0 %v486
    %v725 = vpop.f32.mrb[0].mxu0
    %v726 = vadd.f32 %v508, %v725
    %v727 = vpop.f32.mrb[0].mxu0
    %728 = vmatprep.mubr.f32.mxu0 0.0
    %729 = vmatmul.mubr.f32.gmra.mrb[0].mxu0 %v487
    %v730 = vpop.f32.mrb[0].mxu0
    %v731 = vadd.f32 %v508, %v730
    %v732 = vpop.f32.mrb[0].mxu0
    %733 = vdwg.mxu0
    %v734 = vadd.f32 %v576, %v456
    %v735 = vadd.f32 %v581, %v457
    %v736 = vadd.f32 %v586, %v458
    %v737 = vadd.f32 %v591, %v459
    %v738 = vadd.f32 %v596, %v460
    %v739 = vadd.f32 %v601, %v461
    %v740 = vadd.f32 %v606, %v462
    %v741 = vadd.f32 %v611, %v463
    %v742 = vadd.f32 %v616, %v464
    %v743 = vadd.f32 %v621, %v465
    %v744 = vadd.f32 %v626, %v466
    %v745 = vadd.f32 %v631, %v467
    %v746 = vadd.f32 %v636, %v468
    %v747 = vadd.f32 %v641, %v469
    %v748 = vadd.f32 %v646, %v470
    %v749 = vadd.f32 %v651, %v471
    %v750 = vadd.f32 %v656, %v472
    %v751 = vadd.f32 %v661, %v473
    %v752 = vadd.f32 %v666, %v474
    %v753 = vadd.f32 %v671, %v475
    %v754 = vadd.f32 %v676, %v476
    %v755 = vadd.f32 %v681, %v477
    %v756 = vadd.f32 %v686, %v478
    %v757 = vadd.f32 %v691, %v479
    %v758 = vadd.f32 %v696, %v480
    %v759 = vadd.f32 %v701, %v481
    %v760 = vadd.f32 %v706, %v482
    %v761 = vadd.f32 %v711, %v483
    %v762 = vadd.f32 %v716, %v484
    %v763 = vadd.f32 %v721, %v485
    %v764 = vadd.f32 %v726, %v486
    %v765 = vadd.f32 %v731, %v487
    %vm766 = vcmp.gt.f32.partialorder %v734, 0.0
    %vm767 = vcmp.gt.f32.partialorder %v735, 0.0
    %vm768 = vcmp.gt.f32.partialorder %v736, 0.0
    %vm769 = vcmp.gt.f32.partialorder %v737, 0.0
    %vm770 = vcmp.gt.f32.partialorder %v738, 0.0
    %vm771 = vcmp.gt.f32.partialorder %v739, 0.0
    %vm772 = vcmp.gt.f32.partialorder %v740, 0.0
    %vm773 = vcmp.gt.f32.partialorder %v741, 0.0
    %vm774 = vcmp.gt.f32.partialorder %v742, 0.0
    %vm775 = vcmp.gt.f32.partialorder %v743, 0.0
    %vm776 = vcmp.gt.f32.partialorder %v744, 0.0
    %vm777 = vcmp.gt.f32.partialorder %v745, 0.0
    %vm778 = vcmp.gt.f32.partialorder %v746, 0.0
    %vm779 = vcmp.gt.f32.partialorder %v747, 0.0
    %vm780 = vcmp.gt.f32.partialorder %v748, 0.0
    %vm781 = vcmp.gt.f32.partialorder %v749, 0.0
    %vm782 = vcmp.gt.f32.partialorder %v750, 0.0
    %vm783 = vcmp.gt.f32.partialorder %v751, 0.0
    %vm784 = vcmp.gt.f32.partialorder %v752, 0.0
    %vm785 = vcmp.gt.f32.partialorder %v753, 0.0
    %vm786 = vcmp.gt.f32.partialorder %v754, 0.0
    %vm787 = vcmp.gt.f32.partialorder %v755, 0.0
    %vm788 = vcmp.gt.f32.partialorder %v756, 0.0
    %vm789 = vcmp.gt.f32.partialorder %v757, 0.0
    %vm790 = vcmp.gt.f32.partialorder %v758, 0.0
    %vm791 = vcmp.gt.f32.partialorder %v759, 0.0
    %vm792 = vcmp.gt.f32.partialorder %v760, 0.0
    %vm793 = vcmp.gt.f32.partialorder %v761, 0.0
    %vm794 = vcmp.gt.f32.partialorder %v762, 0.0
    %vm795 = vcmp.gt.f32.partialorder %v763, 0.0
    %vm796 = vcmp.gt.f32.partialorder %v764, 0.0
    %vm797 = vcmp.gt.f32.partialorder %v765, 0.0
    %v798 = vmul.f32 %v734, 0.1
    %v799 = vmul.f32 %v735, 0.1
    %v800 = vmul.f32 %v736, 0.1
    %v801 = vmul.f32 %v737, 0.1
    %v802 = vmul.f32 %v738, 0.1
    %v803 = vmul.f32 %v739, 0.1
    %v804 = vmul.f32 %v740, 0.1
    %v805 = vmul.f32 %v741, 0.1
    %v806 = vmul.f32 %v742, 0.1
    %v807 = vmul.f32 %v743, 0.1
    %v808 = vmul.f32 %v744, 0.1
    %v809 = vmul.f32 %v745, 0.1
    %v810 = vmul.f32 %v746, 0.1
    %v811 = vmul.f32 %v747, 0.1
    %v812 = vmul.f32 %v748, 0.1
    %v813 = vmul.f32 %v749, 0.1
    %v814 = vmul.f32 %v750, 0.1
    %v815 = vmul.f32 %v751, 0.1
    %v816 = vmul.f32 %v752, 0.1
    %v817 = vmul.f32 %v753, 0.1
    %v818 = vmul.f32 %v754, 0.1
    %v819 = vmul.f32 %v755, 0.1
    %v820 = vmul.f32 %v756, 0.1
    %v821 = vmul.f32 %v757, 0.1
    %v822 = vmul.f32 %v758, 0.1
    %v823 = vmul.f32 %v759, 0.1
    %v824 = vmul.f32 %v760, 0.1
    %v825 = vmul.f32 %v761, 0.1
    %v826 = vmul.f32 %v762, 0.1
    %v827 = vmul.f32 %v763, 0.1
    %v828 = vmul.f32 %v764, 0.1
    %v829 = vmul.f32 %v765, 0.1
    %v830 = vsel %vm766, %v734, %v798
    %v831 = vsel %vm767, %v735, %v799
    %v832 = vsel %vm768, %v736, %v800
    %v833 = vsel %vm769, %v737, %v801
    %v834 = vsel %vm770, %v738, %v802
    %v835 = vsel %vm771, %v739, %v803
    %v836 = vsel %vm772, %v740, %v804
    %v837 = vsel %vm773, %v741, %v805
    %v838 = vsel %vm774, %v742, %v806
    %v839 = vsel %vm775, %v743, %v807
    %v840 = vsel %vm776, %v744, %v808
    %v841 = vsel %vm777, %v745, %v809
    %v842 = vsel %vm778, %v746, %v810
    %v843 = vsel %vm779, %v747, %v811
    %v844 = vsel %vm780, %v748, %v812
    %v845 = vsel %vm781, %v749, %v813
    %v846 = vsel %vm782, %v750, %v814
    %v847 = vsel %vm783, %v751, %v815
    %v848 = vsel %vm784, %v752, %v816
    %v849 = vsel %vm785, %v753, %v817
    %v850 = vsel %vm786, %v754, %v818
    %v851 = vsel %vm787, %v755, %v819
    %v852 = vsel %vm788, %v756, %v820
    %v853 = vsel %vm789, %v757, %v821
    %v854 = vsel %vm790, %v758, %v822
    %v855 = vsel %vm791, %v759, %v823
    %v856 = vsel %vm792, %v760, %v824
    %v857 = vsel %vm793, %v761, %v825
    %v858 = vsel %vm794, %v762, %v826
    %v859 = vsel %vm795, %v763, %v827
    %v860 = vsel %vm796, %v764, %v828
    %v861 = vsel %vm797, %v765, %v829
    %v862 = vld [vmem:[#allocation2 + $0x10] sm:$0xff]
    %v863 = vld [vmem:[#allocation2 + $0x38] sm:$0xff]
    %v864 = vld [vmem:[#allocation2 + $0x60] sm:$0xff]
    %v865 = vld [vmem:[#allocation2 + $0x88] sm:$0xff]
    %v866 = vld [vmem:[#allocation2 + $0xb0] sm:$0xff]
    %v867 = vld [vmem:[#allocation2 + $0xd8] sm:$0xff]
    %v868 = vld [vmem:[#allocation2 + $0x100] sm:$0xff]
    %v869 = vld [vmem:[#allocation2 + $0x128] sm:$0xff]
    %v870 = vld [vmem:[#allocation2 + $0x150] sm:$0xff]
    %v871 = vld [vmem:[#allocation2 + $0x178] sm:$0xff]
    %v872 = vld [vmem:[#allocation2 + $0x1a0] sm:$0xff]
    %v873 = vld [vmem:[#allocation2 + $0x1c8] sm:$0xff]
    %v874 = vld [vmem:[#allocation2 + $0x1f0] sm:$0xff]
    %v875 = vld [vmem:[#allocation2 + $0x218] sm:$0xff]
    %v876 = vld [vmem:[#allocation2 + $0x240] sm:$0xff]
    %v877 = vld [vmem:[#allocation2 + $0x268] sm:$0xff]
    %v878 = vld [vmem:[%s2 + $0x4] sm:$0x1]
    %v879 = vlaneseq
    %v880 = vshrl.u32 %v879, 7
    %v881 = vsub.s32 0, %v880
    %v882 = vrot.slane %v878, %v881
    %883 = vmatprep.subr.mxu0 0.0
    %884 = vmatpush1.msra.mxu0 %v862
    %885 = vmatprep.subr.mxu0 0.0
    %886 = vmatpush1.msra.mxu0 %v863
    %887 = vmatprep.subr.mxu0 0.0
    %888 = vmatpush1.msra.mxu0 %v864
    %889 = vmatprep.subr.mxu0 0.0
    %890 = vmatpush1.msra.mxu0 %v865
    %891 = vmatprep.subr.mxu0 0.0
    %892 = vmatpush1.msra.mxu0 %v866
    %893 = vmatprep.subr.mxu0 0.0
    %894 = vmatpush1.msra.mxu0 %v867
    %895 = vmatprep.subr.mxu0 0.0
    %896 = vmatpush1.msra.mxu0 %v868
    %897 = vmatprep.subr.mxu0 0.0
    %898 = vmatpush1.msra.mxu0 %v869
    %899 = vmatprep.subr.mxu0 0.0
    %900 = vmatpush1.msra.mxu0 %v870
    %901 = vmatprep.subr.mxu0 0.0
    %902 = vmatpush1.msra.mxu0 %v871
    %903 = vmatprep.subr.mxu0 0.0
    %904 = vmatpush1.msra.mxu0 %v872
    %905 = vmatprep.subr.mxu0 0.0
    %906 = vmatpush1.msra.mxu0 %v873
    %907 = vmatprep.subr.mxu0 0.0
    %908 = vmatpush1.msra.mxu0 %v874
    %909 = vmatprep.subr.mxu0 0.0
    %910 = vmatpush1.msra.mxu0 %v875
    %911 = vmatprep.subr.mxu0 0.0
    %912 = vmatpush1.msra.mxu0 %v876
    %913 = vmatprep.subr.mxu0 0.0
    %914 = vmatpush1.msra.mxu0 %v877
    %915 = vmatprep.subr.mxu0 0.0
    %916 = vmatpush1.msra.mxu0 0.0
    %917 = vmatprep.subr.mxu0 0.0
    %918 = vmatpush1.msra.mxu0 0.0
    %919 = vmatprep.subr.mxu0 0.0
    %920 = vmatpush1.msra.mxu0 0.0
    %921 = vmatprep.subr.mxu0 0.0
    %922 = vmatpush1.msra.mxu0 0.0
    %923 = vmatprep.subr.mxu0 0.0
    %924 = vmatpush1.msra.mxu0 0.0
    %925 = vmatprep.subr.mxu0 0.0
    %926 = vmatpush1.msra.mxu0 0.0
    %927 = vmatprep.subr.mxu0 0.0
    %928 = vmatpush1.msra.mxu0 0.0
    %929 = vmatprep.subr.mxu0 0.0
    %930 = vmatpush1.msra.mxu0 0.0
    %931 = vmatprep.subr.mxu0 0.0
    %932 = vmatpush1.msra.mxu0 0.0
    %933 = vmatprep.subr.mxu0 0.0
    %934 = vmatpush1.msra.mxu0 0.0
    %935 = vmatprep.subr.mxu0 0.0
    %936 = vmatpush1.msra.mxu0 0.0
    %937 = vmatprep.subr.mxu0 0.0
    %938 = vmatpush1.msra.mxu0 0.0
    %939 = vmatprep.subr.mxu0 0.0
    %940 = vmatpush1.msra.mxu0 0.0
    %941 = vmatprep.subr.mxu0 0.0
    %942 = vmatpush1.msra.mxu0 0.0
    %943 = vmatprep.subr.mxu0 0.0
    %944 = vmatpush1.msra.mxu0 0.0
    %945 = vmatprep.subr.mxu0 0.0
    %946 = vmatpush1.msra.mxu0 0.0
    %947 = vmatprep.mubr.f32.mxu0 0.0
    %948 = vmatmul.mubr.f32.gmra.mrb[0].mxu0 %v830
    %v949 = vpop.f32.mrb[0].mxu0
    %v950 = vadd.f32 %v882, %v949
    %v951 = vpop.f32.mrb[0].mxu0
    %952 = vmatprep.mubr.f32.mxu0 0.0
    %953 = vmatmul.mubr.f32.gmra.mrb[0].mxu0 %v831
    %v954 = vpop.f32.mrb[0].mxu0
    %v955 = vadd.f32 %v882, %v954
    %v956 = vpop.f32.mrb[0].mxu0
    %957 = vmatprep.mubr.f32.mxu0 0.0
    %958 = vmatmul.mubr.f32.gmra.mrb[0].mxu0 %v832
    %v959 = vpop.f32.mrb[0].mxu0
    %v960 = vadd.f32 %v882, %v959
    %v961 = vpop.f32.mrb[0].mxu0
    %962 = vmatprep.mubr.f32.mxu0 0.0
    %963 = vmatmul.mubr.f32.gmra.mrb[0].mxu0 %v833
    %v964 = vpop.f32.mrb[0].mxu0
    %v965 = vadd.f32 %v882, %v964
    %v966 = vpop.f32.mrb[0].mxu0
    %967 = vmatprep.mubr.f32.mxu0 0.0
    %968 = vmatmul.mubr.f32.gmra.mrb[0].mxu0 %v834
    %v969 = vpop.f32.mrb[0].mxu0
    %v970 = vadd.f32 %v882, %v969
    %v971 = vpop.f32.mrb[0].mxu0
    %972 = vmatprep.mubr.f32.mxu0 0.0
    %973 = vmatmul.mubr.f32.gmra.mrb[0].mxu0 %v835
    %v974 = vpop.f32.mrb[0].mxu0
    %v975 = vadd.f32 %v882, %v974
    %v976 = vpop.f32.mrb[0].mxu0
    %977 = vmatprep.mubr.f32.mxu0 0.0
    %978 = vmatmul.mubr.f32.gmra.mrb[0].mxu0 %v836
    %v979 = vpop.f32.mrb[0].mxu0
    %v980 = vadd.f32 %v882, %v979
    %v981 = vpop.f32.mrb[0].mxu0
    %982 = vmatprep.mubr.f32.mxu0 0.0
    %983 = vmatmul.mubr.f32.gmra.mrb[0].mxu0 %v837
    %v984 = vpop.f32.mrb[0].mxu0
    %v985 = vadd.f32 %v882, %v984
    %v986 = vpop.f32.mrb[0].mxu0
    %987 = vmatprep.mubr.f32.mxu0 0.0
    %988 = vmatmul.mubr.f32.gmra.mrb[0].mxu0 %v838
    %v989 = vpop.f32.mrb[0].mxu0
    %v990 = vadd.f32 %v882, %v989
    %v991 = vpop.f32.mrb[0].mxu0
    %992 = vmatprep.mubr.f32.mxu0 0.0
    %993 = vmatmul.mubr.f32.gmra.mrb[0].mxu0 %v839
    %v994 = vpop.f32.mrb[0].mxu0
    %v995 = vadd.f32 %v882, %v994
    %v996 = vpop.f32.mrb[0].mxu0
    %997 = vmatprep.mubr.f32.mxu0 0.0
    %998 = vmatmul.mubr.f32.gmra.mrb[0].mxu0 %v840
    %v999 = vpop.f32.mrb[0].mxu0
    %v1000 = vadd.f32 %v882, %v999
    %v1001 = vpop.f32.mrb[0].mxu0
    %1002 = vmatprep.mubr.f32.mxu0 0.0
    %1003 = vmatmul.mubr.f32.gmra.mrb[0].mxu0 %v841
    %v1004 = vpop.f32.mrb[0].mxu0
    %v1005 = vadd.f32 %v882, %v1004
    %v1006 = vpop.f32.mrb[0].mxu0
    %1007 = vmatprep.mubr.f32.mxu0 0.0
    %1008 = vmatmul.mubr.f32.gmra.mrb[0].mxu0 %v842
    %v1009 = vpop.f32.mrb[0].mxu0
    %v1010 = vadd.f32 %v882, %v1009
    %v1011 = vpop.f32.mrb[0].mxu0
    %1012 = vmatprep.mubr.f32.mxu0 0.0
    %1013 = vmatmul.mubr.f32.gmra.mrb[0].mxu0 %v843
    %v1014 = vpop.f32.mrb[0].mxu0
    %v1015 = vadd.f32 %v882, %v1014
    %v1016 = vpop.f32.mrb[0].mxu0
    %1017 = vmatprep.mubr.f32.mxu0 0.0
    %1018 = vmatmul.mubr.f32.gmra.mrb[0].mxu0 %v844
    %v1019 = vpop.f32.mrb[0].mxu0
    %v1020 = vadd.f32 %v882, %v1019
    %v1021 = vpop.f32.mrb[0].mxu0
    %1022 = vmatprep.mubr.f32.mxu0 0.0
    %1023 = vmatmul.mubr.f32.gmra.mrb[0].mxu0 %v845
    %v1024 = vpop.f32.mrb[0].mxu0
    %v1025 = vadd.f32 %v882, %v1024
    %v1026 = vpop.f32.mrb[0].mxu0
    %1027 = vmatprep.mubr.f32.mxu0 0.0
    %1028 = vmatmul.mubr.f32.gmra.mrb[0].mxu0 %v846
    %v1029 = vpop.f32.mrb[0].mxu0
    %v1030 = vadd.f32 %v882, %v1029
    %v1031 = vpop.f32.mrb[0].mxu0
    %1032 = vmatprep.mubr.f32.mxu0 0.0
    %1033 = vmatmul.mubr.f32.gmra.mrb[0].mxu0 %v847
    %v1034 = vpop.f32.mrb[0].mxu0
    %v1035 = vadd.f32 %v882, %v1034
    %v1036 = vpop.f32.mrb[0].mxu0
    %1037 = vmatprep.mubr.f32.mxu0 0.0
    %1038 = vmatmul.mubr.f32.gmra.mrb[0].mxu0 %v848
    %v1039 = vpop.f32.mrb[0].mxu0
    %v1040 = vadd.f32 %v882, %v1039
    %v1041 = vpop.f32.mrb[0].mxu0
    %1042 = vmatprep.mubr.f32.mxu0 0.0
    %1043 = vmatmul.mubr.f32.gmra.mrb[0].mxu0 %v849
    %v1044 = vpop.f32.mrb[0].mxu0
    %v1045 = vadd.f32 %v882, %v1044
    %v1046 = vpop.f32.mrb[0].mxu0
    %1047 = vmatprep.mubr.f32.mxu0 0.0
    %1048 = vmatmul.mubr.f32.gmra.mrb[0].mxu0 %v850
    %v1049 = vpop.f32.mrb[0].mxu0
    %v1050 = vadd.f32 %v882, %v1049
    %v1051 = vpop.f32.mrb[0].mxu0
    %1052 = vmatprep.mubr.f32.mxu0 0.0
    %1053 = vmatmul.mubr.f32.gmra.mrb[0].mxu0 %v851
    %v1054 = vpop.f32.mrb[0].mxu0
    %v1055 = vadd.f32 %v882, %v1054
    %v1056 = vpop.f32.mrb[0].mxu0
    %1057 = vmatprep.mubr.f32.mxu0 0.0
    %1058 = vmatmul.mubr.f32.gmra.mrb[0].mxu0 %v852
    %v1059 = vpop.f32.mrb[0].mxu0
    %v1060 = vadd.f32 %v882, %v1059
    %v1061 = vpop.f32.mrb[0].mxu0
    %1062 = vmatprep.mubr.f32.mxu0 0.0
    %1063 = vmatmul.mubr.f32.gmra.mrb[0].mxu0 %v853
    %v1064 = vpop.f32.mrb[0].mxu0
    %v1065 = vadd.f32 %v882, %v1064
    %v1066 = vpop.f32.mrb[0].mxu0
    %1067 = vmatprep.mubr.f32.mxu0 0.0
    %1068 = vmatmul.mubr.f32.gmra.mrb[0].mxu0 %v854
    %v1069 = vpop.f32.mrb[0].mxu0
    %v1070 = vadd.f32 %v882, %v1069
    %v1071 = vpop.f32.mrb[0].mxu0
    %1072 = vmatprep.mubr.f32.mxu0 0.0
    %1073 = vmatmul.mubr.f32.gmra.mrb[0].mxu0 %v855
    %v1074 = vpop.f32.mrb[0].mxu0
    %v1075 = vadd.f32 %v882, %v1074
    %v1076 = vpop.f32.mrb[0].mxu0
    %1077 = vmatprep.mubr.f32.mxu0 0.0
    %1078 = vmatmul.mubr.f32.gmra.mrb[0].mxu0 %v856
    %v1079 = vpop.f32.mrb[0].mxu0
    %v1080 = vadd.f32 %v882, %v1079
    %v1081 = vpop.f32.mrb[0].mxu0
    %1082 = vmatprep.mubr.f32.mxu0 0.0
    %1083 = vmatmul.mubr.f32.gmra.mrb[0].mxu0 %v857
    %v1084 = vpop.f32.mrb[0].mxu0
    %v1085 = vadd.f32 %v882, %v1084
    %v1086 = vpop.f32.mrb[0].mxu0
    %1087 = vmatprep.mubr.f32.mxu0 0.0
    %1088 = vmatmul.mubr.f32.gmra.mrb[0].mxu0 %v858
    %v1089 = vpop.f32.mrb[0].mxu0
    %v1090 = vadd.f32 %v882, %v1089
    %v1091 = vpop.f32.mrb[0].mxu0
    %1092 = vmatprep.mubr.f32.mxu0 0.0
    %1093 = vmatmul.mubr.f32.gmra.mrb[0].mxu0 %v859
    %v1094 = vpop.f32.mrb[0].mxu0
    %v1095 = vadd.f32 %v882, %v1094
    %v1096 = vpop.f32.mrb[0].mxu0
    %1097 = vmatprep.mubr.f32.mxu0 0.0
    %1098 = vmatmul.mubr.f32.gmra.mrb[0].mxu0 %v860
    %v1099 = vpop.f32.mrb[0].mxu0
    %v1100 = vadd.f32 %v882, %v1099
    %v1101 = vpop.f32.mrb[0].mxu0
    %1102 = vmatprep.mubr.f32.mxu0 0.0
    %1103 = vmatmul.mubr.f32.gmra.mrb[0].mxu0 %v861
    %v1104 = vpop.f32.mrb[0].mxu0
    %v1105 = vadd.f32 %v882, %v1104
    %v1106 = vpop.f32.mrb[0].mxu0
    %1107 = vdwg.mxu0
    %vm1108 = vcmp.gt.f32.partialorder %v950, 0.0
    %vm1109 = vcmp.gt.f32.partialorder %v955, 0.0
    %vm1110 = vcmp.gt.f32.partialorder %v960, 0.0
    %vm1111 = vcmp.gt.f32.partialorder %v965, 0.0
    %vm1112 = vcmp.gt.f32.partialorder %v970, 0.0
    %vm1113 = vcmp.gt.f32.partialorder %v975, 0.0
    %vm1114 = vcmp.gt.f32.partialorder %v980, 0.0
    %vm1115 = vcmp.gt.f32.partialorder %v985, 0.0
    %vm1116 = vcmp.gt.f32.partialorder %v990, 0.0
    %vm1117 = vcmp.gt.f32.partialorder %v995, 0.0
    %vm1118 = vcmp.gt.f32.partialorder %v1000, 0.0
    %vm1119 = vcmp.gt.f32.partialorder %v1005, 0.0
    %vm1120 = vcmp.gt.f32.partialorder %v1010, 0.0
    %vm1121 = vcmp.gt.f32.partialorder %v1015, 0.0
    %vm1122 = vcmp.gt.f32.partialorder %v1020, 0.0
    %vm1123 = vcmp.gt.f32.partialorder %v1025, 0.0
    %vm1124 = vcmp.gt.f32.partialorder %v1030, 0.0
    %vm1125 = vcmp.gt.f32.partialorder %v1035, 0.0
    %vm1126 = vcmp.gt.f32.partialorder %v1040, 0.0
    %vm1127 = vcmp.gt.f32.partialorder %v1045, 0.0
    %vm1128 = vcmp.gt.f32.partialorder %v1050, 0.0
    %vm1129 = vcmp.gt.f32.partialorder %v1055, 0.0
    %vm1130 = vcmp.gt.f32.partialorder %v1060, 0.0
    %vm1131 = vcmp.gt.f32.partialorder %v1065, 0.0
    %vm1132 = vcmp.gt.f32.partialorder %v1070, 0.0
    %vm1133 = vcmp.gt.f32.partialorder %v1075, 0.0
    %vm1134 = vcmp.gt.f32.partialorder %v1080, 0.0
    %vm1135 = vcmp.gt.f32.partialorder %v1085, 0.0
    %vm1136 = vcmp.gt.f32.partialorder %v1090, 0.0
    %vm1137 = vcmp.gt.f32.partialorder %v1095, 0.0
    %vm1138 = vcmp.gt.f32.partialorder %v1100, 0.0
    %vm1139 = vcmp.gt.f32.partialorder %v1105, 0.0
    %v1140 = vmul.f32 %v950, 0.1
    %v1141 = vmul.f32 %v955, 0.1
    %v1142 = vmul.f32 %v960, 0.1
    %v1143 = vmul.f32 %v965, 0.1
    %v1144 = vmul.f32 %v970, 0.1
    %v1145 = vmul.f32 %v975, 0.1
    %v1146 = vmul.f32 %v980, 0.1
    %v1147 = vmul.f32 %v985, 0.1
    %v1148 = vmul.f32 %v990, 0.1
    %v1149 = vmul.f32 %v995, 0.1
    %v1150 = vmul.f32 %v1000, 0.1
    %v1151 = vmul.f32 %v1005, 0.1
    %v1152 = vmul.f32 %v1010, 0.1
    %v1153 = vmul.f32 %v1015, 0.1
    %v1154 = vmul.f32 %v1020, 0.1
    %v1155 = vmul.f32 %v1025, 0.1
    %v1156 = vmul.f32 %v1030, 0.1
    %v1157 = vmul.f32 %v1035, 0.1
    %v1158 = vmul.f32 %v1040, 0.1
    %v1159 = vmul.f32 %v1045, 0.1
    %v1160 = vmul.f32 %v1050, 0.1
    %v1161 = vmul.f32 %v1055, 0.1
    %v1162 = vmul.f32 %v1060, 0.1
    %v1163 = vmul.f32 %v1065, 0.1
    %v1164 = vmul.f32 %v1070, 0.1
    %v1165 = vmul.f32 %v1075, 0.1
    %v1166 = vmul.f32 %v1080, 0.1
    %v1167 = vmul.f32 %v1085, 0.1
    %v1168 = vmul.f32 %v1090, 0.1
    %v1169 = vmul.f32 %v1095, 0.1
    %v1170 = vmul.f32 %v1100, 0.1
    %v1171 = vmul.f32 %v1105, 0.1
    %v1172 = vsel %vm1108, %v950, %v1140
    %v1173 = vsel %vm1109, %v955, %v1141
    %v1174 = vsel %vm1110, %v960, %v1142
    %v1175 = vsel %vm1111, %v965, %v1143
    %v1176 = vsel %vm1112, %v970, %v1144
    %v1177 = vsel %vm1113, %v975, %v1145
    %v1178 = vsel %vm1114, %v980, %v1146
    %v1179 = vsel %vm1115, %v985, %v1147
    %v1180 = vsel %vm1116, %v990, %v1148
    %v1181 = vsel %vm1117, %v995, %v1149
    %v1182 = vsel %vm1118, %v1000, %v1150
    %v1183 = vsel %vm1119, %v1005, %v1151
    %v1184 = vsel %vm1120, %v1010, %v1152
    %v1185 = vsel %vm1121, %v1015, %v1153
    %v1186 = vsel %vm1122, %v1020, %v1154
    %v1187 = vsel %vm1123, %v1025, %v1155
    %v1188 = vsel %vm1124, %v1030, %v1156
    %v1189 = vsel %vm1125, %v1035, %v1157
    %v1190 = vsel %vm1126, %v1040, %v1158
    %v1191 = vsel %vm1127, %v1045, %v1159
    %v1192 = vsel %vm1128, %v1050, %v1160
    %v1193 = vsel %vm1129, %v1055, %v1161
    %v1194 = vsel %vm1130, %v1060, %v1162
    %v1195 = vsel %vm1131, %v1065, %v1163
    %v1196 = vsel %vm1132, %v1070, %v1164
    %v1197 = vsel %vm1133, %v1075, %v1165
    %v1198 = vsel %vm1134, %v1080, %v1166
    %v1199 = vsel %vm1135, %v1085, %v1167
    %v1200 = vsel %vm1136, %v1090, %v1168
    %v1201 = vsel %vm1137, %v1095, %v1169
    %v1202 = vsel %vm1138, %v1100, %v1170
    %v1203 = vsel %vm1139, %v1105, %v1171
    %v1204 = vld [vmem:[#allocation2 + $0x18] sm:$0xff]
    %v1205 = vld [vmem:[#allocation2 + $0x40] sm:$0xff]
    %v1206 = vld [vmem:[#allocation2 + $0x68] sm:$0xff]
    %v1207 = vld [vmem:[#allocation2 + $0x90] sm:$0xff]
    %v1208 = vld [vmem:[#allocation2 + $0xb8] sm:$0xff]
    %v1209 = vld [vmem:[#allocation2 + $0xe0] sm:$0xff]
    %v1210 = vld [vmem:[#allocation2 + $0x108] sm:$0xff]
    %v1211 = vld [vmem:[#allocation2 + $0x130] sm:$0xff]
    %v1212 = vld [vmem:[#allocation2 + $0x158] sm:$0xff]
    %v1213 = vld [vmem:[#allocation2 + $0x180] sm:$0xff]
    %v1214 = vld [vmem:[#allocation2 + $0x1a8] sm:$0xff]
    %v1215 = vld [vmem:[#allocation2 + $0x1d0] sm:$0xff]
    %v1216 = vld [vmem:[#allocation2 + $0x1f8] sm:$0xff]
    %v1217 = vld [vmem:[#allocation2 + $0x220] sm:$0xff]
    %v1218 = vld [vmem:[#allocation2 + $0x248] sm:$0xff]
    %v1219 = vld [vmem:[#allocation2 + $0x270] sm:$0xff]
    %v1220 = vld [vmem:[%s2 + $0x6] sm:$0x1]
    %v1221 = vlaneseq
    %v1222 = vshrl.u32 %v1221, 7
    %v1223 = vsub.s32 0, %v1222
    %v1224 = vrot.slane %v1220, %v1223
    %1225 = vmatprep.subr.mxu0 0.0
    %1226 = vmatpush1.msra.mxu0 %v1204
    %1227 = vmatprep.subr.mxu0 0.0
    %1228 = vmatpush1.msra.mxu0 %v1205
    %1229 = vmatprep.subr.mxu0 0.0
    %1230 = vmatpush1.msra.mxu0 %v1206
    %1231 = vmatprep.subr.mxu0 0.0
    %1232 = vmatpush1.msra.mxu0 %v1207
    %1233 = vmatprep.subr.mxu0 0.0
    %1234 = vmatpush1.msra.mxu0 %v1208
    %1235 = vmatprep.subr.mxu0 0.0
    %1236 = vmatpush1.msra.mxu0 %v1209
    %1237 = vmatprep.subr.mxu0 0.0
    %1238 = vmatpush1.msra.mxu0 %v1210
    %1239 = vmatprep.subr.mxu0 0.0
    %1240 = vmatpush1.msra.mxu0 %v1211
    %1241 = vmatprep.subr.mxu0 0.0
    %1242 = vmatpush1.msra.mxu0 %v1212
    %1243 = vmatprep.subr.mxu0 0.0
    %1244 = vmatpush1.msra.mxu0 %v1213
    %1245 = vmatprep.subr.mxu0 0.0
    %1246 = vmatpush1.msra.mxu0 %v1214
    %1247 = vmatprep.subr.mxu0 0.0
    %1248 = vmatpush1.msra.mxu0 %v1215
    %1249 = vmatprep.subr.mxu0 0.0
    %1250 = vmatpush1.msra.mxu0 %v1216
    %1251 = vmatprep.subr.mxu0 0.0
    %1252 = vmatpush1.msra.mxu0 %v1217
    %1253 = vmatprep.subr.mxu0 0.0
    %1254 = vmatpush1.msra.mxu0 %v1218
    %1255 = vmatprep.subr.mxu0 0.0
    %1256 = vmatpush1.msra.mxu0 %v1219
    %1257 = vmatprep.subr.mxu0 0.0
    %1258 = vmatpush1.msra.mxu0 0.0
    %1259 = vmatprep.subr.mxu0 0.0
    %1260 = vmatpush1.msra.mxu0 0.0
    %1261 = vmatprep.subr.mxu0 0.0
    %1262 = vmatpush1.msra.mxu0 0.0
    %1263 = vmatprep.subr.mxu0 0.0
    %1264 = vmatpush1.msra.mxu0 0.0
    %1265 = vmatprep.subr.mxu0 0.0
    %1266 = vmatpush1.msra.mxu0 0.0
    %1267 = vmatprep.subr.mxu0 0.0
    %1268 = vmatpush1.msra.mxu0 0.0
    %1269 = vmatprep.subr.mxu0 0.0
    %1270 = vmatpush1.msra.mxu0 0.0
    %1271 = vmatprep.subr.mxu0 0.0
    %1272 = vmatpush1.msra.mxu0 0.0
    %1273 = vmatprep.subr.mxu0 0.0
    %1274 = vmatpush1.msra.mxu0 0.0
    %1275 = vmatprep.subr.mxu0 0.0
    %1276 = vmatpush1.msra.mxu0 0.0
    %1277 = vmatprep.subr.mxu0 0.0
    %1278 = vmatpush1.msra.mxu0 0.0
    %1279 = vmatprep.subr.mxu0 0.0
    %1280 = vmatpush1.msra.mxu0 0.0
    %1281 = vmatprep.subr.mxu0 0.0
    %1282 = vmatpush1.msra.mxu0 0.0
    %1283 = vmatprep.subr.mxu0 0.0
    %1284 = vmatpush1.msra.mxu0 0.0
    %1285 = vmatprep.subr.mxu0 0.0
    %1286 = vmatpush1.msra.mxu0 0.0
    %1287 = vmatprep.subr.mxu0 0.0
    %1288 = vmatpush1.msra.mxu0 0.0
    %1289 = vmatprep.mubr.f32.mxu0 0.0
    %1290 = vmatmul.mubr.f32.gmra.mrb[0].mxu0 %v1172
    %v1291 = vpop.f32.mrb[0].mxu0
    %v1292 = vadd.f32 %v1224, %v1291
    %v1293 = vpop.f32.mrb[0].mxu0
    %1294 = vmatprep.mubr.f32.mxu0 0.0
    %1295 = vmatmul.mubr.f32.gmra.mrb[0].mxu0 %v1173
    %v1296 = vpop.f32.mrb[0].mxu0
    %v1297 = vadd.f32 %v1224, %v1296
    %v1298 = vpop.f32.mrb[0].mxu0
    %1299 = vmatprep.mubr.f32.mxu0 0.0
    %1300 = vmatmul.mubr.f32.gmra.mrb[0].mxu0 %v1174
    %v1301 = vpop.f32.mrb[0].mxu0
    %v1302 = vadd.f32 %v1224, %v1301
    %v1303 = vpop.f32.mrb[0].mxu0
    %1304 = vmatprep.mubr.f32.mxu0 0.0
    %1305 = vmatmul.mubr.f32.gmra.mrb[0].mxu0 %v1175
    %v1306 = vpop.f32.mrb[0].mxu0
    %v1307 = vadd.f32 %v1224, %v1306
    %v1308 = vpop.f32.mrb[0].mxu0
    %1309 = vmatprep.mubr.f32.mxu0 0.0
    %1310 = vmatmul.mubr.f32.gmra.mrb[0].mxu0 %v1176
    %v1311 = vpop.f32.mrb[0].mxu0
    %v1312 = vadd.f32 %v1224, %v1311
    %v1313 = vpop.f32.mrb[0].mxu0
    %1314 = vmatprep.mubr.f32.mxu0 0.0
    %1315 = vmatmul.mubr.f32.gmra.mrb[0].mxu0 %v1177
    %v1316 = vpop.f32.mrb[0].mxu0
    %v1317 = vadd.f32 %v1224, %v1316
    %v1318 = vpop.f32.mrb[0].mxu0
    %1319 = vmatprep.mubr.f32.mxu0 0.0
    %1320 = vmatmul.mubr.f32.gmra.mrb[0].mxu0 %v1178
    %v1321 = vpop.f32.mrb[0].mxu0
    %v1322 = vadd.f32 %v1224, %v1321
    %v1323 = vpop.f32.mrb[0].mxu0
    %1324 = vmatprep.mubr.f32.mxu0 0.0
    %1325 = vmatmul.mubr.f32.gmra.mrb[0].mxu0 %v1179
    %v1326 = vpop.f32.mrb[0].mxu0
    %v1327 = vadd.f32 %v1224, %v1326
    %v1328 = vpop.f32.mrb[0].mxu0
    %1329 = vmatprep.mubr.f32.mxu0 0.0
    %1330 = vmatmul.mubr.f32.gmra.mrb[0].mxu0 %v1180
    %v1331 = vpop.f32.mrb[0].mxu0
    %v1332 = vadd.f32 %v1224, %v1331
    %v1333 = vpop.f32.mrb[0].mxu0
    %1334 = vmatprep.mubr.f32.mxu0 0.0
    %1335 = vmatmul.mubr.f32.gmra.mrb[0].mxu0 %v1181
    %v1336 = vpop.f32.mrb[0].mxu0
    %v1337 = vadd.f32 %v1224, %v1336
    %v1338 = vpop.f32.mrb[0].mxu0
    %1339 = vmatprep.mubr.f32.mxu0 0.0
    %1340 = vmatmul.mubr.f32.gmra.mrb[0].mxu0 %v1182
    %v1341 = vpop.f32.mrb[0].mxu0
    %v1342 = vadd.f32 %v1224, %v1341
    %v1343 = vpop.f32.mrb[0].mxu0
    %1344 = vmatprep.mubr.f32.mxu0 0.0
    %1345 = vmatmul.mubr.f32.gmra.mrb[0].mxu0 %v1183
    %v1346 = vpop.f32.mrb[0].mxu0
    %v1347 = vadd.f32 %v1224, %v1346
    %v1348 = vpop.f32.mrb[0].mxu0
    %1349 = vmatprep.mubr.f32.mxu0 0.0
    %1350 = vmatmul.mubr.f32.gmra.mrb[0].mxu0 %v1184
    %v1351 = vpop.f32.mrb[0].mxu0
    %v1352 = vadd.f32 %v1224, %v1351
    %v1353 = vpop.f32.mrb[0].mxu0
    %1354 = vmatprep.mubr.f32.mxu0 0.0
    %1355 = vmatmul.mubr.f32.gmra.mrb[0].mxu0 %v1185
    %v1356 = vpop.f32.mrb[0].mxu0
    %v1357 = vadd.f32 %v1224, %v1356
    %v1358 = vpop.f32.mrb[0].mxu0
    %1359 = vmatprep.mubr.f32.mxu0 0.0
    %1360 = vmatmul.mubr.f32.gmra.mrb[0].mxu0 %v1186
    %v1361 = vpop.f32.mrb[0].mxu0
    %v1362 = vadd.f32 %v1224, %v1361
    %v1363 = vpop.f32.mrb[0].mxu0
    %1364 = vmatprep.mubr.f32.mxu0 0.0
    %1365 = vmatmul.mubr.f32.gmra.mrb[0].mxu0 %v1187
    %v1366 = vpop.f32.mrb[0].mxu0
    %v1367 = vadd.f32 %v1224, %v1366
    %v1368 = vpop.f32.mrb[0].mxu0
    %1369 = vmatprep.mubr.f32.mxu0 0.0
    %1370 = vmatmul.mubr.f32.gmra.mrb[0].mxu0 %v1188
    %v1371 = vpop.f32.mrb[0].mxu0
    %v1372 = vadd.f32 %v1224, %v1371
    %v1373 = vpop.f32.mrb[0].mxu0
    %1374 = vmatprep.mubr.f32.mxu0 0.0
    %1375 = vmatmul.mubr.f32.gmra.mrb[0].mxu0 %v1189
    %v1376 = vpop.f32.mrb[0].mxu0
    %v1377 = vadd.f32 %v1224, %v1376
    %v1378 = vpop.f32.mrb[0].mxu0
    %1379 = vmatprep.mubr.f32.mxu0 0.0
    %1380 = vmatmul.mubr.f32.gmra.mrb[0].mxu0 %v1190
    %v1381 = vpop.f32.mrb[0].mxu0
    %v1382 = vadd.f32 %v1224, %v1381
    %v1383 = vpop.f32.mrb[0].mxu0
    %1384 = vmatprep.mubr.f32.mxu0 0.0
    %1385 = vmatmul.mubr.f32.gmra.mrb[0].mxu0 %v1191
    %v1386 = vpop.f32.mrb[0].mxu0
    %v1387 = vadd.f32 %v1224, %v1386
    %v1388 = vpop.f32.mrb[0].mxu0
    %1389 = vmatprep.mubr.f32.mxu0 0.0
    %1390 = vmatmul.mubr.f32.gmra.mrb[0].mxu0 %v1192
    %v1391 = vpop.f32.mrb[0].mxu0
    %v1392 = vadd.f32 %v1224, %v1391
    %v1393 = vpop.f32.mrb[0].mxu0
    %1394 = vmatprep.mubr.f32.mxu0 0.0
    %1395 = vmatmul.mubr.f32.gmra.mrb[0].mxu0 %v1193
    %v1396 = vpop.f32.mrb[0].mxu0
    %v1397 = vadd.f32 %v1224, %v1396
    %v1398 = vpop.f32.mrb[0].mxu0
    %1399 = vmatprep.mubr.f32.mxu0 0.0
    %1400 = vmatmul.mubr.f32.gmra.mrb[0].mxu0 %v1194
    %v1401 = vpop.f32.mrb[0].mxu0
    %v1402 = vadd.f32 %v1224, %v1401
    %v1403 = vpop.f32.mrb[0].mxu0
    %1404 = vmatprep.mubr.f32.mxu0 0.0
    %1405 = vmatmul.mubr.f32.gmra.mrb[0].mxu0 %v1195
    %v1406 = vpop.f32.mrb[0].mxu0
    %v1407 = vadd.f32 %v1224, %v1406
    %v1408 = vpop.f32.mrb[0].mxu0
    %1409 = vmatprep.mubr.f32.mxu0 0.0
    %1410 = vmatmul.mubr.f32.gmra.mrb[0].mxu0 %v1196
    %v1411 = vpop.f32.mrb[0].mxu0
    %v1412 = vadd.f32 %v1224, %v1411
    %v1413 = vpop.f32.mrb[0].mxu0
    %1414 = vmatprep.mubr.f32.mxu0 0.0
    %1415 = vmatmul.mubr.f32.gmra.mrb[0].mxu0 %v1197
    %v1416 = vpop.f32.mrb[0].mxu0
    %v1417 = vadd.f32 %v1224, %v1416
    %v1418 = vpop.f32.mrb[0].mxu0
    %1419 = vmatprep.mubr.f32.mxu0 0.0
    %1420 = vmatmul.mubr.f32.gmra.mrb[0].mxu0 %v1198
    %v1421 = vpop.f32.mrb[0].mxu0
    %v1422 = vadd.f32 %v1224, %v1421
    %v1423 = vpop.f32.mrb[0].mxu0
    %1424 = vmatprep.mubr.f32.mxu0 0.0
    %1425 = vmatmul.mubr.f32.gmra.mrb[0].mxu0 %v1199
    %v1426 = vpop.f32.mrb[0].mxu0
    %v1427 = vadd.f32 %v1224, %v1426
    %v1428 = vpop.f32.mrb[0].mxu0
    %1429 = vmatprep.mubr.f32.mxu0 0.0
    %1430 = vmatmul.mubr.f32.gmra.mrb[0].mxu0 %v1200
    %v1431 = vpop.f32.mrb[0].mxu0
    %v1432 = vadd.f32 %v1224, %v1431
    %v1433 = vpop.f32.mrb[0].mxu0
    %1434 = vmatprep.mubr.f32.mxu0 0.0
    %1435 = vmatmul.mubr.f32.gmra.mrb[0].mxu0 %v1201
    %v1436 = vpop.f32.mrb[0].mxu0
    %v1437 = vadd.f32 %v1224, %v1436
    %v1438 = vpop.f32.mrb[0].mxu0
    %1439 = vmatprep.mubr.f32.mxu0 0.0
    %1440 = vmatmul.mubr.f32.gmra.mrb[0].mxu0 %v1202
    %v1441 = vpop.f32.mrb[0].mxu0
    %v1442 = vadd.f32 %v1224, %v1441
    %v1443 = vpop.f32.mrb[0].mxu0
    %1444 = vmatprep.mubr.f32.mxu0 0.0
    %1445 = vmatmul.mubr.f32.gmra.mrb[0].mxu0 %v1203
    %v1446 = vpop.f32.mrb[0].mxu0
    %v1447 = vadd.f32 %v1224, %v1446
    %v1448 = vpop.f32.mrb[0].mxu0
    %1449 = vdwg.mxu0
    %v1450 = vadd.f32 %v1292, %v1172
    %v1451 = vadd.f32 %v1297, %v1173
    %v1452 = vadd.f32 %v1302, %v1174
    %v1453 = vadd.f32 %v1307, %v1175
    %v1454 = vadd.f32 %v1312, %v1176
    %v1455 = vadd.f32 %v1317, %v1177
    %v1456 = vadd.f32 %v1322, %v1178
    %v1457 = vadd.f32 %v1327, %v1179
    %v1458 = vadd.f32 %v1332, %v1180
    %v1459 = vadd.f32 %v1337, %v1181
    %v1460 = vadd.f32 %v1342, %v1182
    %v1461 = vadd.f32 %v1347, %v1183
    %v1462 = vadd.f32 %v1352, %v1184
    %v1463 = vadd.f32 %v1357, %v1185
    %v1464 = vadd.f32 %v1362, %v1186
    %v1465 = vadd.f32 %v1367, %v1187
    %v1466 = vadd.f32 %v1372, %v1188
    %v1467 = vadd.f32 %v1377, %v1189
    %v1468 = vadd.f32 %v1382, %v1190
    %v1469 = vadd.f32 %v1387, %v1191
    %v1470 = vadd.f32 %v1392, %v1192
    %v1471 = vadd.f32 %v1397, %v1193
    %v1472 = vadd.f32 %v1402, %v1194
    %v1473 = vadd.f32 %v1407, %v1195
    %v1474 = vadd.f32 %v1412, %v1196
    %v1475 = vadd.f32 %v1417, %v1197
    %v1476 = vadd.f32 %v1422, %v1198
    %v1477 = vadd.f32 %v1427, %v1199
    %v1478 = vadd.f32 %v1432, %v1200
    %v1479 = vadd.f32 %v1437, %v1201
    %v1480 = vadd.f32 %v1442, %v1202
    %v1481 = vadd.f32 %v1447, %v1203
    %vm1482 = vcmp.gt.f32.partialorder %v1450, 0.0
    %vm1483 = vcmp.gt.f32.partialorder %v1451, 0.0
    %vm1484 = vcmp.gt.f32.partialorder %v1452, 0.0
    %vm1485 = vcmp.gt.f32.partialorder %v1453, 0.0
    %vm1486 = vcmp.gt.f32.partialorder %v1454, 0.0
    %vm1487 = vcmp.gt.f32.partialorder %v1455, 0.0
    %vm1488 = vcmp.gt.f32.partialorder %v1456, 0.0
    %vm1489 = vcmp.gt.f32.partialorder %v1457, 0.0
    %vm1490 = vcmp.gt.f32.partialorder %v1458, 0.0
    %vm1491 = vcmp.gt.f32.partialorder %v1459, 0.0
    %vm1492 = vcmp.gt.f32.partialorder %v1460, 0.0
    %vm1493 = vcmp.gt.f32.partialorder %v1461, 0.0
    %vm1494 = vcmp.gt.f32.partialorder %v1462, 0.0
    %vm1495 = vcmp.gt.f32.partialorder %v1463, 0.0
    %vm1496 = vcmp.gt.f32.partialorder %v1464, 0.0
    %vm1497 = vcmp.gt.f32.partialorder %v1465, 0.0
    %vm1498 = vcmp.gt.f32.partialorder %v1466, 0.0
    %vm1499 = vcmp.gt.f32.partialorder %v1467, 0.0
    %vm1500 = vcmp.gt.f32.partialorder %v1468, 0.0
    %vm1501 = vcmp.gt.f32.partialorder %v1469, 0.0
    %vm1502 = vcmp.gt.f32.partialorder %v1470, 0.0
    %vm1503 = vcmp.gt.f32.partialorder %v1471, 0.0
    %vm1504 = vcmp.gt.f32.partialorder %v1472, 0.0
    %vm1505 = vcmp.gt.f32.partialorder %v1473, 0.0
    %vm1506 = vcmp.gt.f32.partialorder %v1474, 0.0
    %vm1507 = vcmp.gt.f32.partialorder %v1475, 0.0
    %vm1508 = vcmp.gt.f32.partialorder %v1476, 0.0
    %vm1509 = vcmp.gt.f32.partialorder %v1477, 0.0
    %vm1510 = vcmp.gt.f32.partialorder %v1478, 0.0
    %vm1511 = vcmp.gt.f32.partialorder %v1479, 0.0
    %vm1512 = vcmp.gt.f32.partialorder %v1480, 0.0
    %vm1513 = vcmp.gt.f32.partialorder %v1481, 0.0
    %v1514 = vmul.f32 %v1450, 0.1
    %v1515 = vmul.f32 %v1451, 0.1
    %v1516 = vmul.f32 %v1452, 0.1
    %v1517 = vmul.f32 %v1453, 0.1
    %v1518 = vmul.f32 %v1454, 0.1
    %v1519 = vmul.f32 %v1455, 0.1
    %v1520 = vmul.f32 %v1456, 0.1
    %v1521 = vmul.f32 %v1457, 0.1
    %v1522 = vmul.f32 %v1458, 0.1
    %v1523 = vmul.f32 %v1459, 0.1
    %v1524 = vmul.f32 %v1460, 0.1
    %v1525 = vmul.f32 %v1461, 0.1
    %v1526 = vmul.f32 %v1462, 0.1
    %v1527 = vmul.f32 %v1463, 0.1
    %v1528 = vmul.f32 %v1464, 0.1
    %v1529 = vmul.f32 %v1465, 0.1
    %v1530 = vmul.f32 %v1466, 0.1
    %v1531 = vmul.f32 %v1467, 0.1
    %v1532 = vmul.f32 %v1468, 0.1
    %v1533 = vmul.f32 %v1469, 0.1
    %v1534 = vmul.f32 %v1470, 0.1
    %v1535 = vmul.f32 %v1471, 0.1
    %v1536 = vmul.f32 %v1472, 0.1
    %v1537 = vmul.f32 %v1473, 0.1
    %v1538 = vmul.f32 %v1474, 0.1
    %v1539 = vmul.f32 %v1475, 0.1
    %v1540 = vmul.f32 %v1476, 0.1
    %v1541 = vmul.f32 %v1477, 0.1
    %v1542 = vmul.f32 %v1478, 0.1
    %v1543 = vmul.f32 %v1479, 0.1
    %v1544 = vmul.f32 %v1480, 0.1
    %v1545 = vmul.f32 %v1481, 0.1
    %v1546 = vsel %vm1482, %v1450, %v1514
    %v1547 = vsel %vm1483, %v1451, %v1515
    %v1548 = vsel %vm1484, %v1452, %v1516
    %v1549 = vsel %vm1485, %v1453, %v1517
    %v1550 = vsel %vm1486, %v1454, %v1518
    %v1551 = vsel %vm1487, %v1455, %v1519
    %v1552 = vsel %vm1488, %v1456, %v1520
    %v1553 = vsel %vm1489, %v1457, %v1521
    %v1554 = vsel %vm1490, %v1458, %v1522
    %v1555 = vsel %vm1491, %v1459, %v1523
    %v1556 = vsel %vm1492, %v1460, %v1524
    %v1557 = vsel %vm1493, %v1461, %v1525
    %v1558 = vsel %vm1494, %v1462, %v1526
    %v1559 = vsel %vm1495, %v1463, %v1527
    %v1560 = vsel %vm1496, %v1464, %v1528
    %v1561 = vsel %vm1497, %v1465, %v1529
    %v1562 = vsel %vm1498, %v1466, %v1530
    %v1563 = vsel %vm1499, %v1467, %v1531
    %v1564 = vsel %vm1500, %v1468, %v1532
    %v1565 = vsel %vm1501, %v1469, %v1533
    %v1566 = vsel %vm1502, %v1470, %v1534
    %v1567 = vsel %vm1503, %v1471, %v1535
    %v1568 = vsel %vm1504, %v1472, %v1536
    %v1569 = vsel %vm1505, %v1473, %v1537
    %v1570 = vsel %vm1506, %v1474, %v1538
    %v1571 = vsel %vm1507, %v1475, %v1539
    %v1572 = vsel %vm1508, %v1476, %v1540
    %v1573 = vsel %vm1509, %v1477, %v1541
    %v1574 = vsel %vm1510, %v1478, %v1542
    %v1575 = vsel %vm1511, %v1479, %v1543
    %v1576 = vsel %vm1512, %v1480, %v1544
    %v1577 = vsel %vm1513, %v1481, %v1545
    %v1578 = vld [vmem:[#allocation2 + $0x20] sm:$0xff]
    %v1579 = vld [vmem:[#allocation2 + $0x48] sm:$0xff]
    %v1580 = vld [vmem:[#allocation2 + $0x70] sm:$0xff]
    %v1581 = vld [vmem:[#allocation2 + $0x98] sm:$0xff]
    %v1582 = vld [vmem:[#allocation2 + $0xc0] sm:$0xff]
    %v1583 = vld [vmem:[#allocation2 + $0xe8] sm:$0xff]
    %v1584 = vld [vmem:[#allocation2 + $0x110] sm:$0xff]
    %v1585 = vld [vmem:[#allocation2 + $0x138] sm:$0xff]
    %v1586 = vld [vmem:[#allocation2 + $0x160] sm:$0xff]
    %v1587 = vld [vmem:[#allocation2 + $0x188] sm:$0xff]
    %v1588 = vld [vmem:[#allocation2 + $0x1b0] sm:$0xff]
    %v1589 = vld [vmem:[#allocation2 + $0x1d8] sm:$0xff]
    %v1590 = vld [vmem:[#allocation2 + $0x200] sm:$0xff]
    %v1591 = vld [vmem:[#allocation2 + $0x228] sm:$0xff]
    %v1592 = vld [vmem:[#allocation2 + $0x250] sm:$0xff]
    %v1593 = vld [vmem:[#allocation2 + $0x278] sm:$0xff]
    %v1594 = vld [vmem:[%s2 + $0x8] sm:$0x1]
    %v1595 = vlaneseq
    %v1596 = vshrl.u32 %v1595, 7
    %v1597 = vsub.s32 0, %v1596
    %v1598 = vrot.slane %v1594, %v1597
    %1599 = vmatprep.subr.mxu0 0.0
    %1600 = vmatpush1.msra.mxu0 %v1578
    %1601 = vmatprep.subr.mxu0 0.0
    %1602 = vmatpush1.msra.mxu0 %v1579
    %1603 = vmatprep.subr.mxu0 0.0
    %1604 = vmatpush1.msra.mxu0 %v1580
    %1605 = vmatprep.subr.mxu0 0.0
    %1606 = vmatpush1.msra.mxu0 %v1581
    %1607 = vmatprep.subr.mxu0 0.0
    %1608 = vmatpush1.msra.mxu0 %v1582
    %1609 = vmatprep.subr.mxu0 0.0
    %1610 = vmatpush1.msra.mxu0 %v1583
    %1611 = vmatprep.subr.mxu0 0.0
    %1612 = vmatpush1.msra.mxu0 %v1584
    %1613 = vmatprep.subr.mxu0 0.0
    %1614 = vmatpush1.msra.mxu0 %v1585
    %1615 = vmatprep.subr.mxu0 0.0
    %1616 = vmatpush1.msra.mxu0 %v1586
    %1617 = vmatprep.subr.mxu0 0.0
    %1618 = vmatpush1.msra.mxu0 %v1587
    %1619 = vmatprep.subr.mxu0 0.0
    %1620 = vmatpush1.msra.mxu0 %v1588
    %1621 = vmatprep.subr.mxu0 0.0
    %1622 = vmatpush1.msra.mxu0 %v1589
    %1623 = vmatprep.subr.mxu0 0.0
    %1624 = vmatpush1.msra.mxu0 %v1590
    %1625 = vmatprep.subr.mxu0 0.0
    %1626 = vmatpush1.msra.mxu0 %v1591
    %1627 = vmatprep.subr.mxu0 0.0
    %1628 = vmatpush1.msra.mxu0 %v1592
    %1629 = vmatprep.subr.mxu0 0.0
    %1630 = vmatpush1.msra.mxu0 %v1593
    %1631 = vmatprep.subr.mxu0 0.0
    %1632 = vmatpush1.msra.mxu0 0.0
    %1633 = vmatprep.subr.mxu0 0.0
    %1634 = vmatpush1.msra.mxu0 0.0
    %1635 = vmatprep.subr.mxu0 0.0
    %1636 = vmatpush1.msra.mxu0 0.0
    %1637 = vmatprep.subr.mxu0 0.0
    %1638 = vmatpush1.msra.mxu0 0.0
    %1639 = vmatprep.subr.mxu0 0.0
    %1640 = vmatpush1.msra.mxu0 0.0
    %1641 = vmatprep.subr.mxu0 0.0
    %1642 = vmatpush1.msra.mxu0 0.0
    %1643 = vmatprep.subr.mxu0 0.0
    %1644 = vmatpush1.msra.mxu0 0.0
    %1645 = vmatprep.subr.mxu0 0.0
    %1646 = vmatpush1.msra.mxu0 0.0
    %1647 = vmatprep.subr.mxu0 0.0
    %1648 = vmatpush1.msra.mxu0 0.0
    %1649 = vmatprep.subr.mxu0 0.0
    %1650 = vmatpush1.msra.mxu0 0.0
    %1651 = vmatprep.subr.mxu0 0.0
    %1652 = vmatpush1.msra.mxu0 0.0
    %1653 = vmatprep.subr.mxu0 0.0
    %1654 = vmatpush1.msra.mxu0 0.0
    %1655 = vmatprep.subr.mxu0 0.0
    %1656 = vmatpush1.msra.mxu0 0.0
    %1657 = vmatprep.subr.mxu0 0.0
    %1658 = vmatpush1.msra.mxu0 0.0
    %1659 = vmatprep.subr.mxu0 0.0
    %1660 = vmatpush1.msra.mxu0 0.0
    %1661 = vmatprep.subr.mxu0 0.0
    %1662 = vmatpush1.msra.mxu0 0.0
    %1663 = vmatprep.mubr.f32.mxu0 0.0
    %1664 = vmatmul.mubr.f32.gmra.mrb[0].mxu0 %v1546
    %v1665 = vpop.f32.mrb[0].mxu0
    %v1666 = vadd.f32 %v1598, %v1665
    %v1667 = vpop.f32.mrb[0].mxu0
    %1668 = vmatprep.mubr.f32.mxu0 0.0
    %1669 = vmatmul.mubr.f32.gmra.mrb[0].mxu0 %v1547
    %v1670 = vpop.f32.mrb[0].mxu0
    %v1671 = vadd.f32 %v1598, %v1670
    %v1672 = vpop.f32.mrb[0].mxu0
    %1673 = vmatprep.mubr.f32.mxu0 0.0
    %1674 = vmatmul.mubr.f32.gmra.mrb[0].mxu0 %v1548
    %v1675 = vpop.f32.mrb[0].mxu0
    %v1676 = vadd.f32 %v1598, %v1675
    %v1677 = vpop.f32.mrb[0].mxu0
    %1678 = vmatprep.mubr.f32.mxu0 0.0
    %1679 = vmatmul.mubr.f32.gmra.mrb[0].mxu0 %v1549
    %v1680 = vpop.f32.mrb[0].mxu0
    %v1681 = vadd.f32 %v1598, %v1680
    %v1682 = vpop.f32.mrb[0].mxu0
    %1683 = vmatprep.mubr.f32.mxu0 0.0
    %1684 = vmatmul.mubr.f32.gmra.mrb[0].mxu0 %v1550
    %v1685 = vpop.f32.mrb[0].mxu0
    %v1686 = vadd.f32 %v1598, %v1685
    %v1687 = vpop.f32.mrb[0].mxu0
    %1688 = vmatprep.mubr.f32.mxu0 0.0
    %1689 = vmatmul.mubr.f32.gmra.mrb[0].mxu0 %v1551
    %v1690 = vpop.f32.mrb[0].mxu0
    %v1691 = vadd.f32 %v1598, %v1690
    %v1692 = vpop.f32.mrb[0].mxu0
    %1693 = vmatprep.mubr.f32.mxu0 0.0
    %1694 = vmatmul.mubr.f32.gmra.mrb[0].mxu0 %v1552
    %v1695 = vpop.f32.mrb[0].mxu0
    %v1696 = vadd.f32 %v1598, %v1695
    %v1697 = vpop.f32.mrb[0].mxu0
    %1698 = vmatprep.mubr.f32.mxu0 0.0
    %1699 = vmatmul.mubr.f32.gmra.mrb[0].mxu0 %v1553
    %v1700 = vpop.f32.mrb[0].mxu0
    %v1701 = vadd.f32 %v1598, %v1700
    %v1702 = vpop.f32.mrb[0].mxu0
    %1703 = vmatprep.mubr.f32.mxu0 0.0
    %1704 = vmatmul.mubr.f32.gmra.mrb[0].mxu0 %v1554
    %v1705 = vpop.f32.mrb[0].mxu0
    %v1706 = vadd.f32 %v1598, %v1705
    %v1707 = vpop.f32.mrb[0].mxu0
    %1708 = vmatprep.mubr.f32.mxu0 0.0
    %1709 = vmatmul.mubr.f32.gmra.mrb[0].mxu0 %v1555
    %v1710 = vpop.f32.mrb[0].mxu0
    %v1711 = vadd.f32 %v1598, %v1710
    %v1712 = vpop.f32.mrb[0].mxu0
    %1713 = vmatprep.mubr.f32.mxu0 0.0
    %1714 = vmatmul.mubr.f32.gmra.mrb[0].mxu0 %v1556
    %v1715 = vpop.f32.mrb[0].mxu0
    %v1716 = vadd.f32 %v1598, %v1715
    %v1717 = vpop.f32.mrb[0].mxu0
    %1718 = vmatprep.mubr.f32.mxu0 0.0
    %1719 = vmatmul.mubr.f32.gmra.mrb[0].mxu0 %v1557
    %v1720 = vpop.f32.mrb[0].mxu0
    %v1721 = vadd.f32 %v1598, %v1720
    %v1722 = vpop.f32.mrb[0].mxu0
    %1723 = vmatprep.mubr.f32.mxu0 0.0
    %1724 = vmatmul.mubr.f32.gmra.mrb[0].mxu0 %v1558
    %v1725 = vpop.f32.mrb[0].mxu0
    %v1726 = vadd.f32 %v1598, %v1725
    %v1727 = vpop.f32.mrb[0].mxu0
    %1728 = vmatprep.mubr.f32.mxu0 0.0
    %1729 = vmatmul.mubr.f32.gmra.mrb[0].mxu0 %v1559
    %v1730 = vpop.f32.mrb[0].mxu0
    %v1731 = vadd.f32 %v1598, %v1730
    %v1732 = vpop.f32.mrb[0].mxu0
    %1733 = vmatprep.mubr.f32.mxu0 0.0
    %1734 = vmatmul.mubr.f32.gmra.mrb[0].mxu0 %v1560
    %v1735 = vpop.f32.mrb[0].mxu0
    %v1736 = vadd.f32 %v1598, %v1735
    %v1737 = vpop.f32.mrb[0].mxu0
    %1738 = vmatprep.mubr.f32.mxu0 0.0
    %1739 = vmatmul.mubr.f32.gmra.mrb[0].mxu0 %v1561
    %v1740 = vpop.f32.mrb[0].mxu0
    %v1741 = vadd.f32 %v1598, %v1740
    %v1742 = vpop.f32.mrb[0].mxu0
    %1743 = vmatprep.mubr.f32.mxu0 0.0
    %1744 = vmatmul.mubr.f32.gmra.mrb[0].mxu0 %v1562
    %v1745 = vpop.f32.mrb[0].mxu0
    %v1746 = vadd.f32 %v1598, %v1745
    %v1747 = vpop.f32.mrb[0].mxu0
    %1748 = vmatprep.mubr.f32.mxu0 0.0
    %1749 = vmatmul.mubr.f32.gmra.mrb[0].mxu0 %v1563
    %v1750 = vpop.f32.mrb[0].mxu0
    %v1751 = vadd.f32 %v1598, %v1750
    %v1752 = vpop.f32.mrb[0].mxu0
    %1753 = vmatprep.mubr.f32.mxu0 0.0
    %1754 = vmatmul.mubr.f32.gmra.mrb[0].mxu0 %v1564
    %v1755 = vpop.f32.mrb[0].mxu0
    %v1756 = vadd.f32 %v1598, %v1755
    %v1757 = vpop.f32.mrb[0].mxu0
    %1758 = vmatprep.mubr.f32.mxu0 0.0
    %1759 = vmatmul.mubr.f32.gmra.mrb[0].mxu0 %v1565
    %v1760 = vpop.f32.mrb[0].mxu0
    %v1761 = vadd.f32 %v1598, %v1760
    %v1762 = vpop.f32.mrb[0].mxu0
    %1763 = vmatprep.mubr.f32.mxu0 0.0
    %1764 = vmatmul.mubr.f32.gmra.mrb[0].mxu0 %v1566
    %v1765 = vpop.f32.mrb[0].mxu0
    %v1766 = vadd.f32 %v1598, %v1765
    %v1767 = vpop.f32.mrb[0].mxu0
    %1768 = vmatprep.mubr.f32.mxu0 0.0
    %1769 = vmatmul.mubr.f32.gmra.mrb[0].mxu0 %v1567
    %v1770 = vpop.f32.mrb[0].mxu0
    %v1771 = vadd.f32 %v1598, %v1770
    %v1772 = vpop.f32.mrb[0].mxu0
    %1773 = vmatprep.mubr.f32.mxu0 0.0
    %1774 = vmatmul.mubr.f32.gmra.mrb[0].mxu0 %v1568
    %v1775 = vpop.f32.mrb[0].mxu0
    %v1776 = vadd.f32 %v1598, %v1775
    %v1777 = vpop.f32.mrb[0].mxu0
    %1778 = vmatprep.mubr.f32.mxu0 0.0
    %1779 = vmatmul.mubr.f32.gmra.mrb[0].mxu0 %v1569
    %v1780 = vpop.f32.mrb[0].mxu0
    %v1781 = vadd.f32 %v1598, %v1780
    %v1782 = vpop.f32.mrb[0].mxu0
    %1783 = vmatprep.mubr.f32.mxu0 0.0
    %1784 = vmatmul.mubr.f32.gmra.mrb[0].mxu0 %v1570
    %v1785 = vpop.f32.mrb[0].mxu0
    %v1786 = vadd.f32 %v1598, %v1785
    %v1787 = vpop.f32.mrb[0].mxu0
    %1788 = vmatprep.mubr.f32.mxu0 0.0
    %1789 = vmatmul.mubr.f32.gmra.mrb[0].mxu0 %v1571
    %v1790 = vpop.f32.mrb[0].mxu0
    %v1791 = vadd.f32 %v1598, %v1790
    %v1792 = vpop.f32.mrb[0].mxu0
    %1793 = vmatprep.mubr.f32.mxu0 0.0
    %1794 = vmatmul.mubr.f32.gmra.mrb[0].mxu0 %v1572
    %v1795 = vpop.f32.mrb[0].mxu0
    %v1796 = vadd.f32 %v1598, %v1795
    %v1797 = vpop.f32.mrb[0].mxu0
    %1798 = vmatprep.mubr.f32.mxu0 0.0
    %1799 = vmatmul.mubr.f32.gmra.mrb[0].mxu0 %v1573
    %v1800 = vpop.f32.mrb[0].mxu0
    %v1801 = vadd.f32 %v1598, %v1800
    %v1802 = vpop.f32.mrb[0].mxu0
    %1803 = vmatprep.mubr.f32.mxu0 0.0
    %1804 = vmatmul.mubr.f32.gmra.mrb[0].mxu0 %v1574
    %v1805 = vpop.f32.mrb[0].mxu0
    %v1806 = vadd.f32 %v1598, %v1805
    %v1807 = vpop.f32.mrb[0].mxu0
    %1808 = vmatprep.mubr.f32.mxu0 0.0
    %1809 = vmatmul.mubr.f32.gmra.mrb[0].mxu0 %v1575
    %v1810 = vpop.f32.mrb[0].mxu0
    %v1811 = vadd.f32 %v1598, %v1810
    %v1812 = vpop.f32.mrb[0].mxu0
    %1813 = vmatprep.mubr.f32.mxu0 0.0
    %1814 = vmatmul.mubr.f32.gmra.mrb[0].mxu0 %v1576
    %v1815 = vpop.f32.mrb[0].mxu0
    %v1816 = vadd.f32 %v1598, %v1815
    %v1817 = vpop.f32.mrb[0].mxu0
    %1818 = vmatprep.mubr.f32.mxu0 0.0
    %1819 = vmatmul.mubr.f32.gmra.mrb[0].mxu0 %v1577
    %v1820 = vpop.f32.mrb[0].mxu0
    %v1821 = vadd.f32 %v1598, %v1820
    %v1822 = vpop.f32.mrb[0].mxu0
    %1823 = vdwg.mxu0
    %vm1824 = vcmp.gt.f32.partialorder %v1666, 0.0
    %vm1825 = vcmp.gt.f32.partialorder %v1671, 0.0
    %vm1826 = vcmp.gt.f32.partialorder %v1676, 0.0
    %vm1827 = vcmp.gt.f32.partialorder %v1681, 0.0
    %vm1828 = vcmp.gt.f32.partialorder %v1686, 0.0
    %vm1829 = vcmp.gt.f32.partialorder %v1691, 0.0
    %vm1830 = vcmp.gt.f32.partialorder %v1696, 0.0
    %vm1831 = vcmp.gt.f32.partialorder %v1701, 0.0
    %vm1832 = vcmp.gt.f32.partialorder %v1706, 0.0
    %vm1833 = vcmp.gt.f32.partialorder %v1711, 0.0
    %vm1834 = vcmp.gt.f32.partialorder %v1716, 0.0
    %vm1835 = vcmp.gt.f32.partialorder %v1721, 0.0
    %vm1836 = vcmp.gt.f32.partialorder %v1726, 0.0
    %vm1837 = vcmp.gt.f32.partialorder %v1731, 0.0
    %vm1838 = vcmp.gt.f32.partialorder %v1736, 0.0
    %vm1839 = vcmp.gt.f32.partialorder %v1741, 0.0
    %vm1840 = vcmp.gt.f32.partialorder %v1746, 0.0
    %vm1841 = vcmp.gt.f32.partialorder %v1751, 0.0
    %vm1842 = vcmp.gt.f32.partialorder %v1756, 0.0
    %vm1843 = vcmp.gt.f32.partialorder %v1761, 0.0
    %vm1844 = vcmp.gt.f32.partialorder %v1766, 0.0
    %vm1845 = vcmp.gt.f32.partialorder %v1771, 0.0
    %vm1846 = vcmp.gt.f32.partialorder %v1776, 0.0
    %vm1847 = vcmp.gt.f32.partialorder %v1781, 0.0
    %vm1848 = vcmp.gt.f32.partialorder %v1786, 0.0
    %vm1849 = vcmp.gt.f32.partialorder %v1791, 0.0
    %vm1850 = vcmp.gt.f32.partialorder %v1796, 0.0
    %vm1851 = vcmp.gt.f32.partialorder %v1801, 0.0
    %vm1852 = vcmp.gt.f32.partialorder %v1806, 0.0
    %vm1853 = vcmp.gt.f32.partialorder %v1811, 0.0
    %vm1854 = vcmp.gt.f32.partialorder %v1816, 0.0
    %vm1855 = vcmp.gt.f32.partialorder %v1821, 0.0
    %v1856 = vmul.f32 %v1666, 0.1
    %v1857 = vmul.f32 %v1671, 0.1
    %v1858 = vmul.f32 %v1676, 0.1
    %v1859 = vmul.f32 %v1681, 0.1
    %v1860 = vmul.f32 %v1686, 0.1
    %v1861 = vmul.f32 %v1691, 0.1
    %v1862 = vmul.f32 %v1696, 0.1
    %v1863 = vmul.f32 %v1701, 0.1
    %v1864 = vmul.f32 %v1706, 0.1
    %v1865 = vmul.f32 %v1711, 0.1
    %v1866 = vmul.f32 %v1716, 0.1
    %v1867 = vmul.f32 %v1721, 0.1
    %v1868 = vmul.f32 %v1726, 0.1
    %v1869 = vmul.f32 %v1731, 0.1
    %v1870 = vmul.f32 %v1736, 0.1
    %v1871 = vmul.f32 %v1741, 0.1
    %v1872 = vmul.f32 %v1746, 0.1
    %v1873 = vmul.f32 %v1751, 0.1
    %v1874 = vmul.f32 %v1756, 0.1
    %v1875 = vmul.f32 %v1761, 0.1
    %v1876 = vmul.f32 %v1766, 0.1
    %v1877 = vmul.f32 %v1771, 0.1
    %v1878 = vmul.f32 %v1776, 0.1
    %v1879 = vmul.f32 %v1781, 0.1
    %v1880 = vmul.f32 %v1786, 0.1
    %v1881 = vmul.f32 %v1791, 0.1
    %v1882 = vmul.f32 %v1796, 0.1
    %v1883 = vmul.f32 %v1801, 0.1
    %v1884 = vmul.f32 %v1806, 0.1
    %v1885 = vmul.f32 %v1811, 0.1
    %v1886 = vmul.f32 %v1816, 0.1
    %v1887 = vmul.f32 %v1821, 0.1
    %v1888 = vsel %vm1824, %v1666, %v1856
    %v1889 = vsel %vm1825, %v1671, %v1857
    %v1890 = vsel %vm1826, %v1676, %v1858
    %v1891 = vsel %vm1827, %v1681, %v1859
    %v1892 = vsel %vm1828, %v1686, %v1860
    %v1893 = vsel %vm1829, %v1691, %v1861
    %v1894 = vsel %vm1830, %v1696, %v1862
    %v1895 = vsel %vm1831, %v1701, %v1863
    %v1896 = vsel %vm1832, %v1706, %v1864
    %v1897 = vsel %vm1833, %v1711, %v1865
    %v1898 = vsel %vm1834, %v1716, %v1866
    %v1899 = vsel %vm1835, %v1721, %v1867
    %v1900 = vsel %vm1836, %v1726, %v1868
    %v1901 = vsel %vm1837, %v1731, %v1869
    %v1902 = vsel %vm1838, %v1736, %v1870
    %v1903 = vsel %vm1839, %v1741, %v1871
    %v1904 = vsel %vm1840, %v1746, %v1872
    %v1905 = vsel %vm1841, %v1751, %v1873
    %v1906 = vsel %vm1842, %v1756, %v1874
    %v1907 = vsel %vm1843, %v1761, %v1875
    %v1908 = vsel %vm1844, %v1766, %v1876
    %v1909 = vsel %vm1845, %v1771, %v1877
    %v1910 = vsel %vm1846, %v1776, %v1878
    %v1911 = vsel %vm1847, %v1781, %v1879
    %v1912 = vsel %vm1848, %v1786, %v1880
    %v1913 = vsel %vm1849, %v1791, %v1881
    %v1914 = vsel %vm1850, %v1796, %v1882
    %v1915 = vsel %vm1851, %v1801, %v1883
    %v1916 = vsel %vm1852, %v1806, %v1884
    %v1917 = vsel %vm1853, %v1811, %v1885
    %v1918 = vsel %vm1854, %v1816, %v1886
    %v1919 = vsel %vm1855, %v1821, %v1887
    %1921 = vset.pattern.permute.xlu0 0
    %1922 = vperm.xlu0 %1921, %v30
    %v1923 = vpop.permute.xlu0 %1922
    %v1926 = vunpack.c.l.s4 269488144
    %v1927 = vunpack.c.0.s8 %v1926
    %v1928 = vlaneseq
    %v1929 = vshrl.u32 %v1928, 7
    %v1930 = vsub.s32 %v1927, %v1929
    %v1931 = vrot.slane %v1923, %v1930
    %v1933 = vlaneseq
    %v1934 = vshrl.u32 %v1933, 7
    %v1935 = vsub.s32 0, %v1934
    %v1936 = vrot.slane %v1931, %v1935
    %1938 = vmatprep.subr.mxu0 0.0
    %1939 = vmatpush1.xpose.msra.mxu0 %v1888
    %1940 = vmatprep.subr.mxu0 0.0
    %1941 = vmatpush1.xpose.msra.mxu0 %v1889
    %1942 = vmatprep.subr.mxu0 0.0
    %1943 = vmatpush1.xpose.msra.mxu0 %v1890
    %1944 = vmatprep.subr.mxu0 0.0
    %1945 = vmatpush1.xpose.msra.mxu0 %v1891
    %1946 = vmatprep.subr.mxu0 0.0
    %1947 = vmatpush1.xpose.msra.mxu0 %v1892
    %1948 = vmatprep.subr.mxu0 0.0
    %1949 = vmatpush1.xpose.msra.mxu0 %v1893
    %1950 = vmatprep.subr.mxu0 0.0
    %1951 = vmatpush1.xpose.msra.mxu0 %v1894
    %1952 = vmatprep.subr.mxu0 0.0
    %1953 = vmatpush1.xpose.msra.mxu0 %v1895
    %1954 = vmatprep.subr.mxu0 0.0
    %1955 = vmatpush1.xpose.msra.mxu0 %v1896
    %1956 = vmatprep.subr.mxu0 0.0
    %1957 = vmatpush1.xpose.msra.mxu0 %v1897
    %1958 = vmatprep.subr.mxu0 0.0
    %1959 = vmatpush1.xpose.msra.mxu0 %v1898
    %1960 = vmatprep.subr.mxu0 0.0
    %1961 = vmatpush1.xpose.msra.mxu0 %v1899
    %1962 = vmatprep.subr.mxu0 0.0
    %1963 = vmatpush1.xpose.msra.mxu0 %v1900
    %1964 = vmatprep.subr.mxu0 0.0
    %1965 = vmatpush1.xpose.msra.mxu0 %v1901
    %1966 = vmatprep.subr.mxu0 0.0
    %1967 = vmatpush1.xpose.msra.mxu0 %v1902
    %1968 = vmatprep.subr.mxu0 0.0
    %1969 = vmatpush1.xpose.msra.mxu0 %v1903
    %1970 = vmatprep.subr.mxu0 0.0
    %1971 = vmatpush1.xpose.msra.mxu0 %v1904
    %1972 = vmatprep.subr.mxu0 0.0
    %1973 = vmatpush1.xpose.msra.mxu0 %v1905
    %1974 = vmatprep.subr.mxu0 0.0
    %1975 = vmatpush1.xpose.msra.mxu0 %v1906
    %1976 = vmatprep.subr.mxu0 0.0
    %1977 = vmatpush1.xpose.msra.mxu0 %v1907
    %1978 = vmatprep.subr.mxu0 0.0
    %1979 = vmatpush1.xpose.msra.mxu0 %v1908
    %1980 = vmatprep.subr.mxu0 0.0
    %1981 = vmatpush1.xpose.msra.mxu0 %v1909
    %1982 = vmatprep.subr.mxu0 0.0
    %1983 = vmatpush1.xpose.msra.mxu0 %v1910
    %1984 = vmatprep.subr.mxu0 0.0
    %1985 = vmatpush1.xpose.msra.mxu0 %v1911
    %1986 = vmatprep.subr.mxu0 0.0
    %1987 = vmatpush1.xpose.msra.mxu0 %v1912
    %1988 = vmatprep.subr.mxu0 0.0
    %1989 = vmatpush1.xpose.msra.mxu0 %v1913
    %1990 = vmatprep.subr.mxu0 0.0
    %1991 = vmatpush1.xpose.msra.mxu0 %v1914
    %1992 = vmatprep.subr.mxu0 0.0
    %1993 = vmatpush1.xpose.msra.mxu0 %v1915
    %1994 = vmatprep.subr.mxu0 0.0
    %1995 = vmatpush1.xpose.msra.mxu0 %v1916
    %1996 = vmatprep.subr.mxu0 0.0
    %1997 = vmatpush1.xpose.msra.mxu0 %v1917
    %1998 = vmatprep.subr.mxu0 0.0
    %1999 = vmatpush1.xpose.msra.mxu0 %v1918
    %2000 = vmatprep.subr.mxu0 0.0
    %2001 = vmatpush1.xpose.msra.mxu0 %v1919
    %2002 = vmatprep.mubr.f32.mxu0 0.0
    %2003 = vmatmul.mubr.f32.gmra.mrb[0].mxu0 %v29
    %v2004 = vpop.f32.mrb[0].mxu0
    %v2005 = vadd.f32 %v1936, %v2004
    %v2006 = vpop.f32.mrb[0].mxu0
    %v2007 = vadd.f32 %v1936, %v2006
    %2008 = vdwg.mxu0
    %v2009 = vld [vmem:[%s0 + $0x100] sm:$0xff]
    %v2010 = vld [vmem:[%s0 + $0x108] sm:$0xff]
    %v2011 = vld [vmem:[%s0 + $0x110] sm:$0xff]
    %v2012 = vld [vmem:[%s0 + $0x118] sm:$0xff]
    %v2013 = vld [vmem:[%s0 + $0x120] sm:$0xff]
    %v2014 = vld [vmem:[%s0 + $0x128] sm:$0xff]
    %v2015 = vld [vmem:[%s0 + $0x130] sm:$0xff]
    %v2016 = vld [vmem:[%s0 + $0x138] sm:$0xff]
    %v2017 = vld [vmem:[%s0 + $0x140] sm:$0xff]
    %v2018 = vld [vmem:[%s0 + $0x148] sm:$0xff]
    %v2019 = vld [vmem:[%s0 + $0x150] sm:$0xff]
    %v2020 = vld [vmem:[%s0 + $0x158] sm:$0xff]
    %v2021 = vld [vmem:[%s0 + $0x160] sm:$0xff]
    %v2022 = vld [vmem:[%s0 + $0x168] sm:$0xff]
    %v2023 = vld [vmem:[%s0 + $0x170] sm:$0xff]
    %v2024 = vld [vmem:[%s0 + $0x178] sm:$0xff]
    %v2025 = vld [vmem:[%s0 + $0x180] sm:$0xff]
    %v2026 = vld [vmem:[%s0 + $0x188] sm:$0xff]
    %v2027 = vld [vmem:[%s0 + $0x190] sm:$0xff]
    %v2028 = vld [vmem:[%s0 + $0x198] sm:$0xff]
    %v2029 = vld [vmem:[%s0 + $0x1a0] sm:$0xff]
    %v2030 = vld [vmem:[%s0 + $0x1a8] sm:$0xff]
    %v2031 = vld [vmem:[%s0 + $0x1b0] sm:$0xff]
    %v2032 = vld [vmem:[%s0 + $0x1b8] sm:$0xff]
    %v2033 = vld [vmem:[%s0 + $0x1c0] sm:$0xff]
    %v2034 = vld [vmem:[%s0 + $0x1c8] sm:$0xff]
    %v2035 = vld [vmem:[%s0 + $0x1d0] sm:$0xff]
    %v2036 = vld [vmem:[%s0 + $0x1d8] sm:$0xff]
    %v2037 = vld [vmem:[%s0 + $0x1e0] sm:$0xff]
    %v2038 = vld [vmem:[%s0 + $0x1e8] sm:$0xff]
    %v2039 = vld [vmem:[%s0 + $0x1f0] sm:$0xff]
    %v2040 = vld [vmem:[%s0 + $0x1f8] sm:$0xff]
    %v2042 = vsel %vm70, %v2009, 0
    %v2045 = vsel %vm70, %v2010, 0
    %v2048 = vsel %vm70, %v2011, 0
    %v2051 = vsel %vm70, %v2012, 0
    %v2054 = vsel %vm70, %v2013, 0
    %v2057 = vsel %vm70, %v2014, 0
    %v2060 = vsel %vm70, %v2015, 0
    %v2063 = vsel %vm70, %v2016, 0
    %v2066 = vsel %vm70, %v2017, 0
    %v2069 = vsel %vm70, %v2018, 0
    %v2072 = vsel %vm70, %v2019, 0
    %v2075 = vsel %vm70, %v2020, 0
    %v2078 = vsel %vm70, %v2021, 0
    %v2081 = vsel %vm70, %v2022, 0
    %v2084 = vsel %vm70, %v2023, 0
    %v2087 = vsel %vm70, %v2024, 0
    %v2090 = vsel %vm70, %v2025, 0
    %v2093 = vsel %vm70, %v2026, 0
    %v2096 = vsel %vm70, %v2027, 0
    %v2099 = vsel %vm70, %v2028, 0
    %v2102 = vsel %vm70, %v2029, 0
    %v2105 = vsel %vm70, %v2030, 0
    %v2108 = vsel %vm70, %v2031, 0
    %v2111 = vsel %vm70, %v2032, 0
    %v2114 = vsel %vm70, %v2033, 0
    %v2117 = vsel %vm70, %v2034, 0
    %v2120 = vsel %vm70, %v2035, 0
    %v2123 = vsel %vm70, %v2036, 0
    %v2126 = vsel %vm70, %v2037, 0
    %v2129 = vsel %vm70, %v2038, 0
    %v2132 = vsel %vm70, %v2039, 0
    %v2135 = vsel %vm70, %v2040, 0
    %2137 = vmatprep.subr.mxu0 0.0
    %2138 = vmatpush1.msra.mxu0 %v63
    %2139 = vmatprep.subr.mxu0 0.0
    %2140 = vmatpush1.msra.mxu0 %v64
    %2141 = vmatprep.subr.mxu0 0.0
    %2142 = vmatpush1.msra.mxu0 0.0
    %2143 = vmatprep.subr.mxu0 0.0
    %2144 = vmatpush1.msra.mxu0 0.0
    %2145 = vmatprep.subr.mxu0 0.0
    %2146 = vmatpush1.msra.mxu0 0.0
    %2147 = vmatprep.subr.mxu0 0.0
    %2148 = vmatpush1.msra.mxu0 0.0
    %2149 = vmatprep.subr.mxu0 0.0
    %2150 = vmatpush1.msra.mxu0 0.0
    %2151 = vmatprep.subr.mxu0 0.0
    %2152 = vmatpush1.msra.mxu0 0.0
    %2153 = vmatprep.subr.mxu0 0.0
    %2154 = vmatpush1.msra.mxu0 0.0
    %2155 = vmatprep.subr.mxu0 0.0
    %2156 = vmatpush1.msra.mxu0 0.0
    %2157 = vmatprep.subr.mxu0 0.0
    %2158 = vmatpush1.msra.mxu0 0.0
    %2159 = vmatprep.subr.mxu0 0.0
    %2160 = vmatpush1.msra.mxu0 0.0
    %2161 = vmatprep.subr.mxu0 0.0
    %2162 = vmatpush1.msra.mxu0 0.0
    %2163 = vmatprep.subr.mxu0 0.0
    %2164 = vmatpush1.msra.mxu0 0.0
    %2165 = vmatprep.subr.mxu0 0.0
    %2166 = vmatpush1.msra.mxu0 0.0
    %2167 = vmatprep.subr.mxu0 0.0
    %2168 = vmatpush1.msra.mxu0 0.0
    %2169 = vmatprep.subr.mxu0 0.0
    %2170 = vmatpush1.msra.mxu0 0.0
    %2171 = vmatprep.subr.mxu0 0.0
    %2172 = vmatpush1.msra.mxu0 0.0
    %2173 = vmatprep.subr.mxu0 0.0
    %2174 = vmatpush1.msra.mxu0 0.0
    %2175 = vmatprep.subr.mxu0 0.0
    %2176 = vmatpush1.msra.mxu0 0.0
    %2177 = vmatprep.subr.mxu0 0.0
    %2178 = vmatpush1.msra.mxu0 0.0
    %2179 = vmatprep.subr.mxu0 0.0
    %2180 = vmatpush1.msra.mxu0 0.0
    %2181 = vmatprep.subr.mxu0 0.0
    %2182 = vmatpush1.msra.mxu0 0.0
    %2183 = vmatprep.subr.mxu0 0.0
    %2184 = vmatpush1.msra.mxu0 0.0
    %2185 = vmatprep.subr.mxu0 0.0
    %2186 = vmatpush1.msra.mxu0 0.0
    %2187 = vmatprep.subr.mxu0 0.0
    %2188 = vmatpush1.msra.mxu0 0.0
    %2189 = vmatprep.subr.mxu0 0.0
    %2190 = vmatpush1.msra.mxu0 0.0
    %2191 = vmatprep.subr.mxu0 0.0
    %2192 = vmatpush1.msra.mxu0 0.0
    %2193 = vmatprep.subr.mxu0 0.0
    %2194 = vmatpush1.msra.mxu0 0.0
    %2195 = vmatprep.subr.mxu0 0.0
    %2196 = vmatpush1.msra.mxu0 0.0
    %2197 = vmatprep.subr.mxu0 0.0
    %2198 = vmatpush1.msra.mxu0 0.0
    %2199 = vmatprep.subr.mxu0 0.0
    %2200 = vmatpush1.msra.mxu0 0.0
    %2201 = vmatprep.mubr.f32.mxu0 0.0
    %2202 = vmatmul.mubr.f32.gmra.mrb[0].mxu0 %v2042
    %v2203 = vpop.f32.mrb[0].mxu0
    %v2204 = vadd.f32 %v69, %v2203
    %v2205 = vpop.f32.mrb[0].mxu0
    %2206 = vmatprep.mubr.f32.mxu0 0.0
    %2207 = vmatmul.mubr.f32.gmra.mrb[0].mxu0 %v2045
    %v2208 = vpop.f32.mrb[0].mxu0
    %v2209 = vadd.f32 %v69, %v2208
    %v2210 = vpop.f32.mrb[0].mxu0
    %2211 = vmatprep.mubr.f32.mxu0 0.0
    %2212 = vmatmul.mubr.f32.gmra.mrb[0].mxu0 %v2048
    %v2213 = vpop.f32.mrb[0].mxu0
    %v2214 = vadd.f32 %v69, %v2213
    %v2215 = vpop.f32.mrb[0].mxu0
    %2216 = vmatprep.mubr.f32.mxu0 0.0
    %2217 = vmatmul.mubr.f32.gmra.mrb[0].mxu0 %v2051
    %v2218 = vpop.f32.mrb[0].mxu0
    %v2219 = vadd.f32 %v69, %v2218
    %v2220 = vpop.f32.mrb[0].mxu0
    %2221 = vmatprep.mubr.f32.mxu0 0.0
    %2222 = vmatmul.mubr.f32.gmra.mrb[0].mxu0 %v2054
    %v2223 = vpop.f32.mrb[0].mxu0
    %v2224 = vadd.f32 %v69, %v2223
    %v2225 = vpop.f32.mrb[0].mxu0
    %2226 = vmatprep.mubr.f32.mxu0 0.0
    %2227 = vmatmul.mubr.f32.gmra.mrb[0].mxu0 %v2057
    %v2228 = vpop.f32.mrb[0].mxu0
    %v2229 = vadd.f32 %v69, %v2228
    %v2230 = vpop.f32.mrb[0].mxu0
    %2231 = vmatprep.mubr.f32.mxu0 0.0
    %2232 = vmatmul.mubr.f32.gmra.mrb[0].mxu0 %v2060
    %v2233 = vpop.f32.mrb[0].mxu0
    %v2234 = vadd.f32 %v69, %v2233
    %v2235 = vpop.f32.mrb[0].mxu0
    %2236 = vmatprep.mubr.f32.mxu0 0.0
    %2237 = vmatmul.mubr.f32.gmra.mrb[0].mxu0 %v2063
    %v2238 = vpop.f32.mrb[0].mxu0
    %v2239 = vadd.f32 %v69, %v2238
    %v2240 = vpop.f32.mrb[0].mxu0
    %2241 = vmatprep.mubr.f32.mxu0 0.0
    %2242 = vmatmul.mubr.f32.gmra.mrb[0].mxu0 %v2066
    %v2243 = vpop.f32.mrb[0].mxu0
    %v2244 = vadd.f32 %v69, %v2243
    %v2245 = vpop.f32.mrb[0].mxu0
    %2246 = vmatprep.mubr.f32.mxu0 0.0
    %2247 = vmatmul.mubr.f32.gmra.mrb[0].mxu0 %v2069
    %v2248 = vpop.f32.mrb[0].mxu0
    %v2249 = vadd.f32 %v69, %v2248
    %v2250 = vpop.f32.mrb[0].mxu0
    %2251 = vmatprep.mubr.f32.mxu0 0.0
    %2252 = vmatmul.mubr.f32.gmra.mrb[0].mxu0 %v2072
    %v2253 = vpop.f32.mrb[0].mxu0
    %v2254 = vadd.f32 %v69, %v2253
    %v2255 = vpop.f32.mrb[0].mxu0
    %2256 = vmatprep.mubr.f32.mxu0 0.0
    %2257 = vmatmul.mubr.f32.gmra.mrb[0].mxu0 %v2075
    %v2258 = vpop.f32.mrb[0].mxu0
    %v2259 = vadd.f32 %v69, %v2258
    %v2260 = vpop.f32.mrb[0].mxu0
    %2261 = vmatprep.mubr.f32.mxu0 0.0
    %2262 = vmatmul.mubr.f32.gmra.mrb[0].mxu0 %v2078
    %v2263 = vpop.f32.mrb[0].mxu0
    %v2264 = vadd.f32 %v69, %v2263
    %v2265 = vpop.f32.mrb[0].mxu0
    %2266 = vmatprep.mubr.f32.mxu0 0.0
    %2267 = vmatmul.mubr.f32.gmra.mrb[0].mxu0 %v2081
    %v2268 = vpop.f32.mrb[0].mxu0
    %v2269 = vadd.f32 %v69, %v2268
    %v2270 = vpop.f32.mrb[0].mxu0
    %2271 = vmatprep.mubr.f32.mxu0 0.0
    %2272 = vmatmul.mubr.f32.gmra.mrb[0].mxu0 %v2084
    %v2273 = vpop.f32.mrb[0].mxu0
    %v2274 = vadd.f32 %v69, %v2273
    %v2275 = vpop.f32.mrb[0].mxu0
    %2276 = vmatprep.mubr.f32.mxu0 0.0
    %2277 = vmatmul.mubr.f32.gmra.mrb[0].mxu0 %v2087
    %v2278 = vpop.f32.mrb[0].mxu0
    %v2279 = vadd.f32 %v69, %v2278
    %v2280 = vpop.f32.mrb[0].mxu0
    %2281 = vmatprep.mubr.f32.mxu0 0.0
    %2282 = vmatmul.mubr.f32.gmra.mrb[0].mxu0 %v2090
    %v2283 = vpop.f32.mrb[0].mxu0
    %v2284 = vadd.f32 %v69, %v2283
    %v2285 = vpop.f32.mrb[0].mxu0
    %2286 = vmatprep.mubr.f32.mxu0 0.0
    %2287 = vmatmul.mubr.f32.gmra.mrb[0].mxu0 %v2093
    %v2288 = vpop.f32.mrb[0].mxu0
    %v2289 = vadd.f32 %v69, %v2288
    %v2290 = vpop.f32.mrb[0].mxu0
    %2291 = vmatprep.mubr.f32.mxu0 0.0
    %2292 = vmatmul.mubr.f32.gmra.mrb[0].mxu0 %v2096
    %v2293 = vpop.f32.mrb[0].mxu0
    %v2294 = vadd.f32 %v69, %v2293
    %v2295 = vpop.f32.mrb[0].mxu0
    %2296 = vmatprep.mubr.f32.mxu0 0.0
    %2297 = vmatmul.mubr.f32.gmra.mrb[0].mxu0 %v2099
    %v2298 = vpop.f32.mrb[0].mxu0
    %v2299 = vadd.f32 %v69, %v2298
    %v2300 = vpop.f32.mrb[0].mxu0
    %2301 = vmatprep.mubr.f32.mxu0 0.0
    %2302 = vmatmul.mubr.f32.gmra.mrb[0].mxu0 %v2102
    %v2303 = vpop.f32.mrb[0].mxu0
    %v2304 = vadd.f32 %v69, %v2303
    %v2305 = vpop.f32.mrb[0].mxu0
    %2306 = vmatprep.mubr.f32.mxu0 0.0
    %2307 = vmatmul.mubr.f32.gmra.mrb[0].mxu0 %v2105
    %v2308 = vpop.f32.mrb[0].mxu0
    %v2309 = vadd.f32 %v69, %v2308
    %v2310 = vpop.f32.mrb[0].mxu0
    %2311 = vmatprep.mubr.f32.mxu0 0.0
    %2312 = vmatmul.mubr.f32.gmra.mrb[0].mxu0 %v2108
    %v2313 = vpop.f32.mrb[0].mxu0
    %v2314 = vadd.f32 %v69, %v2313
    %v2315 = vpop.f32.mrb[0].mxu0
    %2316 = vmatprep.mubr.f32.mxu0 0.0
    %2317 = vmatmul.mubr.f32.gmra.mrb[0].mxu0 %v2111
    %v2318 = vpop.f32.mrb[0].mxu0
    %v2319 = vadd.f32 %v69, %v2318
    %v2320 = vpop.f32.mrb[0].mxu0
    %2321 = vmatprep.mubr.f32.mxu0 0.0
    %2322 = vmatmul.mubr.f32.gmra.mrb[0].mxu0 %v2114
    %v2323 = vpop.f32.mrb[0].mxu0
    %v2324 = vadd.f32 %v69, %v2323
    %v2325 = vpop.f32.mrb[0].mxu0
    %2326 = vmatprep.mubr.f32.mxu0 0.0
    %2327 = vmatmul.mubr.f32.gmra.mrb[0].mxu0 %v2117
    %v2328 = vpop.f32.mrb[0].mxu0
    %v2329 = vadd.f32 %v69, %v2328
    %v2330 = vpop.f32.mrb[0].mxu0
    %2331 = vmatprep.mubr.f32.mxu0 0.0
    %2332 = vmatmul.mubr.f32.gmra.mrb[0].mxu0 %v2120
    %v2333 = vpop.f32.mrb[0].mxu0
    %v2334 = vadd.f32 %v69, %v2333
    %v2335 = vpop.f32.mrb[0].mxu0
    %2336 = vmatprep.mubr.f32.mxu0 0.0
    %2337 = vmatmul.mubr.f32.gmra.mrb[0].mxu0 %v2123
    %v2338 = vpop.f32.mrb[0].mxu0
    %v2339 = vadd.f32 %v69, %v2338
    %v2340 = vpop.f32.mrb[0].mxu0
    %2341 = vmatprep.mubr.f32.mxu0 0.0
    %2342 = vmatmul.mubr.f32.gmra.mrb[0].mxu0 %v2126
    %v2343 = vpop.f32.mrb[0].mxu0
    %v2344 = vadd.f32 %v69, %v2343
    %v2345 = vpop.f32.mrb[0].mxu0
    %2346 = vmatprep.mubr.f32.mxu0 0.0
    %2347 = vmatmul.mubr.f32.gmra.mrb[0].mxu0 %v2129
    %v2348 = vpop.f32.mrb[0].mxu0
    %v2349 = vadd.f32 %v69, %v2348
    %v2350 = vpop.f32.mrb[0].mxu0
    %2351 = vmatprep.mubr.f32.mxu0 0.0
    %2352 = vmatmul.mubr.f32.gmra.mrb[0].mxu0 %v2132
    %v2353 = vpop.f32.mrb[0].mxu0
    %v2354 = vadd.f32 %v69, %v2353
    %v2355 = vpop.f32.mrb[0].mxu0
    %2356 = vmatprep.mubr.f32.mxu0 0.0
    %2357 = vmatmul.mubr.f32.gmra.mrb[0].mxu0 %v2135
    %v2358 = vpop.f32.mrb[0].mxu0
    %v2359 = vadd.f32 %v69, %v2358
    %v2360 = vpop.f32.mrb[0].mxu0
    %2361 = vdwg.mxu0
    %vm2362 = vcmp.gt.f32.partialorder %v2204, 0.0
    %vm2363 = vcmp.gt.f32.partialorder %v2209, 0.0
    %vm2364 = vcmp.gt.f32.partialorder %v2214, 0.0
    %vm2365 = vcmp.gt.f32.partialorder %v2219, 0.0
    %vm2366 = vcmp.gt.f32.partialorder %v2224, 0.0
    %vm2367 = vcmp.gt.f32.partialorder %v2229, 0.0
    %vm2368 = vcmp.gt.f32.partialorder %v2234, 0.0
    %vm2369 = vcmp.gt.f32.partialorder %v2239, 0.0
    %vm2370 = vcmp.gt.f32.partialorder %v2244, 0.0
    %vm2371 = vcmp.gt.f32.partialorder %v2249, 0.0
    %vm2372 = vcmp.gt.f32.partialorder %v2254, 0.0
    %vm2373 = vcmp.gt.f32.partialorder %v2259, 0.0
    %vm2374 = vcmp.gt.f32.partialorder %v2264, 0.0
    %vm2375 = vcmp.gt.f32.partialorder %v2269, 0.0
    %vm2376 = vcmp.gt.f32.partialorder %v2274, 0.0
    %vm2377 = vcmp.gt.f32.partialorder %v2279, 0.0
    %vm2378 = vcmp.gt.f32.partialorder %v2284, 0.0
    %vm2379 = vcmp.gt.f32.partialorder %v2289, 0.0
    %vm2380 = vcmp.gt.f32.partialorder %v2294, 0.0
    %vm2381 = vcmp.gt.f32.partialorder %v2299, 0.0
    %vm2382 = vcmp.gt.f32.partialorder %v2304, 0.0
    %vm2383 = vcmp.gt.f32.partialorder %v2309, 0.0
    %vm2384 = vcmp.gt.f32.partialorder %v2314, 0.0
    %vm2385 = vcmp.gt.f32.partialorder %v2319, 0.0
    %vm2386 = vcmp.gt.f32.partialorder %v2324, 0.0
    %vm2387 = vcmp.gt.f32.partialorder %v2329, 0.0
    %vm2388 = vcmp.gt.f32.partialorder %v2334, 0.0
    %vm2389 = vcmp.gt.f32.partialorder %v2339, 0.0
    %vm2390 = vcmp.gt.f32.partialorder %v2344, 0.0
    %vm2391 = vcmp.gt.f32.partialorder %v2349, 0.0
    %vm2392 = vcmp.gt.f32.partialorder %v2354, 0.0
    %vm2393 = vcmp.gt.f32.partialorder %v2359, 0.0
    %v2394 = vmul.f32 %v2204, 0.1
    %v2395 = vmul.f32 %v2209, 0.1
    %v2396 = vmul.f32 %v2214, 0.1
    %v2397 = vmul.f32 %v2219, 0.1
    %v2398 = vmul.f32 %v2224, 0.1
    %v2399 = vmul.f32 %v2229, 0.1
    %v2400 = vmul.f32 %v2234, 0.1
    %v2401 = vmul.f32 %v2239, 0.1
    %v2402 = vmul.f32 %v2244, 0.1
    %v2403 = vmul.f32 %v2249, 0.1
    %v2404 = vmul.f32 %v2254, 0.1
    %v2405 = vmul.f32 %v2259, 0.1
    %v2406 = vmul.f32 %v2264, 0.1
    %v2407 = vmul.f32 %v2269, 0.1
    %v2408 = vmul.f32 %v2274, 0.1
    %v2409 = vmul.f32 %v2279, 0.1
    %v2410 = vmul.f32 %v2284, 0.1
    %v2411 = vmul.f32 %v2289, 0.1
    %v2412 = vmul.f32 %v2294, 0.1
    %v2413 = vmul.f32 %v2299, 0.1
    %v2414 = vmul.f32 %v2304, 0.1
    %v2415 = vmul.f32 %v2309, 0.1
    %v2416 = vmul.f32 %v2314, 0.1
    %v2417 = vmul.f32 %v2319, 0.1
    %v2418 = vmul.f32 %v2324, 0.1
    %v2419 = vmul.f32 %v2329, 0.1
    %v2420 = vmul.f32 %v2334, 0.1
    %v2421 = vmul.f32 %v2339, 0.1
    %v2422 = vmul.f32 %v2344, 0.1
    %v2423 = vmul.f32 %v2349, 0.1
    %v2424 = vmul.f32 %v2354, 0.1
    %v2425 = vmul.f32 %v2359, 0.1
    %v2426 = vsel %vm2362, %v2204, %v2394
    %v2427 = vsel %vm2363, %v2209, %v2395
    %v2428 = vsel %vm2364, %v2214, %v2396
    %v2429 = vsel %vm2365, %v2219, %v2397
    %v2430 = vsel %vm2366, %v2224, %v2398
    %v2431 = vsel %vm2367, %v2229, %v2399
    %v2432 = vsel %vm2368, %v2234, %v2400
    %v2433 = vsel %vm2369, %v2239, %v2401
    %v2434 = vsel %vm2370, %v2244, %v2402
    %v2435 = vsel %vm2371, %v2249, %v2403
    %v2436 = vsel %vm2372, %v2254, %v2404
    %v2437 = vsel %vm2373, %v2259, %v2405
    %v2438 = vsel %vm2374, %v2264, %v2406
    %v2439 = vsel %vm2375, %v2269, %v2407
    %v2440 = vsel %vm2376, %v2274, %v2408
    %v2441 = vsel %vm2377, %v2279, %v2409
    %v2442 = vsel %vm2378, %v2284, %v2410
    %v2443 = vsel %vm2379, %v2289, %v2411
    %v2444 = vsel %vm2380, %v2294, %v2412
    %v2445 = vsel %vm2381, %v2299, %v2413
    %v2446 = vsel %vm2382, %v2304, %v2414
    %v2447 = vsel %vm2383, %v2309, %v2415
    %v2448 = vsel %vm2384, %v2314, %v2416
    %v2449 = vsel %vm2385, %v2319, %v2417
    %v2450 = vsel %vm2386, %v2324, %v2418
    %v2451 = vsel %vm2387, %v2329, %v2419
    %v2452 = vsel %vm2388, %v2334, %v2420
    %v2453 = vsel %vm2389, %v2339, %v2421
    %v2454 = vsel %vm2390, %v2344, %v2422
    %v2455 = vsel %vm2391, %v2349, %v2423
    %v2456 = vsel %vm2392, %v2354, %v2424
    %v2457 = vsel %vm2393, %v2359, %v2425
    %2458 = vmatprep.subr.mxu0 0.0
    %2459 = vmatpush1.msra.mxu0 %v488
    %2460 = vmatprep.subr.mxu0 0.0
    %2461 = vmatpush1.msra.mxu0 %v489
    %2462 = vmatprep.subr.mxu0 0.0
    %2463 = vmatpush1.msra.mxu0 %v490
    %2464 = vmatprep.subr.mxu0 0.0
    %2465 = vmatpush1.msra.mxu0 %v491
    %2466 = vmatprep.subr.mxu0 0.0
    %2467 = vmatpush1.msra.mxu0 %v492
    %2468 = vmatprep.subr.mxu0 0.0
    %2469 = vmatpush1.msra.mxu0 %v493
    %2470 = vmatprep.subr.mxu0 0.0
    %2471 = vmatpush1.msra.mxu0 %v494
    %2472 = vmatprep.subr.mxu0 0.0
    %2473 = vmatpush1.msra.mxu0 %v495
    %2474 = vmatprep.subr.mxu0 0.0
    %2475 = vmatpush1.msra.mxu0 %v496
    %2476 = vmatprep.subr.mxu0 0.0
    %2477 = vmatpush1.msra.mxu0 %v497
    %2478 = vmatprep.subr.mxu0 0.0
    %2479 = vmatpush1.msra.mxu0 %v498
    %2480 = vmatprep.subr.mxu0 0.0
    %2481 = vmatpush1.msra.mxu0 %v499
    %2482 = vmatprep.subr.mxu0 0.0
    %2483 = vmatpush1.msra.mxu0 %v500
    %2484 = vmatprep.subr.mxu0 0.0
    %2485 = vmatpush1.msra.mxu0 %v501
    %2486 = vmatprep.subr.mxu0 0.0
    %2487 = vmatpush1.msra.mxu0 %v502
    %2488 = vmatprep.subr.mxu0 0.0
    %2489 = vmatpush1.msra.mxu0 %v503
    %2490 = vmatprep.subr.mxu0 0.0
    %2491 = vmatpush1.msra.mxu0 0.0
    %2492 = vmatprep.subr.mxu0 0.0
    %2493 = vmatpush1.msra.mxu0 0.0
    %2494 = vmatprep.subr.mxu0 0.0
    %2495 = vmatpush1.msra.mxu0 0.0
    %2496 = vmatprep.subr.mxu0 0.0
    %2497 = vmatpush1.msra.mxu0 0.0
    %2498 = vmatprep.subr.mxu0 0.0
    %2499 = vmatpush1.msra.mxu0 0.0
    %2500 = vmatprep.subr.mxu0 0.0
    %2501 = vmatpush1.msra.mxu0 0.0
    %2502 = vmatprep.subr.mxu0 0.0
    %2503 = vmatpush1.msra.mxu0 0.0
    %2504 = vmatprep.subr.mxu0 0.0
    %2505 = vmatpush1.msra.mxu0 0.0
    %2506 = vmatprep.subr.mxu0 0.0
    %2507 = vmatpush1.msra.mxu0 0.0
    %2508 = vmatprep.subr.mxu0 0.0
    %2509 = vmatpush1.msra.mxu0 0.0
    %2510 = vmatprep.subr.mxu0 0.0
    %2511 = vmatpush1.msra.mxu0 0.0
    %2512 = vmatprep.subr.mxu0 0.0
    %2513 = vmatpush1.msra.mxu0 0.0
    %2514 = vmatprep.subr.mxu0 0.0
    %2515 = vmatpush1.msra.mxu0 0.0
    %2516 = vmatprep.subr.mxu0 0.0
    %2517 = vmatpush1.msra.mxu0 0.0
    %2518 = vmatprep.subr.mxu0 0.0
    %2519 = vmatpush1.msra.mxu0 0.0
    %2520 = vmatprep.subr.mxu0 0.0
    %2521 = vmatpush1.msra.mxu0 0.0
    %2522 = vmatprep.mubr.f32.mxu0 0.0
    %2523 = vmatmul.mubr.f32.gmra.mrb[0].mxu0 %v2426
    %v2524 = vpop.f32.mrb[0].mxu0
    %v2525 = vadd.f32 %v508, %v2524
    %v2526 = vpop.f32.mrb[0].mxu0
    %2527 = vmatprep.mubr.f32.mxu0 0.0
    %2528 = vmatmul.mubr.f32.gmra.mrb[0].mxu0 %v2427
    %v2529 = vpop.f32.mrb[0].mxu0
    %v2530 = vadd.f32 %v508, %v2529
    %v2531 = vpop.f32.mrb[0].mxu0
    %2532 = vmatprep.mubr.f32.mxu0 0.0
    %2533 = vmatmul.mubr.f32.gmra.mrb[0].mxu0 %v2428
    %v2534 = vpop.f32.mrb[0].mxu0
    %v2535 = vadd.f32 %v508, %v2534
    %v2536 = vpop.f32.mrb[0].mxu0
    %2537 = vmatprep.mubr.f32.mxu0 0.0
    %2538 = vmatmul.mubr.f32.gmra.mrb[0].mxu0 %v2429
    %v2539 = vpop.f32.mrb[0].mxu0
    %v2540 = vadd.f32 %v508, %v2539
    %v2541 = vpop.f32.mrb[0].mxu0
    %2542 = vmatprep.mubr.f32.mxu0 0.0
    %2543 = vmatmul.mubr.f32.gmra.mrb[0].mxu0 %v2430
    %v2544 = vpop.f32.mrb[0].mxu0
    %v2545 = vadd.f32 %v508, %v2544
    %v2546 = vpop.f32.mrb[0].mxu0
    %2547 = vmatprep.mubr.f32.mxu0 0.0
    %2548 = vmatmul.mubr.f32.gmra.mrb[0].mxu0 %v2431
    %v2549 = vpop.f32.mrb[0].mxu0
    %v2550 = vadd.f32 %v508, %v2549
    %v2551 = vpop.f32.mrb[0].mxu0
    %2552 = vmatprep.mubr.f32.mxu0 0.0
    %2553 = vmatmul.mubr.f32.gmra.mrb[0].mxu0 %v2432
    %v2554 = vpop.f32.mrb[0].mxu0
    %v2555 = vadd.f32 %v508, %v2554
    %v2556 = vpop.f32.mrb[0].mxu0
    %2557 = vmatprep.mubr.f32.mxu0 0.0
    %2558 = vmatmul.mubr.f32.gmra.mrb[0].mxu0 %v2433
    %v2559 = vpop.f32.mrb[0].mxu0
    %v2560 = vadd.f32 %v508, %v2559
    %v2561 = vpop.f32.mrb[0].mxu0
    %2562 = vmatprep.mubr.f32.mxu0 0.0
    %2563 = vmatmul.mubr.f32.gmra.mrb[0].mxu0 %v2434
    %v2564 = vpop.f32.mrb[0].mxu0
    %v2565 = vadd.f32 %v508, %v2564
    %v2566 = vpop.f32.mrb[0].mxu0
    %2567 = vmatprep.mubr.f32.mxu0 0.0
    %2568 = vmatmul.mubr.f32.gmra.mrb[0].mxu0 %v2435
    %v2569 = vpop.f32.mrb[0].mxu0
    %v2570 = vadd.f32 %v508, %v2569
    %v2571 = vpop.f32.mrb[0].mxu0
    %2572 = vmatprep.mubr.f32.mxu0 0.0
    %2573 = vmatmul.mubr.f32.gmra.mrb[0].mxu0 %v2436
    %v2574 = vpop.f32.mrb[0].mxu0
    %v2575 = vadd.f32 %v508, %v2574
    %v2576 = vpop.f32.mrb[0].mxu0
    %2577 = vmatprep.mubr.f32.mxu0 0.0
    %2578 = vmatmul.mubr.f32.gmra.mrb[0].mxu0 %v2437
    %v2579 = vpop.f32.mrb[0].mxu0
    %v2580 = vadd.f32 %v508, %v2579
    %v2581 = vpop.f32.mrb[0].mxu0
    %2582 = vmatprep.mubr.f32.mxu0 0.0
    %2583 = vmatmul.mubr.f32.gmra.mrb[0].mxu0 %v2438
    %v2584 = vpop.f32.mrb[0].mxu0
    %v2585 = vadd.f32 %v508, %v2584
    %v2586 = vpop.f32.mrb[0].mxu0
    %2587 = vmatprep.mubr.f32.mxu0 0.0
    %2588 = vmatmul.mubr.f32.gmra.mrb[0].mxu0 %v2439
    %v2589 = vpop.f32.mrb[0].mxu0
    %v2590 = vadd.f32 %v508, %v2589
    %v2591 = vpop.f32.mrb[0].mxu0
    %2592 = vmatprep.mubr.f32.mxu0 0.0
    %2593 = vmatmul.mubr.f32.gmra.mrb[0].mxu0 %v2440
    %v2594 = vpop.f32.mrb[0].mxu0
    %v2595 = vadd.f32 %v508, %v2594
    %v2596 = vpop.f32.mrb[0].mxu0
    %2597 = vmatprep.mubr.f32.mxu0 0.0
    %2598 = vmatmul.mubr.f32.gmra.mrb[0].mxu0 %v2441
    %v2599 = vpop.f32.mrb[0].mxu0
    %v2600 = vadd.f32 %v508, %v2599
    %v2601 = vpop.f32.mrb[0].mxu0
    %2602 = vmatprep.mubr.f32.mxu0 0.0
    %2603 = vmatmul.mubr.f32.gmra.mrb[0].mxu0 %v2442
    %v2604 = vpop.f32.mrb[0].mxu0
    %v2605 = vadd.f32 %v508, %v2604
    %v2606 = vpop.f32.mrb[0].mxu0
    %2607 = vmatprep.mubr.f32.mxu0 0.0
    %2608 = vmatmul.mubr.f32.gmra.mrb[0].mxu0 %v2443
    %v2609 = vpop.f32.mrb[0].mxu0
    %v2610 = vadd.f32 %v508, %v2609
    %v2611 = vpop.f32.mrb[0].mxu0
    %2612 = vmatprep.mubr.f32.mxu0 0.0
    %2613 = vmatmul.mubr.f32.gmra.mrb[0].mxu0 %v2444
    %v2614 = vpop.f32.mrb[0].mxu0
    %v2615 = vadd.f32 %v508, %v2614
    %v2616 = vpop.f32.mrb[0].mxu0
    %2617 = vmatprep.mubr.f32.mxu0 0.0
    %2618 = vmatmul.mubr.f32.gmra.mrb[0].mxu0 %v2445
    %v2619 = vpop.f32.mrb[0].mxu0
    %v2620 = vadd.f32 %v508, %v2619
    %v2621 = vpop.f32.mrb[0].mxu0
    %2622 = vmatprep.mubr.f32.mxu0 0.0
    %2623 = vmatmul.mubr.f32.gmra.mrb[0].mxu0 %v2446
    %v2624 = vpop.f32.mrb[0].mxu0
    %v2625 = vadd.f32 %v508, %v2624
    %v2626 = vpop.f32.mrb[0].mxu0
    %2627 = vmatprep.mubr.f32.mxu0 0.0
    %2628 = vmatmul.mubr.f32.gmra.mrb[0].mxu0 %v2447
    %v2629 = vpop.f32.mrb[0].mxu0
    %v2630 = vadd.f32 %v508, %v2629
    %v2631 = vpop.f32.mrb[0].mxu0
    %2632 = vmatprep.mubr.f32.mxu0 0.0
    %2633 = vmatmul.mubr.f32.gmra.mrb[0].mxu0 %v2448
    %v2634 = vpop.f32.mrb[0].mxu0
    %v2635 = vadd.f32 %v508, %v2634
    %v2636 = vpop.f32.mrb[0].mxu0
    %2637 = vmatprep.mubr.f32.mxu0 0.0
    %2638 = vmatmul.mubr.f32.gmra.mrb[0].mxu0 %v2449
    %v2639 = vpop.f32.mrb[0].mxu0
    %v2640 = vadd.f32 %v508, %v2639
    %v2641 = vpop.f32.mrb[0].mxu0
    %2642 = vmatprep.mubr.f32.mxu0 0.0
    %2643 = vmatmul.mubr.f32.gmra.mrb[0].mxu0 %v2450
    %v2644 = vpop.f32.mrb[0].mxu0
    %v2645 = vadd.f32 %v508, %v2644
    %v2646 = vpop.f32.mrb[0].mxu0
    %2647 = vmatprep.mubr.f32.mxu0 0.0
    %2648 = vmatmul.mubr.f32.gmra.mrb[0].mxu0 %v2451
    %v2649 = vpop.f32.mrb[0].mxu0
    %v2650 = vadd.f32 %v508, %v2649
    %v2651 = vpop.f32.mrb[0].mxu0
    %2652 = vmatprep.mubr.f32.mxu0 0.0
    %2653 = vmatmul.mubr.f32.gmra.mrb[0].mxu0 %v2452
    %v2654 = vpop.f32.mrb[0].mxu0
    %v2655 = vadd.f32 %v508, %v2654
    %v2656 = vpop.f32.mrb[0].mxu0
    %2657 = vmatprep.mubr.f32.mxu0 0.0
    %2658 = vmatmul.mubr.f32.gmra.mrb[0].mxu0 %v2453
    %v2659 = vpop.f32.mrb[0].mxu0
    %v2660 = vadd.f32 %v508, %v2659
    %v2661 = vpop.f32.mrb[0].mxu0
    %2662 = vmatprep.mubr.f32.mxu0 0.0
    %2663 = vmatmul.mubr.f32.gmra.mrb[0].mxu0 %v2454
    %v2664 = vpop.f32.mrb[0].mxu0
    %v2665 = vadd.f32 %v508, %v2664
    %v2666 = vpop.f32.mrb[0].mxu0
    %2667 = vmatprep.mubr.f32.mxu0 0.0
    %2668 = vmatmul.mubr.f32.gmra.mrb[0].mxu0 %v2455
    %v2669 = vpop.f32.mrb[0].mxu0
    %v2670 = vadd.f32 %v508, %v2669
    %v2671 = vpop.f32.mrb[0].mxu0
    %2672 = vmatprep.mubr.f32.mxu0 0.0
    %2673 = vmatmul.mubr.f32.gmra.mrb[0].mxu0 %v2456
    %v2674 = vpop.f32.mrb[0].mxu0
    %v2675 = vadd.f32 %v508, %v2674
    %v2676 = vpop.f32.mrb[0].mxu0
    %2677 = vmatprep.mubr.f32.mxu0 0.0
    %2678 = vmatmul.mubr.f32.gmra.mrb[0].mxu0 %v2457
    %v2679 = vpop.f32.mrb[0].mxu0
    %v2680 = vadd.f32 %v508, %v2679
    %v2681 = vpop.f32.mrb[0].mxu0
    %2682 = vdwg.mxu0
    %v2683 = vadd.f32 %v2525, %v2426
    %v2684 = vadd.f32 %v2530, %v2427
    %v2685 = vadd.f32 %v2535, %v2428
    %v2686 = vadd.f32 %v2540, %v2429
    %v2687 = vadd.f32 %v2545, %v2430
    %v2688 = vadd.f32 %v2550, %v2431
    %v2689 = vadd.f32 %v2555, %v2432
    %v2690 = vadd.f32 %v2560, %v2433
    %v2691 = vadd.f32 %v2565, %v2434
    %v2692 = vadd.f32 %v2570, %v2435
    %v2693 = vadd.f32 %v2575, %v2436
    %v2694 = vadd.f32 %v2580, %v2437
    %v2695 = vadd.f32 %v2585, %v2438
    %v2696 = vadd.f32 %v2590, %v2439
    %v2697 = vadd.f32 %v2595, %v2440
    %v2698 = vadd.f32 %v2600, %v2441
    %v2699 = vadd.f32 %v2605, %v2442
    %v2700 = vadd.f32 %v2610, %v2443
    %v2701 = vadd.f32 %v2615, %v2444
    %v2702 = vadd.f32 %v2620, %v2445
    %v2703 = vadd.f32 %v2625, %v2446
    %v2704 = vadd.f32 %v2630, %v2447
    %v2705 = vadd.f32 %v2635, %v2448
    %v2706 = vadd.f32 %v2640, %v2449
    %v2707 = vadd.f32 %v2645, %v2450
    %v2708 = vadd.f32 %v2650, %v2451
    %v2709 = vadd.f32 %v2655, %v2452
    %v2710 = vadd.f32 %v2660, %v2453
    %v2711 = vadd.f32 %v2665, %v2454
    %v2712 = vadd.f32 %v2670, %v2455
    %v2713 = vadd.f32 %v2675, %v2456
    %v2714 = vadd.f32 %v2680, %v2457
    %vm2715 = vcmp.gt.f32.partialorder %v2683, 0.0
    %vm2716 = vcmp.gt.f32.partialorder %v2684, 0.0
    %vm2717 = vcmp.gt.f32.partialorder %v2685, 0.0
    %vm2718 = vcmp.gt.f32.partialorder %v2686, 0.0
    %vm2719 = vcmp.gt.f32.partialorder %v2687, 0.0
    %vm2720 = vcmp.gt.f32.partialorder %v2688, 0.0
    %vm2721 = vcmp.gt.f32.partialorder %v2689, 0.0
    %vm2722 = vcmp.gt.f32.partialorder %v2690, 0.0
    %vm2723 = vcmp.gt.f32.partialorder %v2691, 0.0
    %vm2724 = vcmp.gt.f32.partialorder %v2692, 0.0
    %vm2725 = vcmp.gt.f32.partialorder %v2693, 0.0
    %vm2726 = vcmp.gt.f32.partialorder %v2694, 0.0
    %vm2727 = vcmp.gt.f32.partialorder %v2695, 0.0
    %vm2728 = vcmp.gt.f32.partialorder %v2696, 0.0
    %vm2729 = vcmp.gt.f32.partialorder %v2697, 0.0
    %vm2730 = vcmp.gt.f32.partialorder %v2698, 0.0
    %vm2731 = vcmp.gt.f32.partialorder %v2699, 0.0
    %vm2732 = vcmp.gt.f32.partialorder %v2700, 0.0
    %vm2733 = vcmp.gt.f32.partialorder %v2701, 0.0
    %vm2734 = vcmp.gt.f32.partialorder %v2702, 0.0
    %vm2735 = vcmp.gt.f32.partialorder %v2703, 0.0
    %vm2736 = vcmp.gt.f32.partialorder %v2704, 0.0
    %vm2737 = vcmp.gt.f32.partialorder %v2705, 0.0
    %vm2738 = vcmp.gt.f32.partialorder %v2706, 0.0
    %vm2739 = vcmp.gt.f32.partialorder %v2707, 0.0
    %vm2740 = vcmp.gt.f32.partialorder %v2708, 0.0
    %vm2741 = vcmp.gt.f32.partialorder %v2709, 0.0
    %vm2742 = vcmp.gt.f32.partialorder %v2710, 0.0
    %vm2743 = vcmp.gt.f32.partialorder %v2711, 0.0
    %vm2744 = vcmp.gt.f32.partialorder %v2712, 0.0
    %vm2745 = vcmp.gt.f32.partialorder %v2713, 0.0
    %vm2746 = vcmp.gt.f32.partialorder %v2714, 0.0
    %v2747 = vmul.f32 %v2683, 0.1
    %v2748 = vmul.f32 %v2684, 0.1
    %v2749 = vmul.f32 %v2685, 0.1
    %v2750 = vmul.f32 %v2686, 0.1
    %v2751 = vmul.f32 %v2687, 0.1
    %v2752 = vmul.f32 %v2688, 0.1
    %v2753 = vmul.f32 %v2689, 0.1
    %v2754 = vmul.f32 %v2690, 0.1
    %v2755 = vmul.f32 %v2691, 0.1
    %v2756 = vmul.f32 %v2692, 0.1
    %v2757 = vmul.f32 %v2693, 0.1
    %v2758 = vmul.f32 %v2694, 0.1
    %v2759 = vmul.f32 %v2695, 0.1
    %v2760 = vmul.f32 %v2696, 0.1
    %v2761 = vmul.f32 %v2697, 0.1
    %v2762 = vmul.f32 %v2698, 0.1
    %v2763 = vmul.f32 %v2699, 0.1
    %v2764 = vmul.f32 %v2700, 0.1
    %v2765 = vmul.f32 %v2701, 0.1
    %v2766 = vmul.f32 %v2702, 0.1
    %v2767 = vmul.f32 %v2703, 0.1
    %v2768 = vmul.f32 %v2704, 0.1
    %v2769 = vmul.f32 %v2705, 0.1
    %v2770 = vmul.f32 %v2706, 0.1
    %v2771 = vmul.f32 %v2707, 0.1
    %v2772 = vmul.f32 %v2708, 0.1
    %v2773 = vmul.f32 %v2709, 0.1
    %v2774 = vmul.f32 %v2710, 0.1
    %v2775 = vmul.f32 %v2711, 0.1
    %v2776 = vmul.f32 %v2712, 0.1
    %v2777 = vmul.f32 %v2713, 0.1
    %v2778 = vmul.f32 %v2714, 0.1
    %v2779 = vsel %vm2715, %v2683, %v2747
    %v2780 = vsel %vm2716, %v2684, %v2748
    %v2781 = vsel %vm2717, %v2685, %v2749
    %v2782 = vsel %vm2718, %v2686, %v2750
    %v2783 = vsel %vm2719, %v2687, %v2751
    %v2784 = vsel %vm2720, %v2688, %v2752
    %v2785 = vsel %vm2721, %v2689, %v2753
    %v2786 = vsel %vm2722, %v2690, %v2754
    %v2787 = vsel %vm2723, %v2691, %v2755
    %v2788 = vsel %vm2724, %v2692, %v2756
    %v2789 = vsel %vm2725, %v2693, %v2757
    %v2790 = vsel %vm2726, %v2694, %v2758
    %v2791 = vsel %vm2727, %v2695, %v2759
    %v2792 = vsel %vm2728, %v2696, %v2760
    %v2793 = vsel %vm2729, %v2697, %v2761
    %v2794 = vsel %vm2730, %v2698, %v2762
    %v2795 = vsel %vm2731, %v2699, %v2763
    %v2796 = vsel %vm2732, %v2700, %v2764
    %v2797 = vsel %vm2733, %v2701, %v2765
    %v2798 = vsel %vm2734, %v2702, %v2766
    %v2799 = vsel %vm2735, %v2703, %v2767
    %v2800 = vsel %vm2736, %v2704, %v2768
    %v2801 = vsel %vm2737, %v2705, %v2769
    %v2802 = vsel %vm2738, %v2706, %v2770
    %v2803 = vsel %vm2739, %v2707, %v2771
    %v2804 = vsel %vm2740, %v2708, %v2772
    %v2805 = vsel %vm2741, %v2709, %v2773
    %v2806 = vsel %vm2742, %v2710, %v2774
    %v2807 = vsel %vm2743, %v2711, %v2775
    %v2808 = vsel %vm2744, %v2712, %v2776
    %v2809 = vsel %vm2745, %v2713, %v2777
    %v2810 = vsel %vm2746, %v2714, %v2778
    %2811 = vmatprep.subr.mxu0 0.0
    %2812 = vmatpush1.msra.mxu0 %v862
    %2813 = vmatprep.subr.mxu0 0.0
    %2814 = vmatpush1.msra.mxu0 %v863
    %2815 = vmatprep.subr.mxu0 0.0
    %2816 = vmatpush1.msra.mxu0 %v864
    %2817 = vmatprep.subr.mxu0 0.0
    %2818 = vmatpush1.msra.mxu0 %v865
    %2819 = vmatprep.subr.mxu0 0.0
    %2820 = vmatpush1.msra.mxu0 %v866
    %2821 = vmatprep.subr.mxu0 0.0
    %2822 = vmatpush1.msra.mxu0 %v867
    %2823 = vmatprep.subr.mxu0 0.0
    %2824 = vmatpush1.msra.mxu0 %v868
    %2825 = vmatprep.subr.mxu0 0.0
    %2826 = vmatpush1.msra.mxu0 %v869
    %2827 = vmatprep.subr.mxu0 0.0
    %2828 = vmatpush1.msra.mxu0 %v870
    %2829 = vmatprep.subr.mxu0 0.0
    %2830 = vmatpush1.msra.mxu0 %v871
    %2831 = vmatprep.subr.mxu0 0.0
    %2832 = vmatpush1.msra.mxu0 %v872
    %2833 = vmatprep.subr.mxu0 0.0
    %2834 = vmatpush1.msra.mxu0 %v873
    %2835 = vmatprep.subr.mxu0 0.0
    %2836 = vmatpush1.msra.mxu0 %v874
    %2837 = vmatprep.subr.mxu0 0.0
    %2838 = vmatpush1.msra.mxu0 %v875
    %2839 = vmatprep.subr.mxu0 0.0
    %2840 = vmatpush1.msra.mxu0 %v876
    %2841 = vmatprep.subr.mxu0 0.0
    %2842 = vmatpush1.msra.mxu0 %v877
    %2843 = vmatprep.subr.mxu0 0.0
    %2844 = vmatpush1.msra.mxu0 0.0
    %2845 = vmatprep.subr.mxu0 0.0
    %2846 = vmatpush1.msra.mxu0 0.0
    %2847 = vmatprep.subr.mxu0 0.0
    %2848 = vmatpush1.msra.mxu0 0.0
    %2849 = vmatprep.subr.mxu0 0.0
    %2850 = vmatpush1.msra.mxu0 0.0
    %2851 = vmatprep.subr.mxu0 0.0
    %2852 = vmatpush1.msra.mxu0 0.0
    %2853 = vmatprep.subr.mxu0 0.0
    %2854 = vmatpush1.msra.mxu0 0.0
    %2855 = vmatprep.subr.mxu0 0.0
    %2856 = vmatpush1.msra.mxu0 0.0
    %2857 = vmatprep.subr.mxu0 0.0
    %2858 = vmatpush1.msra.mxu0 0.0
    %2859 = vmatprep.subr.mxu0 0.0
    %2860 = vmatpush1.msra.mxu0 0.0
    %2861 = vmatprep.subr.mxu0 0.0
    %2862 = vmatpush1.msra.mxu0 0.0
    %2863 = vmatprep.subr.mxu0 0.0
    %2864 = vmatpush1.msra.mxu0 0.0
    %2865 = vmatprep.subr.mxu0 0.0
    %2866 = vmatpush1.msra.mxu0 0.0
    %2867 = vmatprep.subr.mxu0 0.0
    %2868 = vmatpush1.msra.mxu0 0.0
    %2869 = vmatprep.subr.mxu0 0.0
    %2870 = vmatpush1.msra.mxu0 0.0
    %2871 = vmatprep.subr.mxu0 0.0
    %2872 = vmatpush1.msra.mxu0 0.0
    %2873 = vmatprep.subr.mxu0 0.0
    %2874 = vmatpush1.msra.mxu0 0.0
    %2875 = vmatprep.mubr.f32.mxu0 0.0
    %2876 = vmatmul.mubr.f32.gmra.mrb[0].mxu0 %v2779
    %v2877 = vpop.f32.mrb[0].mxu0
    %v2878 = vadd.f32 %v882, %v2877
    %v2879 = vpop.f32.mrb[0].mxu0
    %2880 = vmatprep.mubr.f32.mxu0 0.0
    %2881 = vmatmul.mubr.f32.gmra.mrb[0].mxu0 %v2780
    %v2882 = vpop.f32.mrb[0].mxu0
    %v2883 = vadd.f32 %v882, %v2882
    %v2884 = vpop.f32.mrb[0].mxu0
    %2885 = vmatprep.mubr.f32.mxu0 0.0
    %2886 = vmatmul.mubr.f32.gmra.mrb[0].mxu0 %v2781
    %v2887 = vpop.f32.mrb[0].mxu0
    %v2888 = vadd.f32 %v882, %v2887
    %v2889 = vpop.f32.mrb[0].mxu0
    %2890 = vmatprep.mubr.f32.mxu0 0.0
    %2891 = vmatmul.mubr.f32.gmra.mrb[0].mxu0 %v2782
    %v2892 = vpop.f32.mrb[0].mxu0
    %v2893 = vadd.f32 %v882, %v2892
    %v2894 = vpop.f32.mrb[0].mxu0
    %2895 = vmatprep.mubr.f32.mxu0 0.0
    %2896 = vmatmul.mubr.f32.gmra.mrb[0].mxu0 %v2783
    %v2897 = vpop.f32.mrb[0].mxu0
    %v2898 = vadd.f32 %v882, %v2897
    %v2899 = vpop.f32.mrb[0].mxu0
    %2900 = vmatprep.mubr.f32.mxu0 0.0
    %2901 = vmatmul.mubr.f32.gmra.mrb[0].mxu0 %v2784
    %v2902 = vpop.f32.mrb[0].mxu0
    %v2903 = vadd.f32 %v882, %v2902
    %v2904 = vpop.f32.mrb[0].mxu0
    %2905 = vmatprep.mubr.f32.mxu0 0.0
    %2906 = vmatmul.mubr.f32.gmra.mrb[0].mxu0 %v2785
    %v2907 = vpop.f32.mrb[0].mxu0
    %v2908 = vadd.f32 %v882, %v2907
    %v2909 = vpop.f32.mrb[0].mxu0
    %2910 = vmatprep.mubr.f32.mxu0 0.0
    %2911 = vmatmul.mubr.f32.gmra.mrb[0].mxu0 %v2786
    %v2912 = vpop.f32.mrb[0].mxu0
    %v2913 = vadd.f32 %v882, %v2912
    %v2914 = vpop.f32.mrb[0].mxu0
    %2915 = vmatprep.mubr.f32.mxu0 0.0
    %2916 = vmatmul.mubr.f32.gmra.mrb[0].mxu0 %v2787
    %v2917 = vpop.f32.mrb[0].mxu0
    %v2918 = vadd.f32 %v882, %v2917
    %v2919 = vpop.f32.mrb[0].mxu0
    %2920 = vmatprep.mubr.f32.mxu0 0.0
    %2921 = vmatmul.mubr.f32.gmra.mrb[0].mxu0 %v2788
    %v2922 = vpop.f32.mrb[0].mxu0
    %v2923 = vadd.f32 %v882, %v2922
    %v2924 = vpop.f32.mrb[0].mxu0
    %2925 = vmatprep.mubr.f32.mxu0 0.0
    %2926 = vmatmul.mubr.f32.gmra.mrb[0].mxu0 %v2789
    %v2927 = vpop.f32.mrb[0].mxu0
    %v2928 = vadd.f32 %v882, %v2927
    %v2929 = vpop.f32.mrb[0].mxu0
    %2930 = vmatprep.mubr.f32.mxu0 0.0
    %2931 = vmatmul.mubr.f32.gmra.mrb[0].mxu0 %v2790
    %v2932 = vpop.f32.mrb[0].mxu0
    %v2933 = vadd.f32 %v882, %v2932
    %v2934 = vpop.f32.mrb[0].mxu0
    %2935 = vmatprep.mubr.f32.mxu0 0.0
    %2936 = vmatmul.mubr.f32.gmra.mrb[0].mxu0 %v2791
    %v2937 = vpop.f32.mrb[0].mxu0
    %v2938 = vadd.f32 %v882, %v2937
    %v2939 = vpop.f32.mrb[0].mxu0
    %2940 = vmatprep.mubr.f32.mxu0 0.0
    %2941 = vmatmul.mubr.f32.gmra.mrb[0].mxu0 %v2792
    %v2942 = vpop.f32.mrb[0].mxu0
    %v2943 = vadd.f32 %v882, %v2942
    %v2944 = vpop.f32.mrb[0].mxu0
    %2945 = vmatprep.mubr.f32.mxu0 0.0
    %2946 = vmatmul.mubr.f32.gmra.mrb[0].mxu0 %v2793
    %v2947 = vpop.f32.mrb[0].mxu0
    %v2948 = vadd.f32 %v882, %v2947
    %v2949 = vpop.f32.mrb[0].mxu0
    %2950 = vmatprep.mubr.f32.mxu0 0.0
    %2951 = vmatmul.mubr.f32.gmra.mrb[0].mxu0 %v2794
    %v2952 = vpop.f32.mrb[0].mxu0
    %v2953 = vadd.f32 %v882, %v2952
    %v2954 = vpop.f32.mrb[0].mxu0
    %2955 = vmatprep.mubr.f32.mxu0 0.0
    %2956 = vmatmul.mubr.f32.gmra.mrb[0].mxu0 %v2795
    %v2957 = vpop.f32.mrb[0].mxu0
    %v2958 = vadd.f32 %v882, %v2957
    %v2959 = vpop.f32.mrb[0].mxu0
    %2960 = vmatprep.mubr.f32.mxu0 0.0
    %2961 = vmatmul.mubr.f32.gmra.mrb[0].mxu0 %v2796
    %v2962 = vpop.f32.mrb[0].mxu0
    %v2963 = vadd.f32 %v882, %v2962
    %v2964 = vpop.f32.mrb[0].mxu0
    %2965 = vmatprep.mubr.f32.mxu0 0.0
    %2966 = vmatmul.mubr.f32.gmra.mrb[0].mxu0 %v2797
    %v2967 = vpop.f32.mrb[0].mxu0
    %v2968 = vadd.f32 %v882, %v2967
    %v2969 = vpop.f32.mrb[0].mxu0
    %2970 = vmatprep.mubr.f32.mxu0 0.0
    %2971 = vmatmul.mubr.f32.gmra.mrb[0].mxu0 %v2798
    %v2972 = vpop.f32.mrb[0].mxu0
    %v2973 = vadd.f32 %v882, %v2972
    %v2974 = vpop.f32.mrb[0].mxu0
    %2975 = vmatprep.mubr.f32.mxu0 0.0
    %2976 = vmatmul.mubr.f32.gmra.mrb[0].mxu0 %v2799
    %v2977 = vpop.f32.mrb[0].mxu0
    %v2978 = vadd.f32 %v882, %v2977
    %v2979 = vpop.f32.mrb[0].mxu0
    %2980 = vmatprep.mubr.f32.mxu0 0.0
    %2981 = vmatmul.mubr.f32.gmra.mrb[0].mxu0 %v2800
    %v2982 = vpop.f32.mrb[0].mxu0
    %v2983 = vadd.f32 %v882, %v2982
    %v2984 = vpop.f32.mrb[0].mxu0
    %2985 = vmatprep.mubr.f32.mxu0 0.0
    %2986 = vmatmul.mubr.f32.gmra.mrb[0].mxu0 %v2801
    %v2987 = vpop.f32.mrb[0].mxu0
    %v2988 = vadd.f32 %v882, %v2987
    %v2989 = vpop.f32.mrb[0].mxu0
    %2990 = vmatprep.mubr.f32.mxu0 0.0
    %2991 = vmatmul.mubr.f32.gmra.mrb[0].mxu0 %v2802
    %v2992 = vpop.f32.mrb[0].mxu0
    %v2993 = vadd.f32 %v882, %v2992
    %v2994 = vpop.f32.mrb[0].mxu0
    %2995 = vmatprep.mubr.f32.mxu0 0.0
    %2996 = vmatmul.mubr.f32.gmra.mrb[0].mxu0 %v2803
    %v2997 = vpop.f32.mrb[0].mxu0
    %v2998 = vadd.f32 %v882, %v2997
    %v2999 = vpop.f32.mrb[0].mxu0
    %3000 = vmatprep.mubr.f32.mxu0 0.0
    %3001 = vmatmul.mubr.f32.gmra.mrb[0].mxu0 %v2804
    %v3002 = vpop.f32.mrb[0].mxu0
    %v3003 = vadd.f32 %v882, %v3002
    %v3004 = vpop.f32.mrb[0].mxu0
    %3005 = vmatprep.mubr.f32.mxu0 0.0
    %3006 = vmatmul.mubr.f32.gmra.mrb[0].mxu0 %v2805
    %v3007 = vpop.f32.mrb[0].mxu0
    %v3008 = vadd.f32 %v882, %v3007
    %v3009 = vpop.f32.mrb[0].mxu0
    %3010 = vmatprep.mubr.f32.mxu0 0.0
    %3011 = vmatmul.mubr.f32.gmra.mrb[0].mxu0 %v2806
    %v3012 = vpop.f32.mrb[0].mxu0
    %v3013 = vadd.f32 %v882, %v3012
    %v3014 = vpop.f32.mrb[0].mxu0
    %3015 = vmatprep.mubr.f32.mxu0 0.0
    %3016 = vmatmul.mubr.f32.gmra.mrb[0].mxu0 %v2807
    %v3017 = vpop.f32.mrb[0].mxu0
    %v3018 = vadd.f32 %v882, %v3017
    %v3019 = vpop.f32.mrb[0].mxu0
    %3020 = vmatprep.mubr.f32.mxu0 0.0
    %3021 = vmatmul.mubr.f32.gmra.mrb[0].mxu0 %v2808
    %v3022 = vpop.f32.mrb[0].mxu0
    %v3023 = vadd.f32 %v882, %v3022
    %v3024 = vpop.f32.mrb[0].mxu0
    %3025 = vmatprep.mubr.f32.mxu0 0.0
    %3026 = vmatmul.mubr.f32.gmra.mrb[0].mxu0 %v2809
    %v3027 = vpop.f32.mrb[0].mxu0
    %v3028 = vadd.f32 %v882, %v3027
    %v3029 = vpop.f32.mrb[0].mxu0
    %3030 = vmatprep.mubr.f32.mxu0 0.0
    %3031 = vmatmul.mubr.f32.gmra.mrb[0].mxu0 %v2810
    %v3032 = vpop.f32.mrb[0].mxu0
    %v3033 = vadd.f32 %v882, %v3032
    %v3034 = vpop.f32.mrb[0].mxu0
    %3035 = vdwg.mxu0
    %vm3036 = vcmp.gt.f32.partialorder %v2878, 0.0
    %vm3037 = vcmp.gt.f32.partialorder %v2883, 0.0
    %vm3038 = vcmp.gt.f32.partialorder %v2888, 0.0
    %vm3039 = vcmp.gt.f32.partialorder %v2893, 0.0
    %vm3040 = vcmp.gt.f32.partialorder %v2898, 0.0
    %vm3041 = vcmp.gt.f32.partialorder %v2903, 0.0
    %vm3042 = vcmp.gt.f32.partialorder %v2908, 0.0
    %vm3043 = vcmp.gt.f32.partialorder %v2913, 0.0
    %vm3044 = vcmp.gt.f32.partialorder %v2918, 0.0
    %vm3045 = vcmp.gt.f32.partialorder %v2923, 0.0
    %vm3046 = vcmp.gt.f32.partialorder %v2928, 0.0
    %vm3047 = vcmp.gt.f32.partialorder %v2933, 0.0
    %vm3048 = vcmp.gt.f32.partialorder %v2938, 0.0
    %vm3049 = vcmp.gt.f32.partialorder %v2943, 0.0
    %vm3050 = vcmp.gt.f32.partialorder %v2948, 0.0
    %vm3051 = vcmp.gt.f32.partialorder %v2953, 0.0
    %vm3052 = vcmp.gt.f32.partialorder %v2958, 0.0
    %vm3053 = vcmp.gt.f32.partialorder %v2963, 0.0
    %vm3054 = vcmp.gt.f32.partialorder %v2968, 0.0
    %vm3055 = vcmp.gt.f32.partialorder %v2973, 0.0
    %vm3056 = vcmp.gt.f32.partialorder %v2978, 0.0
    %vm3057 = vcmp.gt.f32.partialorder %v2983, 0.0
    %vm3058 = vcmp.gt.f32.partialorder %v2988, 0.0
    %vm3059 = vcmp.gt.f32.partialorder %v2993, 0.0
    %vm3060 = vcmp.gt.f32.partialorder %v2998, 0.0
    %vm3061 = vcmp.gt.f32.partialorder %v3003, 0.0
    %vm3062 = vcmp.gt.f32.partialorder %v3008, 0.0
    %vm3063 = vcmp.gt.f32.partialorder %v3013, 0.0
    %vm3064 = vcmp.gt.f32.partialorder %v3018, 0.0
    %vm3065 = vcmp.gt.f32.partialorder %v3023, 0.0
    %vm3066 = vcmp.gt.f32.partialorder %v3028, 0.0
    %vm3067 = vcmp.gt.f32.partialorder %v3033, 0.0
    %v3068 = vmul.f32 %v2878, 0.1
    %v3069 = vmul.f32 %v2883, 0.1
    %v3070 = vmul.f32 %v2888, 0.1
    %v3071 = vmul.f32 %v2893, 0.1
    %v3072 = vmul.f32 %v2898, 0.1
    %v3073 = vmul.f32 %v2903, 0.1
    %v3074 = vmul.f32 %v2908, 0.1
    %v3075 = vmul.f32 %v2913, 0.1
    %v3076 = vmul.f32 %v2918, 0.1
    %v3077 = vmul.f32 %v2923, 0.1
    %v3078 = vmul.f32 %v2928, 0.1
    %v3079 = vmul.f32 %v2933, 0.1
    %v3080 = vmul.f32 %v2938, 0.1
    %v3081 = vmul.f32 %v2943, 0.1
    %v3082 = vmul.f32 %v2948, 0.1
    %v3083 = vmul.f32 %v2953, 0.1
    %v3084 = vmul.f32 %v2958, 0.1
    %v3085 = vmul.f32 %v2963, 0.1
    %v3086 = vmul.f32 %v2968, 0.1
    %v3087 = vmul.f32 %v2973, 0.1
    %v3088 = vmul.f32 %v2978, 0.1
    %v3089 = vmul.f32 %v2983, 0.1
    %v3090 = vmul.f32 %v2988, 0.1
    %v3091 = vmul.f32 %v2993, 0.1
    %v3092 = vmul.f32 %v2998, 0.1
    %v3093 = vmul.f32 %v3003, 0.1
    %v3094 = vmul.f32 %v3008, 0.1
    %v3095 = vmul.f32 %v3013, 0.1
    %v3096 = vmul.f32 %v3018, 0.1
    %v3097 = vmul.f32 %v3023, 0.1
    %v3098 = vmul.f32 %v3028, 0.1
    %v3099 = vmul.f32 %v3033, 0.1
    %v3100 = vsel %vm3036, %v2878, %v3068
    %v3101 = vsel %vm3037, %v2883, %v3069
    %v3102 = vsel %vm3038, %v2888, %v3070
    %v3103 = vsel %vm3039, %v2893, %v3071
    %v3104 = vsel %vm3040, %v2898, %v3072
    %v3105 = vsel %vm3041, %v2903, %v3073
    %v3106 = vsel %vm3042, %v2908, %v3074
    %v3107 = vsel %vm3043, %v2913, %v3075
    %v3108 = vsel %vm3044, %v2918, %v3076
    %v3109 = vsel %vm3045, %v2923, %v3077
    %v3110 = vsel %vm3046, %v2928, %v3078
    %v3111 = vsel %vm3047, %v2933, %v3079
    %v3112 = vsel %vm3048, %v2938, %v3080
    %v3113 = vsel %vm3049, %v2943, %v3081
    %v3114 = vsel %vm3050, %v2948, %v3082
    %v3115 = vsel %vm3051, %v2953, %v3083
    %v3116 = vsel %vm3052, %v2958, %v3084
    %v3117 = vsel %vm3053, %v2963, %v3085
    %v3118 = vsel %vm3054, %v2968, %v3086
    %v3119 = vsel %vm3055, %v2973, %v3087
    %v3120 = vsel %vm3056, %v2978, %v3088
    %v3121 = vsel %vm3057, %v2983, %v3089
    %v3122 = vsel %vm3058, %v2988, %v3090
    %v3123 = vsel %vm3059, %v2993, %v3091
    %v3124 = vsel %vm3060, %v2998, %v3092
    %v3125 = vsel %vm3061, %v3003, %v3093
    %v3126 = vsel %vm3062, %v3008, %v3094
    %v3127 = vsel %vm3063, %v3013, %v3095
    %v3128 = vsel %vm3064, %v3018, %v3096
    %v3129 = vsel %vm3065, %v3023, %v3097
    %v3130 = vsel %vm3066, %v3028, %v3098
    %v3131 = vsel %vm3067, %v3033, %v3099
    %3132 = vmatprep.subr.mxu0 0.0
    %3133 = vmatpush1.msra.mxu0 %v1204
    %3134 = vmatprep.subr.mxu0 0.0
    %3135 = vmatpush1.msra.mxu0 %v1205
    %3136 = vmatprep.subr.mxu0 0.0
    %3137 = vmatpush1.msra.mxu0 %v1206
    %3138 = vmatprep.subr.mxu0 0.0
    %3139 = vmatpush1.msra.mxu0 %v1207
    %3140 = vmatprep.subr.mxu0 0.0
    %3141 = vmatpush1.msra.mxu0 %v1208
    %3142 = vmatprep.subr.mxu0 0.0
    %3143 = vmatpush1.msra.mxu0 %v1209
    %3144 = vmatprep.subr.mxu0 0.0
    %3145 = vmatpush1.msra.mxu0 %v1210
    %3146 = vmatprep.subr.mxu0 0.0
    %3147 = vmatpush1.msra.mxu0 %v1211
    %3148 = vmatprep.subr.mxu0 0.0
    %3149 = vmatpush1.msra.mxu0 %v1212
    %3150 = vmatprep.subr.mxu0 0.0
    %3151 = vmatpush1.msra.mxu0 %v1213
    %3152 = vmatprep.subr.mxu0 0.0
    %3153 = vmatpush1.msra.mxu0 %v1214
    %3154 = vmatprep.subr.mxu0 0.0
    %3155 = vmatpush1.msra.mxu0 %v1215
    %3156 = vmatprep.subr.mxu0 0.0
    %3157 = vmatpush1.msra.mxu0 %v1216
    %3158 = vmatprep.subr.mxu0 0.0
    %3159 = vmatpush1.msra.mxu0 %v1217
    %3160 = vmatprep.subr.mxu0 0.0
    %3161 = vmatpush1.msra.mxu0 %v1218
    %3162 = vmatprep.subr.mxu0 0.0
    %3163 = vmatpush1.msra.mxu0 %v1219
    %3164 = vmatprep.subr.mxu0 0.0
    %3165 = vmatpush1.msra.mxu0 0.0
    %3166 = vmatprep.subr.mxu0 0.0
    %3167 = vmatpush1.msra.mxu0 0.0
    %3168 = vmatprep.subr.mxu0 0.0
    %3169 = vmatpush1.msra.mxu0 0.0
    %3170 = vmatprep.subr.mxu0 0.0
    %3171 = vmatpush1.msra.mxu0 0.0
    %3172 = vmatprep.subr.mxu0 0.0
    %3173 = vmatpush1.msra.mxu0 0.0
    %3174 = vmatprep.subr.mxu0 0.0
    %3175 = vmatpush1.msra.mxu0 0.0
    %3176 = vmatprep.subr.mxu0 0.0
    %3177 = vmatpush1.msra.mxu0 0.0
    %3178 = vmatprep.subr.mxu0 0.0
    %3179 = vmatpush1.msra.mxu0 0.0
    %3180 = vmatprep.subr.mxu0 0.0
    %3181 = vmatpush1.msra.mxu0 0.0
    %3182 = vmatprep.subr.mxu0 0.0
    %3183 = vmatpush1.msra.mxu0 0.0
    %3184 = vmatprep.subr.mxu0 0.0
    %3185 = vmatpush1.msra.mxu0 0.0
    %3186 = vmatprep.subr.mxu0 0.0
    %3187 = vmatpush1.msra.mxu0 0.0
    %3188 = vmatprep.subr.mxu0 0.0
    %3189 = vmatpush1.msra.mxu0 0.0
    %3190 = vmatprep.subr.mxu0 0.0
    %3191 = vmatpush1.msra.mxu0 0.0
    %3192 = vmatprep.subr.mxu0 0.0
    %3193 = vmatpush1.msra.mxu0 0.0
    %3194 = vmatprep.subr.mxu0 0.0
    %3195 = vmatpush1.msra.mxu0 0.0
    %3196 = vmatprep.mubr.f32.mxu0 0.0
    %3197 = vmatmul.mubr.f32.gmra.mrb[0].mxu0 %v3100
    %v3198 = vpop.f32.mrb[0].mxu0
    %v3199 = vadd.f32 %v1224, %v3198
    %v3200 = vpop.f32.mrb[0].mxu0
    %3201 = vmatprep.mubr.f32.mxu0 0.0
    %3202 = vmatmul.mubr.f32.gmra.mrb[0].mxu0 %v3101
    %v3203 = vpop.f32.mrb[0].mxu0
    %v3204 = vadd.f32 %v1224, %v3203
    %v3205 = vpop.f32.mrb[0].mxu0
    %3206 = vmatprep.mubr.f32.mxu0 0.0
    %3207 = vmatmul.mubr.f32.gmra.mrb[0].mxu0 %v3102
    %v3208 = vpop.f32.mrb[0].mxu0
    %v3209 = vadd.f32 %v1224, %v3208
    %v3210 = vpop.f32.mrb[0].mxu0
    %3211 = vmatprep.mubr.f32.mxu0 0.0
    %3212 = vmatmul.mubr.f32.gmra.mrb[0].mxu0 %v3103
    %v3213 = vpop.f32.mrb[0].mxu0
    %v3214 = vadd.f32 %v1224, %v3213
    %v3215 = vpop.f32.mrb[0].mxu0
    %3216 = vmatprep.mubr.f32.mxu0 0.0
    %3217 = vmatmul.mubr.f32.gmra.mrb[0].mxu0 %v3104
    %v3218 = vpop.f32.mrb[0].mxu0
    %v3219 = vadd.f32 %v1224, %v3218
    %v3220 = vpop.f32.mrb[0].mxu0
    %3221 = vmatprep.mubr.f32.mxu0 0.0
    %3222 = vmatmul.mubr.f32.gmra.mrb[0].mxu0 %v3105
    %v3223 = vpop.f32.mrb[0].mxu0
    %v3224 = vadd.f32 %v1224, %v3223
    %v3225 = vpop.f32.mrb[0].mxu0
    %3226 = vmatprep.mubr.f32.mxu0 0.0
    %3227 = vmatmul.mubr.f32.gmra.mrb[0].mxu0 %v3106
    %v3228 = vpop.f32.mrb[0].mxu0
    %v3229 = vadd.f32 %v1224, %v3228
    %v3230 = vpop.f32.mrb[0].mxu0
    %3231 = vmatprep.mubr.f32.mxu0 0.0
    %3232 = vmatmul.mubr.f32.gmra.mrb[0].mxu0 %v3107
    %v3233 = vpop.f32.mrb[0].mxu0
    %v3234 = vadd.f32 %v1224, %v3233
    %v3235 = vpop.f32.mrb[0].mxu0
    %3236 = vmatprep.mubr.f32.mxu0 0.0
    %3237 = vmatmul.mubr.f32.gmra.mrb[0].mxu0 %v3108
    %v3238 = vpop.f32.mrb[0].mxu0
    %v3239 = vadd.f32 %v1224, %v3238
    %v3240 = vpop.f32.mrb[0].mxu0
    %3241 = vmatprep.mubr.f32.mxu0 0.0
    %3242 = vmatmul.mubr.f32.gmra.mrb[0].mxu0 %v3109
    %v3243 = vpop.f32.mrb[0].mxu0
    %v3244 = vadd.f32 %v1224, %v3243
    %v3245 = vpop.f32.mrb[0].mxu0
    %3246 = vmatprep.mubr.f32.mxu0 0.0
    %3247 = vmatmul.mubr.f32.gmra.mrb[0].mxu0 %v3110
    %v3248 = vpop.f32.mrb[0].mxu0
    %v3249 = vadd.f32 %v1224, %v3248
    %v3250 = vpop.f32.mrb[0].mxu0
    %3251 = vmatprep.mubr.f32.mxu0 0.0
    %3252 = vmatmul.mubr.f32.gmra.mrb[0].mxu0 %v3111
    %v3253 = vpop.f32.mrb[0].mxu0
    %v3254 = vadd.f32 %v1224, %v3253
    %v3255 = vpop.f32.mrb[0].mxu0
    %3256 = vmatprep.mubr.f32.mxu0 0.0
    %3257 = vmatmul.mubr.f32.gmra.mrb[0].mxu0 %v3112
    %v3258 = vpop.f32.mrb[0].mxu0
    %v3259 = vadd.f32 %v1224, %v3258
    %v3260 = vpop.f32.mrb[0].mxu0
    %3261 = vmatprep.mubr.f32.mxu0 0.0
    %3262 = vmatmul.mubr.f32.gmra.mrb[0].mxu0 %v3113
    %v3263 = vpop.f32.mrb[0].mxu0
    %v3264 = vadd.f32 %v1224, %v3263
    %v3265 = vpop.f32.mrb[0].mxu0
    %3266 = vmatprep.mubr.f32.mxu0 0.0
    %3267 = vmatmul.mubr.f32.gmra.mrb[0].mxu0 %v3114
    %v3268 = vpop.f32.mrb[0].mxu0
    %v3269 = vadd.f32 %v1224, %v3268
    %v3270 = vpop.f32.mrb[0].mxu0
    %3271 = vmatprep.mubr.f32.mxu0 0.0
    %3272 = vmatmul.mubr.f32.gmra.mrb[0].mxu0 %v3115
    %v3273 = vpop.f32.mrb[0].mxu0
    %v3274 = vadd.f32 %v1224, %v3273
    %v3275 = vpop.f32.mrb[0].mxu0
    %3276 = vmatprep.mubr.f32.mxu0 0.0
    %3277 = vmatmul.mubr.f32.gmra.mrb[0].mxu0 %v3116
    %v3278 = vpop.f32.mrb[0].mxu0
    %v3279 = vadd.f32 %v1224, %v3278
    %v3280 = vpop.f32.mrb[0].mxu0
    %3281 = vmatprep.mubr.f32.mxu0 0.0
    %3282 = vmatmul.mubr.f32.gmra.mrb[0].mxu0 %v3117
    %v3283 = vpop.f32.mrb[0].mxu0
    %v3284 = vadd.f32 %v1224, %v3283
    %v3285 = vpop.f32.mrb[0].mxu0
    %3286 = vmatprep.mubr.f32.mxu0 0.0
    %3287 = vmatmul.mubr.f32.gmra.mrb[0].mxu0 %v3118
    %v3288 = vpop.f32.mrb[0].mxu0
    %v3289 = vadd.f32 %v1224, %v3288
    %v3290 = vpop.f32.mrb[0].mxu0
    %3291 = vmatprep.mubr.f32.mxu0 0.0
    %3292 = vmatmul.mubr.f32.gmra.mrb[0].mxu0 %v3119
    %v3293 = vpop.f32.mrb[0].mxu0
    %v3294 = vadd.f32 %v1224, %v3293
    %v3295 = vpop.f32.mrb[0].mxu0
    %3296 = vmatprep.mubr.f32.mxu0 0.0
    %3297 = vmatmul.mubr.f32.gmra.mrb[0].mxu0 %v3120
    %v3298 = vpop.f32.mrb[0].mxu0
    %v3299 = vadd.f32 %v1224, %v3298
    %v3300 = vpop.f32.mrb[0].mxu0
    %3301 = vmatprep.mubr.f32.mxu0 0.0
    %3302 = vmatmul.mubr.f32.gmra.mrb[0].mxu0 %v3121
    %v3303 = vpop.f32.mrb[0].mxu0
    %v3304 = vadd.f32 %v1224, %v3303
    %v3305 = vpop.f32.mrb[0].mxu0
    %3306 = vmatprep.mubr.f32.mxu0 0.0
    %3307 = vmatmul.mubr.f32.gmra.mrb[0].mxu0 %v3122
    %v3308 = vpop.f32.mrb[0].mxu0
    %v3309 = vadd.f32 %v1224, %v3308
    %v3310 = vpop.f32.mrb[0].mxu0
    %3311 = vmatprep.mubr.f32.mxu0 0.0
    %3312 = vmatmul.mubr.f32.gmra.mrb[0].mxu0 %v3123
    %v3313 = vpop.f32.mrb[0].mxu0
    %v3314 = vadd.f32 %v1224, %v3313
    %v3315 = vpop.f32.mrb[0].mxu0
    %3316 = vmatprep.mubr.f32.mxu0 0.0
    %3317 = vmatmul.mubr.f32.gmra.mrb[0].mxu0 %v3124
    %v3318 = vpop.f32.mrb[0].mxu0
    %v3319 = vadd.f32 %v1224, %v3318
    %v3320 = vpop.f32.mrb[0].mxu0
    %3321 = vmatprep.mubr.f32.mxu0 0.0
    %3322 = vmatmul.mubr.f32.gmra.mrb[0].mxu0 %v3125
    %v3323 = vpop.f32.mrb[0].mxu0
    %v3324 = vadd.f32 %v1224, %v3323
    %v3325 = vpop.f32.mrb[0].mxu0
    %3326 = vmatprep.mubr.f32.mxu0 0.0
    %3327 = vmatmul.mubr.f32.gmra.mrb[0].mxu0 %v3126
    %v3328 = vpop.f32.mrb[0].mxu0
    %v3329 = vadd.f32 %v1224, %v3328
    %v3330 = vpop.f32.mrb[0].mxu0
    %3331 = vmatprep.mubr.f32.mxu0 0.0
    %3332 = vmatmul.mubr.f32.gmra.mrb[0].mxu0 %v3127
    %v3333 = vpop.f32.mrb[0].mxu0
    %v3334 = vadd.f32 %v1224, %v3333
    %v3335 = vpop.f32.mrb[0].mxu0
    %3336 = vmatprep.mubr.f32.mxu0 0.0
    %3337 = vmatmul.mubr.f32.gmra.mrb[0].mxu0 %v3128
    %v3338 = vpop.f32.mrb[0].mxu0
    %v3339 = vadd.f32 %v1224, %v3338
    %v3340 = vpop.f32.mrb[0].mxu0
    %3341 = vmatprep.mubr.f32.mxu0 0.0
    %3342 = vmatmul.mubr.f32.gmra.mrb[0].mxu0 %v3129
    %v3343 = vpop.f32.mrb[0].mxu0
    %v3344 = vadd.f32 %v1224, %v3343
    %v3345 = vpop.f32.mrb[0].mxu0
    %3346 = vmatprep.mubr.f32.mxu0 0.0
    %3347 = vmatmul.mubr.f32.gmra.mrb[0].mxu0 %v3130
    %v3348 = vpop.f32.mrb[0].mxu0
    %v3349 = vadd.f32 %v1224, %v3348
    %v3350 = vpop.f32.mrb[0].mxu0
    %3351 = vmatprep.mubr.f32.mxu0 0.0
    %3352 = vmatmul.mubr.f32.gmra.mrb[0].mxu0 %v3131
    %v3353 = vpop.f32.mrb[0].mxu0
    %v3354 = vadd.f32 %v1224, %v3353
    %v3355 = vpop.f32.mrb[0].mxu0
    %3356 = vdwg.mxu0
    %v3357 = vadd.f32 %v3199, %v3100
    %v3358 = vadd.f32 %v3204, %v3101
    %v3359 = vadd.f32 %v3209, %v3102
    %v3360 = vadd.f32 %v3214, %v3103
    %v3361 = vadd.f32 %v3219, %v3104
    %v3362 = vadd.f32 %v3224, %v3105
    %v3363 = vadd.f32 %v3229, %v3106
    %v3364 = vadd.f32 %v3234, %v3107
    %v3365 = vadd.f32 %v3239, %v3108
    %v3366 = vadd.f32 %v3244, %v3109
    %v3367 = vadd.f32 %v3249, %v3110
    %v3368 = vadd.f32 %v3254, %v3111
    %v3369 = vadd.f32 %v3259, %v3112
    %v3370 = vadd.f32 %v3264, %v3113
    %v3371 = vadd.f32 %v3269, %v3114
    %v3372 = vadd.f32 %v3274, %v3115
    %v3373 = vadd.f32 %v3279, %v3116
    %v3374 = vadd.f32 %v3284, %v3117
    %v3375 = vadd.f32 %v3289, %v3118
    %v3376 = vadd.f32 %v3294, %v3119
    %v3377 = vadd.f32 %v3299, %v3120
    %v3378 = vadd.f32 %v3304, %v3121
    %v3379 = vadd.f32 %v3309, %v3122
    %v3380 = vadd.f32 %v3314, %v3123
    %v3381 = vadd.f32 %v3319, %v3124
    %v3382 = vadd.f32 %v3324, %v3125
    %v3383 = vadd.f32 %v3329, %v3126
    %v3384 = vadd.f32 %v3334, %v3127
    %v3385 = vadd.f32 %v3339, %v3128
    %v3386 = vadd.f32 %v3344, %v3129
    %v3387 = vadd.f32 %v3349, %v3130
    %v3388 = vadd.f32 %v3354, %v3131
    %vm3389 = vcmp.gt.f32.partialorder %v3357, 0.0
    %vm3390 = vcmp.gt.f32.partialorder %v3358, 0.0
    %vm3391 = vcmp.gt.f32.partialorder %v3359, 0.0
    %vm3392 = vcmp.gt.f32.partialorder %v3360, 0.0
    %vm3393 = vcmp.gt.f32.partialorder %v3361, 0.0
    %vm3394 = vcmp.gt.f32.partialorder %v3362, 0.0
    %vm3395 = vcmp.gt.f32.partialorder %v3363, 0.0
    %vm3396 = vcmp.gt.f32.partialorder %v3364, 0.0
    %vm3397 = vcmp.gt.f32.partialorder %v3365, 0.0
    %vm3398 = vcmp.gt.f32.partialorder %v3366, 0.0
    %vm3399 = vcmp.gt.f32.partialorder %v3367, 0.0
    %vm3400 = vcmp.gt.f32.partialorder %v3368, 0.0
    %vm3401 = vcmp.gt.f32.partialorder %v3369, 0.0
    %vm3402 = vcmp.gt.f32.partialorder %v3370, 0.0
    %vm3403 = vcmp.gt.f32.partialorder %v3371, 0.0
    %vm3404 = vcmp.gt.f32.partialorder %v3372, 0.0
    %vm3405 = vcmp.gt.f32.partialorder %v3373, 0.0
    %vm3406 = vcmp.gt.f32.partialorder %v3374, 0.0
    %vm3407 = vcmp.gt.f32.partialorder %v3375, 0.0
    %vm3408 = vcmp.gt.f32.partialorder %v3376, 0.0
    %vm3409 = vcmp.gt.f32.partialorder %v3377, 0.0
    %vm3410 = vcmp.gt.f32.partialorder %v3378, 0.0
    %vm3411 = vcmp.gt.f32.partialorder %v3379, 0.0
    %vm3412 = vcmp.gt.f32.partialorder %v3380, 0.0
    %vm3413 = vcmp.gt.f32.partialorder %v3381, 0.0
    %vm3414 = vcmp.gt.f32.partialorder %v3382, 0.0
    %vm3415 = vcmp.gt.f32.partialorder %v3383, 0.0
    %vm3416 = vcmp.gt.f32.partialorder %v3384, 0.0
    %vm3417 = vcmp.gt.f32.partialorder %v3385, 0.0
    %vm3418 = vcmp.gt.f32.partialorder %v3386, 0.0
    %vm3419 = vcmp.gt.f32.partialorder %v3387, 0.0
    %vm3420 = vcmp.gt.f32.partialorder %v3388, 0.0
    %v3421 = vmul.f32 %v3357, 0.1
    %v3422 = vmul.f32 %v3358, 0.1
    %v3423 = vmul.f32 %v3359, 0.1
    %v3424 = vmul.f32 %v3360, 0.1
    %v3425 = vmul.f32 %v3361, 0.1
    %v3426 = vmul.f32 %v3362, 0.1
    %v3427 = vmul.f32 %v3363, 0.1
    %v3428 = vmul.f32 %v3364, 0.1
    %v3429 = vmul.f32 %v3365, 0.1
    %v3430 = vmul.f32 %v3366, 0.1
    %v3431 = vmul.f32 %v3367, 0.1
    %v3432 = vmul.f32 %v3368, 0.1
    %v3433 = vmul.f32 %v3369, 0.1
    %v3434 = vmul.f32 %v3370, 0.1
    %v3435 = vmul.f32 %v3371, 0.1
    %v3436 = vmul.f32 %v3372, 0.1
    %v3437 = vmul.f32 %v3373, 0.1
    %v3438 = vmul.f32 %v3374, 0.1
    %v3439 = vmul.f32 %v3375, 0.1
    %v3440 = vmul.f32 %v3376, 0.1
    %v3441 = vmul.f32 %v3377, 0.1
    %v3442 = vmul.f32 %v3378, 0.1
    %v3443 = vmul.f32 %v3379, 0.1
    %v3444 = vmul.f32 %v3380, 0.1
    %v3445 = vmul.f32 %v3381, 0.1
    %v3446 = vmul.f32 %v3382, 0.1
    %v3447 = vmul.f32 %v3383, 0.1
    %v3448 = vmul.f32 %v3384, 0.1
    %v3449 = vmul.f32 %v3385, 0.1
    %v3450 = vmul.f32 %v3386, 0.1
    %v3451 = vmul.f32 %v3387, 0.1
    %v3452 = vmul.f32 %v3388, 0.1
    %v3453 = vsel %vm3389, %v3357, %v3421
    %v3454 = vsel %vm3390, %v3358, %v3422
    %v3455 = vsel %vm3391, %v3359, %v3423
    %v3456 = vsel %vm3392, %v3360, %v3424
    %v3457 = vsel %vm3393, %v3361, %v3425
    %v3458 = vsel %vm3394, %v3362, %v3426
    %v3459 = vsel %vm3395, %v3363, %v3427
    %v3460 = vsel %vm3396, %v3364, %v3428
    %v3461 = vsel %vm3397, %v3365, %v3429
    %v3462 = vsel %vm3398, %v3366, %v3430
    %v3463 = vsel %vm3399, %v3367, %v3431
    %v3464 = vsel %vm3400, %v3368, %v3432
    %v3465 = vsel %vm3401, %v3369, %v3433
    %v3466 = vsel %vm3402, %v3370, %v3434
    %v3467 = vsel %vm3403, %v3371, %v3435
    %v3468 = vsel %vm3404, %v3372, %v3436
    %v3469 = vsel %vm3405, %v3373, %v3437
    %v3470 = vsel %vm3406, %v3374, %v3438
    %v3471 = vsel %vm3407, %v3375, %v3439
    %v3472 = vsel %vm3408, %v3376, %v3440
    %v3473 = vsel %vm3409, %v3377, %v3441
    %v3474 = vsel %vm3410, %v3378, %v3442
    %v3475 = vsel %vm3411, %v3379, %v3443
    %v3476 = vsel %vm3412, %v3380, %v3444
    %v3477 = vsel %vm3413, %v3381, %v3445
    %v3478 = vsel %vm3414, %v3382, %v3446
    %v3479 = vsel %vm3415, %v3383, %v3447
    %v3480 = vsel %vm3416, %v3384, %v3448
    %v3481 = vsel %vm3417, %v3385, %v3449
    %v3482 = vsel %vm3418, %v3386, %v3450
    %v3483 = vsel %vm3419, %v3387, %v3451
    %v3484 = vsel %vm3420, %v3388, %v3452
    %3485 = vmatprep.subr.mxu0 0.0
    %3486 = vmatpush1.msra.mxu0 %v1578
    %3487 = vmatprep.subr.mxu0 0.0
    %3488 = vmatpush1.msra.mxu0 %v1579
    %3489 = vmatprep.subr.mxu0 0.0
    %3490 = vmatpush1.msra.mxu0 %v1580
    %3491 = vmatprep.subr.mxu0 0.0
    %3492 = vmatpush1.msra.mxu0 %v1581
    %3493 = vmatprep.subr.mxu0 0.0
    %3494 = vmatpush1.msra.mxu0 %v1582
    %3495 = vmatprep.subr.mxu0 0.0
    %3496 = vmatpush1.msra.mxu0 %v1583
    %3497 = vmatprep.subr.mxu0 0.0
    %3498 = vmatpush1.msra.mxu0 %v1584
    %3499 = vmatprep.subr.mxu0 0.0
    %3500 = vmatpush1.msra.mxu0 %v1585
    %3501 = vmatprep.subr.mxu0 0.0
    %3502 = vmatpush1.msra.mxu0 %v1586
    %3503 = vmatprep.subr.mxu0 0.0
    %3504 = vmatpush1.msra.mxu0 %v1587
    %3505 = vmatprep.subr.mxu0 0.0
    %3506 = vmatpush1.msra.mxu0 %v1588
    %3507 = vmatprep.subr.mxu0 0.0
    %3508 = vmatpush1.msra.mxu0 %v1589
    %3509 = vmatprep.subr.mxu0 0.0
    %3510 = vmatpush1.msra.mxu0 %v1590
    %3511 = vmatprep.subr.mxu0 0.0
    %3512 = vmatpush1.msra.mxu0 %v1591
    %3513 = vmatprep.subr.mxu0 0.0
    %3514 = vmatpush1.msra.mxu0 %v1592
    %3515 = vmatprep.subr.mxu0 0.0
    %3516 = vmatpush1.msra.mxu0 %v1593
    %3517 = vmatprep.subr.mxu0 0.0
    %3518 = vmatpush1.msra.mxu0 0.0
    %3519 = vmatprep.subr.mxu0 0.0
    %3520 = vmatpush1.msra.mxu0 0.0
    %3521 = vmatprep.subr.mxu0 0.0
    %3522 = vmatpush1.msra.mxu0 0.0
    %3523 = vmatprep.subr.mxu0 0.0
    %3524 = vmatpush1.msra.mxu0 0.0
    %3525 = vmatprep.subr.mxu0 0.0
    %3526 = vmatpush1.msra.mxu0 0.0
    %3527 = vmatprep.subr.mxu0 0.0
    %3528 = vmatpush1.msra.mxu0 0.0
    %3529 = vmatprep.subr.mxu0 0.0
    %3530 = vmatpush1.msra.mxu0 0.0
    %3531 = vmatprep.subr.mxu0 0.0
    %3532 = vmatpush1.msra.mxu0 0.0
    %3533 = vmatprep.subr.mxu0 0.0
    %3534 = vmatpush1.msra.mxu0 0.0
    %3535 = vmatprep.subr.mxu0 0.0
    %3536 = vmatpush1.msra.mxu0 0.0
    %3537 = vmatprep.subr.mxu0 0.0
    %3538 = vmatpush1.msra.mxu0 0.0
    %3539 = vmatprep.subr.mxu0 0.0
    %3540 = vmatpush1.msra.mxu0 0.0
    %3541 = vmatprep.subr.mxu0 0.0
    %3542 = vmatpush1.msra.mxu0 0.0
    %3543 = vmatprep.subr.mxu0 0.0
    %3544 = vmatpush1.msra.mxu0 0.0
    %3545 = vmatprep.subr.mxu0 0.0
    %3546 = vmatpush1.msra.mxu0 0.0
    %3547 = vmatprep.subr.mxu0 0.0
    %3548 = vmatpush1.msra.mxu0 0.0
    %3549 = vmatprep.mubr.f32.mxu0 0.0
    %3550 = vmatmul.mubr.f32.gmra.mrb[0].mxu0 %v3453
    %v3551 = vpop.f32.mrb[0].mxu0
    %v3552 = vadd.f32 %v1598, %v3551
    %v3553 = vpop.f32.mrb[0].mxu0
    %3554 = vmatprep.mubr.f32.mxu0 0.0
    %3555 = vmatmul.mubr.f32.gmra.mrb[0].mxu0 %v3454
    %v3556 = vpop.f32.mrb[0].mxu0
    %v3557 = vadd.f32 %v1598, %v3556
    %v3558 = vpop.f32.mrb[0].mxu0
    %3559 = vmatprep.mubr.f32.mxu0 0.0
    %3560 = vmatmul.mubr.f32.gmra.mrb[0].mxu0 %v3455
    %v3561 = vpop.f32.mrb[0].mxu0
    %v3562 = vadd.f32 %v1598, %v3561
    %v3563 = vpop.f32.mrb[0].mxu0
    %3564 = vmatprep.mubr.f32.mxu0 0.0
    %3565 = vmatmul.mubr.f32.gmra.mrb[0].mxu0 %v3456
    %v3566 = vpop.f32.mrb[0].mxu0
    %v3567 = vadd.f32 %v1598, %v3566
    %v3568 = vpop.f32.mrb[0].mxu0
    %3569 = vmatprep.mubr.f32.mxu0 0.0
    %3570 = vmatmul.mubr.f32.gmra.mrb[0].mxu0 %v3457
    %v3571 = vpop.f32.mrb[0].mxu0
    %v3572 = vadd.f32 %v1598, %v3571
    %v3573 = vpop.f32.mrb[0].mxu0
    %3574 = vmatprep.mubr.f32.mxu0 0.0
    %3575 = vmatmul.mubr.f32.gmra.mrb[0].mxu0 %v3458
    %v3576 = vpop.f32.mrb[0].mxu0
    %v3577 = vadd.f32 %v1598, %v3576
    %v3578 = vpop.f32.mrb[0].mxu0
    %3579 = vmatprep.mubr.f32.mxu0 0.0
    %3580 = vmatmul.mubr.f32.gmra.mrb[0].mxu0 %v3459
    %v3581 = vpop.f32.mrb[0].mxu0
    %v3582 = vadd.f32 %v1598, %v3581
    %v3583 = vpop.f32.mrb[0].mxu0
    %3584 = vmatprep.mubr.f32.mxu0 0.0
    %3585 = vmatmul.mubr.f32.gmra.mrb[0].mxu0 %v3460
    %v3586 = vpop.f32.mrb[0].mxu0
    %v3587 = vadd.f32 %v1598, %v3586
    %v3588 = vpop.f32.mrb[0].mxu0
    %3589 = vmatprep.mubr.f32.mxu0 0.0
    %3590 = vmatmul.mubr.f32.gmra.mrb[0].mxu0 %v3461
    %v3591 = vpop.f32.mrb[0].mxu0
    %v3592 = vadd.f32 %v1598, %v3591
    %v3593 = vpop.f32.mrb[0].mxu0
    %3594 = vmatprep.mubr.f32.mxu0 0.0
    %3595 = vmatmul.mubr.f32.gmra.mrb[0].mxu0 %v3462
    %v3596 = vpop.f32.mrb[0].mxu0
    %v3597 = vadd.f32 %v1598, %v3596
    %v3598 = vpop.f32.mrb[0].mxu0
    %3599 = vmatprep.mubr.f32.mxu0 0.0
    %3600 = vmatmul.mubr.f32.gmra.mrb[0].mxu0 %v3463
    %v3601 = vpop.f32.mrb[0].mxu0
    %v3602 = vadd.f32 %v1598, %v3601
    %v3603 = vpop.f32.mrb[0].mxu0
    %3604 = vmatprep.mubr.f32.mxu0 0.0
    %3605 = vmatmul.mubr.f32.gmra.mrb[0].mxu0 %v3464
    %v3606 = vpop.f32.mrb[0].mxu0
    %v3607 = vadd.f32 %v1598, %v3606
    %v3608 = vpop.f32.mrb[0].mxu0
    %3609 = vmatprep.mubr.f32.mxu0 0.0
    %3610 = vmatmul.mubr.f32.gmra.mrb[0].mxu0 %v3465
    %v3611 = vpop.f32.mrb[0].mxu0
    %v3612 = vadd.f32 %v1598, %v3611
    %v3613 = vpop.f32.mrb[0].mxu0
    %3614 = vmatprep.mubr.f32.mxu0 0.0
    %3615 = vmatmul.mubr.f32.gmra.mrb[0].mxu0 %v3466
    %v3616 = vpop.f32.mrb[0].mxu0
    %v3617 = vadd.f32 %v1598, %v3616
    %v3618 = vpop.f32.mrb[0].mxu0
    %3619 = vmatprep.mubr.f32.mxu0 0.0
    %3620 = vmatmul.mubr.f32.gmra.mrb[0].mxu0 %v3467
    %v3621 = vpop.f32.mrb[0].mxu0
    %v3622 = vadd.f32 %v1598, %v3621
    %v3623 = vpop.f32.mrb[0].mxu0
    %3624 = vmatprep.mubr.f32.mxu0 0.0
    %3625 = vmatmul.mubr.f32.gmra.mrb[0].mxu0 %v3468
    %v3626 = vpop.f32.mrb[0].mxu0
    %v3627 = vadd.f32 %v1598, %v3626
    %v3628 = vpop.f32.mrb[0].mxu0
    %3629 = vmatprep.mubr.f32.mxu0 0.0
    %3630 = vmatmul.mubr.f32.gmra.mrb[0].mxu0 %v3469
    %v3631 = vpop.f32.mrb[0].mxu0
    %v3632 = vadd.f32 %v1598, %v3631
    %v3633 = vpop.f32.mrb[0].mxu0
    %3634 = vmatprep.mubr.f32.mxu0 0.0
    %3635 = vmatmul.mubr.f32.gmra.mrb[0].mxu0 %v3470
    %v3636 = vpop.f32.mrb[0].mxu0
    %v3637 = vadd.f32 %v1598, %v3636
    %v3638 = vpop.f32.mrb[0].mxu0
    %3639 = vmatprep.mubr.f32.mxu0 0.0
    %3640 = vmatmul.mubr.f32.gmra.mrb[0].mxu0 %v3471
    %v3641 = vpop.f32.mrb[0].mxu0
    %v3642 = vadd.f32 %v1598, %v3641
    %v3643 = vpop.f32.mrb[0].mxu0
    %3644 = vmatprep.mubr.f32.mxu0 0.0
    %3645 = vmatmul.mubr.f32.gmra.mrb[0].mxu0 %v3472
    %v3646 = vpop.f32.mrb[0].mxu0
    %v3647 = vadd.f32 %v1598, %v3646
    %v3648 = vpop.f32.mrb[0].mxu0
    %3649 = vmatprep.mubr.f32.mxu0 0.0
    %3650 = vmatmul.mubr.f32.gmra.mrb[0].mxu0 %v3473
    %v3651 = vpop.f32.mrb[0].mxu0
    %v3652 = vadd.f32 %v1598, %v3651
    %v3653 = vpop.f32.mrb[0].mxu0
    %3654 = vmatprep.mubr.f32.mxu0 0.0
    %3655 = vmatmul.mubr.f32.gmra.mrb[0].mxu0 %v3474
    %v3656 = vpop.f32.mrb[0].mxu0
    %v3657 = vadd.f32 %v1598, %v3656
    %v3658 = vpop.f32.mrb[0].mxu0
    %3659 = vmatprep.mubr.f32.mxu0 0.0
    %3660 = vmatmul.mubr.f32.gmra.mrb[0].mxu0 %v3475
    %v3661 = vpop.f32.mrb[0].mxu0
    %v3662 = vadd.f32 %v1598, %v3661
    %v3663 = vpop.f32.mrb[0].mxu0
    %3664 = vmatprep.mubr.f32.mxu0 0.0
    %3665 = vmatmul.mubr.f32.gmra.mrb[0].mxu0 %v3476
    %v3666 = vpop.f32.mrb[0].mxu0
    %v3667 = vadd.f32 %v1598, %v3666
    %v3668 = vpop.f32.mrb[0].mxu0
    %3669 = vmatprep.mubr.f32.mxu0 0.0
    %3670 = vmatmul.mubr.f32.gmra.mrb[0].mxu0 %v3477
    %v3671 = vpop.f32.mrb[0].mxu0
    %v3672 = vadd.f32 %v1598, %v3671
    %v3673 = vpop.f32.mrb[0].mxu0
    %3674 = vmatprep.mubr.f32.mxu0 0.0
    %3675 = vmatmul.mubr.f32.gmra.mrb[0].mxu0 %v3478
    %v3676 = vpop.f32.mrb[0].mxu0
    %v3677 = vadd.f32 %v1598, %v3676
    %v3678 = vpop.f32.mrb[0].mxu0
    %3679 = vmatprep.mubr.f32.mxu0 0.0
    %3680 = vmatmul.mubr.f32.gmra.mrb[0].mxu0 %v3479
    %v3681 = vpop.f32.mrb[0].mxu0
    %v3682 = vadd.f32 %v1598, %v3681
    %v3683 = vpop.f32.mrb[0].mxu0
    %3684 = vmatprep.mubr.f32.mxu0 0.0
    %3685 = vmatmul.mubr.f32.gmra.mrb[0].mxu0 %v3480
    %v3686 = vpop.f32.mrb[0].mxu0
    %v3687 = vadd.f32 %v1598, %v3686
    %v3688 = vpop.f32.mrb[0].mxu0
    %3689 = vmatprep.mubr.f32.mxu0 0.0
    %3690 = vmatmul.mubr.f32.gmra.mrb[0].mxu0 %v3481
    %v3691 = vpop.f32.mrb[0].mxu0
    %v3692 = vadd.f32 %v1598, %v3691
    %v3693 = vpop.f32.mrb[0].mxu0
    %3694 = vmatprep.mubr.f32.mxu0 0.0
    %3695 = vmatmul.mubr.f32.gmra.mrb[0].mxu0 %v3482
    %v3696 = vpop.f32.mrb[0].mxu0
    %v3697 = vadd.f32 %v1598, %v3696
    %v3698 = vpop.f32.mrb[0].mxu0
    %3699 = vmatprep.mubr.f32.mxu0 0.0
    %3700 = vmatmul.mubr.f32.gmra.mrb[0].mxu0 %v3483
    %v3701 = vpop.f32.mrb[0].mxu0
    %v3702 = vadd.f32 %v1598, %v3701
    %v3703 = vpop.f32.mrb[0].mxu0
    %3704 = vmatprep.mubr.f32.mxu0 0.0
    %3705 = vmatmul.mubr.f32.gmra.mrb[0].mxu0 %v3484
    %v3706 = vpop.f32.mrb[0].mxu0
    %v3707 = vadd.f32 %v1598, %v3706
    %v3708 = vpop.f32.mrb[0].mxu0
    %3709 = vdwg.mxu0
    %vm3710 = vcmp.gt.f32.partialorder %v3552, 0.0
    %vm3711 = vcmp.gt.f32.partialorder %v3557, 0.0
    %vm3712 = vcmp.gt.f32.partialorder %v3562, 0.0
    %vm3713 = vcmp.gt.f32.partialorder %v3567, 0.0
    %vm3714 = vcmp.gt.f32.partialorder %v3572, 0.0
    %vm3715 = vcmp.gt.f32.partialorder %v3577, 0.0
    %vm3716 = vcmp.gt.f32.partialorder %v3582, 0.0
    %vm3717 = vcmp.gt.f32.partialorder %v3587, 0.0
    %vm3718 = vcmp.gt.f32.partialorder %v3592, 0.0
    %vm3719 = vcmp.gt.f32.partialorder %v3597, 0.0
    %vm3720 = vcmp.gt.f32.partialorder %v3602, 0.0
    %vm3721 = vcmp.gt.f32.partialorder %v3607, 0.0
    %vm3722 = vcmp.gt.f32.partialorder %v3612, 0.0
    %vm3723 = vcmp.gt.f32.partialorder %v3617, 0.0
    %vm3724 = vcmp.gt.f32.partialorder %v3622, 0.0
    %vm3725 = vcmp.gt.f32.partialorder %v3627, 0.0
    %vm3726 = vcmp.gt.f32.partialorder %v3632, 0.0
    %vm3727 = vcmp.gt.f32.partialorder %v3637, 0.0
    %vm3728 = vcmp.gt.f32.partialorder %v3642, 0.0
    %vm3729 = vcmp.gt.f32.partialorder %v3647, 0.0
    %vm3730 = vcmp.gt.f32.partialorder %v3652, 0.0
    %vm3731 = vcmp.gt.f32.partialorder %v3657, 0.0
    %vm3732 = vcmp.gt.f32.partialorder %v3662, 0.0
    %vm3733 = vcmp.gt.f32.partialorder %v3667, 0.0
    %vm3734 = vcmp.gt.f32.partialorder %v3672, 0.0
    %vm3735 = vcmp.gt.f32.partialorder %v3677, 0.0
    %vm3736 = vcmp.gt.f32.partialorder %v3682, 0.0
    %vm3737 = vcmp.gt.f32.partialorder %v3687, 0.0
    %vm3738 = vcmp.gt.f32.partialorder %v3692, 0.0
    %vm3739 = vcmp.gt.f32.partialorder %v3697, 0.0
    %vm3740 = vcmp.gt.f32.partialorder %v3702, 0.0
    %vm3741 = vcmp.gt.f32.partialorder %v3707, 0.0
    %v3742 = vmul.f32 %v3552, 0.1
    %v3743 = vmul.f32 %v3557, 0.1
    %v3744 = vmul.f32 %v3562, 0.1
    %v3745 = vmul.f32 %v3567, 0.1
    %v3746 = vmul.f32 %v3572, 0.1
    %v3747 = vmul.f32 %v3577, 0.1
    %v3748 = vmul.f32 %v3582, 0.1
    %v3749 = vmul.f32 %v3587, 0.1
    %v3750 = vmul.f32 %v3592, 0.1
    %v3751 = vmul.f32 %v3597, 0.1
    %v3752 = vmul.f32 %v3602, 0.1
    %v3753 = vmul.f32 %v3607, 0.1
    %v3754 = vmul.f32 %v3612, 0.1
    %v3755 = vmul.f32 %v3617, 0.1
    %v3756 = vmul.f32 %v3622, 0.1
    %v3757 = vmul.f32 %v3627, 0.1
    %v3758 = vmul.f32 %v3632, 0.1
    %v3759 = vmul.f32 %v3637, 0.1
    %v3760 = vmul.f32 %v3642, 0.1
    %v3761 = vmul.f32 %v3647, 0.1
    %v3762 = vmul.f32 %v3652, 0.1
    %v3763 = vmul.f32 %v3657, 0.1
    %v3764 = vmul.f32 %v3662, 0.1
    %v3765 = vmul.f32 %v3667, 0.1
    %v3766 = vmul.f32 %v3672, 0.1
    %v3767 = vmul.f32 %v3677, 0.1
    %v3768 = vmul.f32 %v3682, 0.1
    %v3769 = vmul.f32 %v3687, 0.1
    %v3770 = vmul.f32 %v3692, 0.1
    %v3771 = vmul.f32 %v3697, 0.1
    %v3772 = vmul.f32 %v3702, 0.1
    %v3773 = vmul.f32 %v3707, 0.1
    %v3774 = vsel %vm3710, %v3552, %v3742
    %v3775 = vsel %vm3711, %v3557, %v3743
    %v3776 = vsel %vm3712, %v3562, %v3744
    %v3777 = vsel %vm3713, %v3567, %v3745
    %v3778 = vsel %vm3714, %v3572, %v3746
    %v3779 = vsel %vm3715, %v3577, %v3747
    %v3780 = vsel %vm3716, %v3582, %v3748
    %v3781 = vsel %vm3717, %v3587, %v3749
    %v3782 = vsel %vm3718, %v3592, %v3750
    %v3783 = vsel %vm3719, %v3597, %v3751
    %v3784 = vsel %vm3720, %v3602, %v3752
    %v3785 = vsel %vm3721, %v3607, %v3753
    %v3786 = vsel %vm3722, %v3612, %v3754
    %v3787 = vsel %vm3723, %v3617, %v3755
    %v3788 = vsel %vm3724, %v3622, %v3756
    %v3789 = vsel %vm3725, %v3627, %v3757
    %v3790 = vsel %vm3726, %v3632, %v3758
    %v3791 = vsel %vm3727, %v3637, %v3759
    %v3792 = vsel %vm3728, %v3642, %v3760
    %v3793 = vsel %vm3729, %v3647, %v3761
    %v3794 = vsel %vm3730, %v3652, %v3762
    %v3795 = vsel %vm3731, %v3657, %v3763
    %v3796 = vsel %vm3732, %v3662, %v3764
    %v3797 = vsel %vm3733, %v3667, %v3765
    %v3798 = vsel %vm3734, %v3672, %v3766
    %v3799 = vsel %vm3735, %v3677, %v3767
    %v3800 = vsel %vm3736, %v3682, %v3768
    %v3801 = vsel %vm3737, %v3687, %v3769
    %v3802 = vsel %vm3738, %v3692, %v3770
    %v3803 = vsel %vm3739, %v3697, %v3771
    %v3804 = vsel %vm3740, %v3702, %v3772
    %v3805 = vsel %vm3741, %v3707, %v3773
    %3806 = vmatprep.subr.mxu0 0.0
    %3807 = vmatpush1.xpose.msra.mxu0 %v3774
    %3808 = vmatprep.subr.mxu0 0.0
    %3809 = vmatpush1.xpose.msra.mxu0 %v3775
    %3810 = vmatprep.subr.mxu0 0.0
    %3811 = vmatpush1.xpose.msra.mxu0 %v3776
    %3812 = vmatprep.subr.mxu0 0.0
    %3813 = vmatpush1.xpose.msra.mxu0 %v3777
    %3814 = vmatprep.subr.mxu0 0.0
    %3815 = vmatpush1.xpose.msra.mxu0 %v3778
    %3816 = vmatprep.subr.mxu0 0.0
    %3817 = vmatpush1.xpose.msra.mxu0 %v3779
    %3818 = vmatprep.subr.mxu0 0.0
    %3819 = vmatpush1.xpose.msra.mxu0 %v3780
    %3820 = vmatprep.subr.mxu0 0.0
    %3821 = vmatpush1.xpose.msra.mxu0 %v3781
    %3822 = vmatprep.subr.mxu0 0.0
    %3823 = vmatpush1.xpose.msra.mxu0 %v3782
    %3824 = vmatprep.subr.mxu0 0.0
    %3825 = vmatpush1.xpose.msra.mxu0 %v3783
    %3826 = vmatprep.subr.mxu0 0.0
    %3827 = vmatpush1.xpose.msra.mxu0 %v3784
    %3828 = vmatprep.subr.mxu0 0.0
    %3829 = vmatpush1.xpose.msra.mxu0 %v3785
    %3830 = vmatprep.subr.mxu0 0.0
    %3831 = vmatpush1.xpose.msra.mxu0 %v3786
    %3832 = vmatprep.subr.mxu0 0.0
    %3833 = vmatpush1.xpose.msra.mxu0 %v3787
    %3834 = vmatprep.subr.mxu0 0.0
    %3835 = vmatpush1.xpose.msra.mxu0 %v3788
    %3836 = vmatprep.subr.mxu0 0.0
    %3837 = vmatpush1.xpose.msra.mxu0 %v3789
    %3838 = vmatprep.subr.mxu0 0.0
    %3839 = vmatpush1.xpose.msra.mxu0 %v3790
    %3840 = vmatprep.subr.mxu0 0.0
    %3841 = vmatpush1.xpose.msra.mxu0 %v3791
    %3842 = vmatprep.subr.mxu0 0.0
    %3843 = vmatpush1.xpose.msra.mxu0 %v3792
    %3844 = vmatprep.subr.mxu0 0.0
    %3845 = vmatpush1.xpose.msra.mxu0 %v3793
    %3846 = vmatprep.subr.mxu0 0.0
    %3847 = vmatpush1.xpose.msra.mxu0 %v3794
    %3848 = vmatprep.subr.mxu0 0.0
    %3849 = vmatpush1.xpose.msra.mxu0 %v3795
    %3850 = vmatprep.subr.mxu0 0.0
    %3851 = vmatpush1.xpose.msra.mxu0 %v3796
    %3852 = vmatprep.subr.mxu0 0.0
    %3853 = vmatpush1.xpose.msra.mxu0 %v3797
    %3854 = vmatprep.subr.mxu0 0.0
    %3855 = vmatpush1.xpose.msra.mxu0 %v3798
    %3856 = vmatprep.subr.mxu0 0.0
    %3857 = vmatpush1.xpose.msra.mxu0 %v3799
    %3858 = vmatprep.subr.mxu0 0.0
    %3859 = vmatpush1.xpose.msra.mxu0 %v3800
    %3860 = vmatprep.subr.mxu0 0.0
    %3861 = vmatpush1.xpose.msra.mxu0 %v3801
    %3862 = vmatprep.subr.mxu0 0.0
    %3863 = vmatpush1.xpose.msra.mxu0 %v3802
    %3864 = vmatprep.subr.mxu0 0.0
    %3865 = vmatpush1.xpose.msra.mxu0 %v3803
    %3866 = vmatprep.subr.mxu0 0.0
    %3867 = vmatpush1.xpose.msra.mxu0 %v3804
    %3868 = vmatprep.subr.mxu0 0.0
    %3869 = vmatpush1.xpose.msra.mxu0 %v3805
    %3870 = vmatprep.mubr.f32.mxu0 0.0
    %3871 = vmatmul.mubr.f32.gmra.mrb[0].mxu0 %v29
    %v3872 = vpop.f32.mrb[0].mxu0
    %v3873 = vadd.f32 %v1936, %v3872
    %v3874 = vpop.f32.mrb[0].mxu0
    %v3875 = vadd.f32 %v1936, %v3874
    %3876 = vdwg.mxu0
    %v3879 = vcombine.low %v2005, %v2007
    %v3881 = vunpack.c.l.s4 1966171168
    %v3882 = vunpack.c.0.s8 %v3881
    %v3883 = vlaneseq
    %v3884 = vshrl.u32 %v3883, 7
    %v3885 = vsub.s32 %v3882, %v3884
    %v3886 = vrot.slane %v3879, %v3885
    %v3888 = vunpack.c.l.s4 1966171168
    %v3889 = vunpack.c.0.s8 %v3888
    %v3890 = vlaneseq
    %v3891 = vshrl.u32 %v3890, 7
    %v3892 = vsub.s32 %v3889, %v3891
    %v3893 = vrot.slane %v3886, %v3892
    %v3895 = vlaneseq
    %vm3896 = vcmp.ge.s32.totalorder %v3895, 0
    %vm3897 = vcmp.lt.s32.totalorder %v3895, 256
    %vm3898 = vmand %vm3896, %vm3897
    %3899 = vst.msk [vmem:[#allocation5] sm:$0x3] %vm3898, %v3893
    %v3902 = vcombine.low %v3873, %v3875
    %v3904 = vunpack.c.l.s4 1966171168
    %v3905 = vunpack.c.0.s8 %v3904
    %v3906 = vlaneseq
    %v3907 = vshrl.u32 %v3906, 7
    %v3908 = vsub.s32 %v3905, %v3907
    %v3909 = vrot.slane %v3902, %v3908
    %v3911 = vunpack.c.l.s4 1966171168
    %v3912 = vunpack.c.0.s8 %v3911
    %v3913 = vlaneseq
    %v3914 = vshrl.u32 %v3913, 7
    %v3915 = vsub.s32 %v3912, %v3914
    %v3916 = vrot.slane %v3909, %v3915
    %3918 = vst.msk [vmem:[#allocation5 + $0x2] sm:$0x3] %vm3898, %v3916
    // Predicated region
    $region18: #{tpu_custom_call.1} parent=1 // pred_check
      _
    $region19: #{tpu_custom_call.1} parent=1 // pred_check_branch
      %3920 = sbr.rel (0) target = $region21
    $region20: #{tpu_custom_call.1} parent=1 // pred_region
      %s3922 = ssub.s32 64, 64
      %3923 = vsyncadd [#allocation4], %s3922
      %s3925 = sshll.u32 [#allocation5], 4
      %s3926 = int_to_ptr.vmem [resolvable:$true] %s3925
      %3928 = dma.vmem_to_hbm [thread:$0]  %s3926, 64, %s3, [#allocation4]
    $region21: #{tpu_custom_call.1} parent=1 // pred_fallthru
      _
    // Predicated region
    $region22: #{tpu_custom_call.1} parent=1 // pred_check
      _
    $region23: #{tpu_custom_call.1} parent=1 // pred_check_branch
      %3930 = sbr.rel (0) target = $region25
    $region24: #{tpu_custom_call.1} parent=1 // pred_region
      %3931 = dma.done [#allocation4], 64
    $region25: #{tpu_custom_call.1} parent=1 // pred_fallthru
      _
    %3932 = vsyncpa [#allocation3], 1
    %3933 = vsyncpa [#allocation4], 1

</llo_original>
